<compile_context>
chip_gen: v5e
topology: v5e:2x2
jax: 0.10.0
libtpu: 0.0.40
codegen_flags: <defaults>
</compile_context>

<pallas_src>
import jax
import jax.numpy as jnp
from jax.experimental import pallas as pl
from jax.experimental.pallas import tpu as pltpu


def _silu(v):
    # SiLU = v * sigmoid(v); exp and the approximate reciprocal both run on
    # the EUP slot, keeping the activation off the VALU.
    return v * pl.reciprocal(1.0 + jnp.exp(-v), approx=True)


def _c2f_kernel(x_ref, ws1_ref, bs1_ref, ws2_ref, bs2_ref,
                wb_ref, bb_ref, wf_ref, bf_ref, o_ref, pad_ref):
    """One batch image per grid step.

    x_ref  : (1, H, W, Cin)        f32
    ws1/ws2: (Cin, Cmid)           bf16   BN-folded 1x1 split convs
    bs1/bs2: (1, Cmid)             f32
    wb_ref : (n*2*9*Cmid, Cmid)    bf16   BN-folded 3x3 convs, row-blocks
                                          ordered [bottleneck][conv][dh][dw]
    bb_ref : (n*2, Cmid)           f32
    wf_ref : ((n+2)*Cmid, Cout)    bf16   BN-folded final 1x1 conv
    bf_ref : (1, Cout)             f32
    o_ref  : (1, H, W, Cout)
    pad_ref: (H+2, W+2, Cmid) f32 VMEM scratch (zero-padded conv3x3 input)
    """
    _, H, W, Cin = x_ref.shape
    Cmid = ws1_ref.shape[1]
    Cout = wf_ref.shape[1]
    n_bn = bb_ref.shape[0] // 2
    HW = H * W

    # Zero the padding scratch once per image; every conv3x3 below only
    # rewrites its (H, W) centre, so the 1-pixel zero border persists.
    pad_ref[...] = jnp.zeros_like(pad_ref)

    # H*W (= 256 here) sits on the matmul row dimension; W is a multiple of 8
    # so the (H, W, C) -> (H*W, C) reshapes are cheap relayouts.
    x = x_ref[0].reshape(HW, Cin).astype(jnp.bfloat16)

    def pw(a_bf16, w, b):
        # 1x1 conv (+ folded BN) + SiLU == a single MXU matmul + bias + SiLU.
        return _silu(jnp.dot(a_bf16, w, preferred_element_type=jnp.float32) + b)

    s1 = pw(x, ws1_ref[...], bs1_ref[...])          # (HW, Cmid) f32
    s2 = pw(x, ws2_ref[...], bs2_ref[...])          # (HW, Cmid) f32

    # Final 1x1 conv: accumulate per-branch matmuls against row-blocks of wf
    # instead of concatenating on the lane axis (same FLOPs, no relayout, no
    # (HW, (n+2)*Cmid) temporary).
    acc = jnp.dot(s1.astype(jnp.bfloat16), wf_ref[0:Cmid, :],
                  preferred_element_type=jnp.float32)
    acc = acc + jnp.dot(s2.astype(jnp.bfloat16), wf_ref[Cmid:2 * Cmid, :],
                        preferred_element_type=jnp.float32)

    def conv3x3(inp, blk):
        # 3x3 s1 p1 conv (+ folded BN) + SiLU on an (HW, Cmid) activation:
        # write the centre of the persistent zero-padded scratch, then
        # accumulate 9 shifted-window bf16 matmuls into an f32 accumulator.
        pad_ref[pl.ds(1, H), pl.ds(1, W), :] = inp.reshape(H, W, Cmid)
        a = None
        for dh in range(3):
            for dw in range(3):
                win = pad_ref[pl.ds(dh, H), pl.ds(dw, W), :]
                win = win.reshape(HW, Cmid).astype(jnp.bfloat16)
                base = (blk * 9 + dh * 3 + dw) * Cmid
                d = jnp.dot(win, wb_ref[base:base + Cmid, :],
                            preferred_element_type=jnp.float32)
                a = d if a is None else a + d
        return _silu(a + bb_ref[blk:blk + 1, :])

    cur = s2
    for i in range(n_bn):
        t = conv3x3(cur, 2 * i)
        t = conv3x3(t, 2 * i + 1)
        cur = t + cur                                # Bottleneck residual (cat=True)
        acc = acc + jnp.dot(cur.astype(jnp.bfloat16),
                            wf_ref[(2 + i) * Cmid:(3 + i) * Cmid, :],
                            preferred_element_type=jnp.float32)

    out = _silu(acc + bf_ref[...])                   # (HW, Cout) f32
    o_ref[0] = out.reshape(H, W, Cout).astype(o_ref.dtype)


def _c2f_nhwc(x, ws1, bs1, ws2, bs2, wb_all, bb_all, wf, bf):
    """x: (N, H, W, Cin) f32, channels-last. Returns (N, H, W, Cout)."""
    N, H, W, Cin = x.shape
    Cmid = ws1.shape[1]
    Cout = wf.shape[1]

    # bf16 MXU operands (v6e/v7x peak rate), f32 accumulation inside the kernel.
    bf16 = jnp.bfloat16
    ws1b = ws1.astype(bf16)
    ws2b = ws2.astype(bf16)
    wbb = wb_all.astype(bf16)
    wfb = wf.astype(bf16)

    def whole(arr):
        nd = arr.ndim
        return pl.BlockSpec(arr.shape, lambda b: (0,) * nd)

    # Scoped-VMEM limit sized from the per-step footprint (double-buffered
    # in/out blocks + activations + padded-conv scratch + weights), clamped to
    # leave headroom inside v7x's 64 MiB physical VMEM.
    est = 4 * (2 * H * W * (Cin + Cout)
               + 10 * H * W * Cmid
               + (H + 2) * (W + 2) * Cmid
               + 2 * (ws1.size + ws2.size + wb_all.size + wf.size))
    vmem_limit = int(min(max(2 * est, 32 << 20), 48 << 20))

    # TODO(synk): for large feature maps (e.g. 80x80x256) add an H-tiled grid
    # axis with a 2n-row halo so per-step blocks fit v5e's 16 MiB / v7x's
    # 64 MiB VMEM and the grid pipelines / splits across megacores.
    return pl.pallas_call(
        _c2f_kernel,
        out_shape=jax.ShapeDtypeStruct((N, H, W, Cout), x.dtype),
        grid_spec=pltpu.PrefetchScalarGridSpec(
            num_scalar_prefetch=0,
            grid=(N,),
            in_specs=[
                pl.BlockSpec((1, H, W, Cin), lambda b: (b, 0, 0, 0)),
                whole(ws1b), whole(bs1),
                whole(ws2b), whole(bs2),
                whole(wbb), whole(bb_all),
                whole(wfb), whole(bf),
            ],
            out_specs=pl.BlockSpec((1, H, W, Cout), lambda b: (b, 0, 0, 0)),
            scratch_shapes=[pltpu.VMEM((H + 2, W + 2, Cmid), jnp.float32)],
        ),
        compiler_params=pltpu.CompilerParams(
            dimension_semantics=("parallel",),
            vmem_limit_bytes=vmem_limit,
        ),
    )(x, ws1b, bs1, ws2b, bs2, wbb, bb_all, wfb, bf)


c2f_pallas_nhwc = jax.jit(_c2f_nhwc)   # transpose-free entry point (NHWC models)


@jax.jit
def c2f_pallas(x_nchw, ws1, bs1, ws2, bs2, wb_all, bb_all, wf, bf):
    """PyTorch-layout entry point: (N, Cin, H, W) -> (N, Cout, H, W).

    In an NHWC end-to-end pipeline call `c2f_pallas_nhwc` directly and skip
    both HBM round-trip transposes below.
    """
    x = jnp.transpose(x_nchw, (0, 2, 3, 1))
    out = _c2f_nhwc(x, ws1, bs1, ws2, bs2, wb_all, bb_all, wf, bf)
    return jnp.transpose(out, (0, 3, 1, 2))


# ----------------------- BN folding + pure-JAX reference -----------------------

def fold_bn_1x1(w_oi, gamma, beta, mean, var, eps=1e-3):
    """w_oi: (Cout, Cin) 1x1 conv weight. Returns W_eff (Cin, Cout), b_eff (1, Cout)."""
    scale = gamma / jnp.sqrt(var + eps)
    w_eff = (w_oi * scale[:, None]).T
    b_eff = (beta - mean * scale)[None, :]
    return w_eff.astype(jnp.float32), b_eff.astype(jnp.float32)


def fold_bn_3x3(w_oihw, gamma, beta, mean, var, eps=1e-3):
    """w_oihw: (Cout, Cin, 3, 3). Returns HWIO weight (3, 3, Cin, Cout), bias (Cout,)."""
    scale = gamma / jnp.sqrt(var + eps)
    w_eff = jnp.transpose(w_oihw * scale[:, None, None, None], (2, 3, 1, 0))
    b_eff = beta - mean * scale
    return w_eff.astype(jnp.float32), b_eff.astype(jnp.float32)


def c2f_reference(x_nchw, p):
    """Pure-JAX f32 reference of the folded C2f forward (NHWC internally)."""
    x = jnp.transpose(x_nchw, (0, 2, 3, 1))

    def silu(v):
        return v * jax.nn.sigmoid(v)

    s1 = silu(jnp.einsum("nhwc,cd->nhwd", x, p["ws1"]) + p["bs1"][0])
    s2 = silu(jnp.einsum("nhwc,cd->nhwd", x, p["ws2"]) + p["bs2"][0])
    ys = [s1, s2]
    cur = s2
    for i in range(p["n"]):
        t = cur
        for j in range(2):
            t = silu(jax.lax.conv_general_dilated(
                t, p["wb"][i][j], window_strides=(1, 1), padding="SAME",
                dimension_numbers=("NHWC", "HWIO", "NHWC")) + p["bb"][i][j])
        cur = t + cur
        ys.append(cur)
    cat = jnp.concatenate(ys, axis=-1)
    out = silu(jnp.einsum("nhwc,cd->nhwd", cat, p["wf"]) + p["bf"][0])
    return jnp.transpose(out, (0, 3, 1, 2))


if __name__ == "__main__":
    # Small shapes consistent with C2f(in_channels=4, out_channels=4, n=1, cat=True).
    N, Cin, H, W = 2, 4, 16, 16
    Cout, n = 4, 1
    Cmid = Cout // 2

    key = jax.random.PRNGKey(0)
    kit = iter(jax.random.split(key, 40))

    def make_bn(c):
        gamma = jax.random.uniform(next(kit), (c,), minval=0.5, maxval=1.5)
        beta = jax.random.normal(next(kit), (c,)) * 0.1
        mean = jax.random.normal(next(kit), (c,)) * 0.1
        var = jax.random.uniform(next(kit), (c,), minval=0.5, maxval=1.5)
        return gamma, beta, mean, var

    x = jax.random.normal(next(kit), (N, Cin, H, W), dtype=jnp.float32)

    # split_1 / split_2: 1x1 convs (no conv bias: bn_act=True) + BatchNorm(eps=1e-3)
    ws1, bs1 = fold_bn_1x1(
        jax.random.normal(next(kit), (Cmid, Cin), dtype=jnp.float32) * 0.3, *make_bn(Cmid))
    ws2, bs2 = fold_bn_1x1(
        jax.random.normal(next(kit), (Cmid, Cin), dtype=jnp.float32) * 0.3, *make_bn(Cmid))

    # n Bottlenecks, each Sequential(Conv3x3, Conv3x3)
    wb, bb = [], []
    for _ in range(n):
        wi, bi = [], []
        for _ in range(2):
            w3, b3 = fold_bn_3x3(
                jax.random.normal(next(kit), (Cmid, Cmid, 3, 3), dtype=jnp.float32) * 0.3,
                *make_bn(Cmid))
            wi.append(w3)
            bi.append(b3)
        wb.append(wi)
        bb.append(bi)

    # final 1x1 conv over the (n + 2) * Cmid concatenated channels
    wf, bf = fold_bn_1x1(
        jax.random.normal(next(kit), (Cout, (n + 2) * Cmid), dtype=jnp.float32) * 0.3,
        *make_bn(Cout))

    # Pack bottleneck weights for the kernel: row-blocks [i][j][dh][dw] -> (Cmid, Cmid).
    wb_all = jnp.concatenate(
        [wb[i][j].reshape(9 * Cmid, Cmid) for i in range(n) for j in range(2)], axis=0)
    bb_all = jnp.stack([bb[i][j] for i in range(n) for j in range(2)], axis=0)

    out = c2f_pallas(x, ws1, bs1, ws2, bs2, wb_all, bb_all, wf, bf)
    out = jax.block_until_ready(out)

    ref = c2f_reference(x, dict(ws1=ws1, bs1=bs1, ws2=ws2, bs2=bs2,
                                wb=wb, bb=bb, wf=wf, bf=bf, n=n))
    assert out.shape == (N, Cout, H, W), out.shape
    max_err = float(jnp.max(jnp.abs(out - ref)))
    # bf16 MXU operands + EUP approx reciprocal => looser tolerance than pure f32.
    assert max_err < 3e-2, max_err

    print("KERNEL_OK")
</pallas_src>

<mosaic_0001>
module attributes {stable_mosaic.version = 11 : i64} {
  func.func @_c2f_kernel(%arg0: i32, %arg1: memref<1x16x16x4xf32, #tpu.memory_space<vmem>>, %arg2: memref<4x2xbf16, #tpu.memory_space<vmem>>, %arg3: memref<1x2xf32, #tpu.memory_space<vmem>>, %arg4: memref<4x2xbf16, #tpu.memory_space<vmem>>, %arg5: memref<1x2xf32, #tpu.memory_space<vmem>>, %arg6: memref<36x2xbf16, #tpu.memory_space<vmem>>, %arg7: memref<2x2xf32, #tpu.memory_space<vmem>>, %arg8: memref<6x4xbf16, #tpu.memory_space<vmem>>, %arg9: memref<1x4xf32, #tpu.memory_space<vmem>>, %arg10: memref<1x16x16x4xf32, #tpu.memory_space<vmem>>, %arg11: memref<18x18x2xf32, #tpu.memory_space<vmem>>) attributes {dimension_semantics = [#tpu.dimension_semantics<parallel>], iteration_bounds = array<i64: 2>, scalar_prefetch = 0 : i64, scratch_operands = 1 : i64, tpu.core_type = #tpu.core_type<tc>, window_params = [{transform_indices = @transform_0, window_bounds = array<i64: 1, 16, 16, 4>}, {pipeline_mode = #tpu.pipeline_mode<synchronous>, transform_indices = @transform_1, window_bounds = array<i64: 4, 2>}, {pipeline_mode = #tpu.pipeline_mode<synchronous>, transform_indices = @transform_2, window_bounds = array<i64: 1, 2>}, {pipeline_mode = #tpu.pipeline_mode<synchronous>, transform_indices = @transform_3, window_bounds = array<i64: 4, 2>}, {pipeline_mode = #tpu.pipeline_mode<synchronous>, transform_indices = @transform_4, window_bounds = array<i64: 1, 2>}, {pipeline_mode = #tpu.pipeline_mode<synchronous>, transform_indices = @transform_5, window_bounds = array<i64: 36, 2>}, {pipeline_mode = #tpu.pipeline_mode<synchronous>, transform_indices = @transform_6, window_bounds = array<i64: 2, 2>}, {pipeline_mode = #tpu.pipeline_mode<synchronous>, transform_indices = @transform_7, window_bounds = array<i64: 6, 4>}, {pipeline_mode = #tpu.pipeline_mode<synchronous>, transform_indices = @transform_8, window_bounds = array<i64: 1, 4>}, {transform_indices = @transform_9, window_bounds = array<i64: 1, 16, 16, 4>}]} {
    %cst = arith.constant 0.000000e+00 : f32
    %0 = vector.broadcast %cst : f32 to vector<18x18x2xf32>
    %c0 = arith.constant 0 : index
    %c0_0 = arith.constant 0 : index
    %c0_1 = arith.constant 0 : index
    %1 = vector.load %arg11[%c0, %c0_0, %c0_1] : memref<18x18x2xf32, #tpu.memory_space<vmem>>, vector<18x18x2xf32>
    tpu.vector_store %arg11[%c0, %c0_0, %c0_1], %0 {strides = array<i32>} : memref<18x18x2xf32, #tpu.memory_space<vmem>>, vector<18x18x2xf32>,
    %c0_2 = arith.constant 0 : index
    %c0_3 = arith.constant 0 : index
    %c0_4 = arith.constant 0 : index
    %c0_5 = arith.constant 0 : index
    %2 = vector.load %arg1[%c0_2, %c0_3, %c0_4, %c0_5] : memref<1x16x16x4xf32, #tpu.memory_space<vmem>>, vector<1x16x16x4xf32>
    %3 = vector.shape_cast %2 : vector<1x16x16x4xf32> to vector<16x16x4xf32>
    %4 = vector.shape_cast %3 : vector<16x16x4xf32> to vector<256x4xf32>
    %5 = arith.truncf %4 : vector<256x4xf32> to vector<256x4xbf16>
    %c0_6 = arith.constant 0 : index
    %c0_7 = arith.constant 0 : index
    %6 = vector.load %arg2[%c0_6, %c0_7] : memref<4x2xbf16, #tpu.memory_space<vmem>>, vector<4x2xbf16>
    %c0_8 = arith.constant 0 : index
    %c0_9 = arith.constant 0 : index
    %7 = vector.load %arg3[%c0_8, %c0_9] : memref<1x2xf32, #tpu.memory_space<vmem>>, vector<1x2xf32>
    %cst_10 = arith.constant dense<0.000000e+00> : vector<256x2xf32>
    %8 = tpu.matmul %5, %6, %cst_10 {dimension_numbers = #tpu.dot_dimension_numbers<[1], [0], [0], [1], [0, 0, 1, 1], [], []>} : vector<256x4xbf16>, vector<4x2xbf16>, vector<256x2xf32> -> vector<256x2xf32>
    %9 = vector.broadcast %7 : vector<1x2xf32> to vector<256x2xf32>
    %10 = arith.addf %8, %9 : vector<256x2xf32>
    %cst_11 = arith.constant 0.000000e+00 : f32
    %11 = vector.broadcast %cst_11 : f32 to vector<256x2xf32>
    %12 = arith.subf %11, %10 : vector<256x2xf32>
    %13 = math.exp %12 : vector<256x2xf32>
    %cst_12 = arith.constant 1.000000e+00 : f32
    %14 = vector.broadcast %cst_12 : f32 to vector<256x2xf32>
    %15 = arith.addf %14, %13 : vector<256x2xf32>
    %16 = tpu.reciprocal %15 {approx = true} : vector<256x2xf32> -> vector<256x2xf32>
    %17 = arith.mulf %10, %16 : vector<256x2xf32>
    %c0_13 = arith.constant 0 : index
    %c0_14 = arith.constant 0 : index
    %18 = vector.load %arg4[%c0_13, %c0_14] : memref<4x2xbf16, #tpu.memory_space<vmem>>, vector<4x2xbf16>
    %c0_15 = arith.constant 0 : index
    %c0_16 = arith.constant 0 : index
    %19 = vector.load %arg5[%c0_15, %c0_16] : memref<1x2xf32, #tpu.memory_space<vmem>>, vector<1x2xf32>
    %cst_17 = arith.constant dense<0.000000e+00> : vector<256x2xf32>
    %20 = tpu.matmul %5, %18, %cst_17 {dimension_numbers = #tpu.dot_dimension_numbers<[1], [0], [0], [1], [0, 0, 1, 1], [], []>} : vector<256x4xbf16>, vector<4x2xbf16>, vector<256x2xf32> -> vector<256x2xf32>
    %21 = vector.broadcast %19 : vector<1x2xf32> to vector<256x2xf32>
    %22 = arith.addf %20, %21 : vector<256x2xf32>
    %cst_18 = arith.constant 0.000000e+00 : f32
    %23 = vector.broadcast %cst_18 : f32 to vector<256x2xf32>
    %24 = arith.subf %23, %22 : vector<256x2xf32>
    %25 = math.exp %24 : vector<256x2xf32>
    %cst_19 = arith.constant 1.000000e+00 : f32
    %26 = vector.broadcast %cst_19 : f32 to vector<256x2xf32>
    %27 = arith.addf %26, %25 : vector<256x2xf32>
    %28 = tpu.reciprocal %27 {approx = true} : vector<256x2xf32> -> vector<256x2xf32>
    %29 = arith.mulf %22, %28 : vector<256x2xf32>
    %30 = arith.truncf %17 : vector<256x2xf32> to vector<256x2xbf16>
    %c0_20 = arith.constant 0 : index
    %c0_21 = arith.constant 0 : index
    %31 = vector.load %arg8[%c0_20, %c0_21] : memref<6x4xbf16, #tpu.memory_space<vmem>>, vector<2x4xbf16>
    %cst_22 = arith.constant dense<0.000000e+00> : vector<256x4xf32>
    %32 = tpu.matmul %30, %31, %cst_22 {dimension_numbers = #tpu.dot_dimension_numbers<[1], [0], [0], [1], [0, 0, 1, 1], [], []>} : vector<256x2xbf16>, vector<2x4xbf16>, vector<256x4xf32> -> vector<256x4xf32>
    %33 = arith.truncf %29 : vector<256x2xf32> to vector<256x2xbf16>
    %c2 = arith.constant 2 : index
    %c0_23 = arith.constant 0 : index
    %34 = vector.load %arg8[%c2, %c0_23] : memref<6x4xbf16, #tpu.memory_space<vmem>>, vector<2x4xbf16>
    %cst_24 = arith.constant dense<0.000000e+00> : vector<256x4xf32>
    %35 = tpu.matmul %33, %34, %cst_24 {dimension_numbers = #tpu.dot_dimension_numbers<[1], [0], [0], [1], [0, 0, 1, 1], [], []>} : vector<256x2xbf16>, vector<2x4xbf16>, vector<256x4xf32> -> vector<256x4xf32>
    %36 = arith.addf %32, %35 : vector<256x4xf32>
    %37 = vector.shape_cast %29 : vector<256x2xf32> to vector<16x16x2xf32>
    %c1 = arith.constant 1 : index
    %c1_25 = arith.constant 1 : index
    %c0_26 = arith.constant 0 : index
    %38 = vector.load %arg11[%c1, %c1_25, %c0_26] : memref<18x18x2xf32, #tpu.memory_space<vmem>>, vector<16x16x2xf32>
    tpu.vector_store %arg11[%c1, %c1_25, %c0_26], %37 {strides = array<i32>} : memref<18x18x2xf32, #tpu.memory_space<vmem>>, vector<16x16x2xf32>,
    %c0_27 = arith.constant 0 : index
    %c0_28 = arith.constant 0 : index
    %c0_29 = arith.constant 0 : index
    %39 = vector.load %arg11[%c0_27, %c0_28, %c0_29] : memref<18x18x2xf32, #tpu.memory_space<vmem>>, vector<16x16x2xf32>
    %40 = vector.shape_cast %39 : vector<16x16x2xf32> to vector<256x2xf32>
    %41 = arith.truncf %40 : vector<256x2xf32> to vector<256x2xbf16>
    %c0_30 = arith.constant 0 : index
    %c0_31 = arith.constant 0 : index
    %42 = vector.load %arg6[%c0_30, %c0_31] : memref<36x2xbf16, #tpu.memory_space<vmem>>, vector<2x2xbf16>
    %cst_32 = arith.constant dense<0.000000e+00> : vector<256x2xf32>
    %43 = tpu.matmul %41, %42, %cst_32 {dimension_numbers = #tpu.dot_dimension_numbers<[1], [0], [0], [1], [0, 0, 1, 1], [], []>} : vector<256x2xbf16>, vector<2x2xbf16>, vector<256x2xf32> -> vector<256x2xf32>
    %c0_33 = arith.constant 0 : index
    %c1_34 = arith.constant 1 : index
    %c0_35 = arith.constant 0 : index
    %44 = vector.load %arg11[%c0_33, %c1_34, %c0_35] : memref<18x18x2xf32, #tpu.memory_space<vmem>>, vector<16x16x2xf32>
    %45 = vector.shape_cast %44 : vector<16x16x2xf32> to vector<256x2xf32>
    %46 = arith.truncf %45 : vector<256x2xf32> to vector<256x2xbf16>
    %c2_36 = arith.constant 2 : index
    %c0_37 = arith.constant 0 : index
    %47 = vector.load %arg6[%c2_36, %c0_37] : memref<36x2xbf16, #tpu.memory_space<vmem>>, vector<2x2xbf16>
    %cst_38 = arith.constant dense<0.000000e+00> : vector<256x2xf32>
    %48 = tpu.matmul %46, %47, %cst_38 {dimension_numbers = #tpu.dot_dimension_numbers<[1], [0], [0], [1], [0, 0, 1, 1], [], []>} : vector<256x2xbf16>, vector<2x2xbf16>, vector<256x2xf32> -> vector<256x2xf32>
    %49 = arith.addf %43, %48 : vector<256x2xf32>
    %c0_39 = arith.constant 0 : index
    %c2_40 = arith.constant 2 : index
    %c0_41 = arith.constant 0 : index
    %50 = vector.load %arg11[%c0_39, %c2_40, %c0_41] : memref<18x18x2xf32, #tpu.memory_space<vmem>>, vector<16x16x2xf32>
    %51 = vector.shape_cast %50 : vector<16x16x2xf32> to vector<256x2xf32>
    %52 = arith.truncf %51 : vector<256x2xf32> to vector<256x2xbf16>
    %c4 = arith.constant 4 : index
    %c0_42 = arith.constant 0 : index
    %53 = vector.load %arg6[%c4, %c0_42] : memref<36x2xbf16, #tpu.memory_space<vmem>>, vector<2x2xbf16>
    %cst_43 = arith.constant dense<0.000000e+00> : vector<256x2xf32>
    %54 = tpu.matmul %52, %53, %cst_43 {dimension_numbers = #tpu.dot_dimension_numbers<[1], [0], [0], [1], [0, 0, 1, 1], [], []>} : vector<256x2xbf16>, vector<2x2xbf16>, vector<256x2xf32> -> vector<256x2xf32>
    %55 = arith.addf %49, %54 : vector<256x2xf32>
    %c1_44 = arith.constant 1 : index
    %c0_45 = arith.constant 0 : index
    %c0_46 = arith.constant 0 : index
    %56 = vector.load %arg11[%c1_44, %c0_45, %c0_46] : memref<18x18x2xf32, #tpu.memory_space<vmem>>, vector<16x16x2xf32>
    %57 = vector.shape_cast %56 : vector<16x16x2xf32> to vector<256x2xf32>
    %58 = arith.truncf %57 : vector<256x2xf32> to vector<256x2xbf16>
    %c6 = arith.constant 6 : index
    %c0_47 = arith.constant 0 : index
    %59 = vector.load %arg6[%c6, %c0_47] : memref<36x2xbf16, #tpu.memory_space<vmem>>, vector<2x2xbf16>
    %cst_48 = arith.constant dense<0.000000e+00> : vector<256x2xf32>
    %60 = tpu.matmul %58, %59, %cst_48 {dimension_numbers = #tpu.dot_dimension_numbers<[1], [0], [0], [1], [0, 0, 1, 1], [], []>} : vector<256x2xbf16>, vector<2x2xbf16>, vector<256x2xf32> -> vector<256x2xf32>
    %61 = arith.addf %55, %60 : vector<256x2xf32>
    %c1_49 = arith.constant 1 : index
    %c1_50 = arith.constant 1 : index
    %c0_51 = arith.constant 0 : index
    %62 = vector.load %arg11[%c1_49, %c1_50, %c0_51] : memref<18x18x2xf32, #tpu.memory_space<vmem>>, vector<16x16x2xf32>
    %63 = vector.shape_cast %62 : vector<16x16x2xf32> to vector<256x2xf32>
    %64 = arith.truncf %63 : vector<256x2xf32> to vector<256x2xbf16>
    %c8 = arith.constant 8 : index
    %c0_52 = arith.constant 0 : index
    %65 = vector.load %arg6[%c8, %c0_52] : memref<36x2xbf16, #tpu.memory_space<vmem>>, vector<2x2xbf16>
    %cst_53 = arith.constant dense<0.000000e+00> : vector<256x2xf32>
    %66 = tpu.matmul %64, %65, %cst_53 {dimension_numbers = #tpu.dot_dimension_numbers<[1], [0], [0], [1], [0, 0, 1, 1], [], []>} : vector<256x2xbf16>, vector<2x2xbf16>, vector<256x2xf32> -> vector<256x2xf32>
    %67 = arith.addf %61, %66 : vector<256x2xf32>
    %c1_54 = arith.constant 1 : index
    %c2_55 = arith.constant 2 : index
    %c0_56 = arith.constant 0 : index
    %68 = vector.load %arg11[%c1_54, %c2_55, %c0_56] : memref<18x18x2xf32, #tpu.memory_space<vmem>>, vector<16x16x2xf32>
    %69 = vector.shape_cast %68 : vector<16x16x2xf32> to vector<256x2xf32>
    %70 = arith.truncf %69 : vector<256x2xf32> to vector<256x2xbf16>
    %c10 = arith.constant 10 : index
    %c0_57 = arith.constant 0 : index
    %71 = vector.load %arg6[%c10, %c0_57] : memref<36x2xbf16, #tpu.memory_space<vmem>>, vector<2x2xbf16>
    %cst_58 = arith.constant dense<0.000000e+00> : vector<256x2xf32>
    %72 = tpu.matmul %70, %71, %cst_58 {dimension_numbers = #tpu.dot_dimension_numbers<[1], [0], [0], [1], [0, 0, 1, 1], [], []>} : vector<256x2xbf16>, vector<2x2xbf16>, vector<256x2xf32> -> vector<256x2xf32>
    %73 = arith.addf %67, %72 : vector<256x2xf32>
    %c2_59 = arith.constant 2 : index
    %c0_60 = arith.constant 0 : index
    %c0_61 = arith.constant 0 : index
    %74 = vector.load %arg11[%c2_59, %c0_60, %c0_61] : memref<18x18x2xf32, #tpu.memory_space<vmem>>, vector<16x16x2xf32>
    %75 = vector.shape_cast %74 : vector<16x16x2xf32> to vector<256x2xf32>
    %76 = arith.truncf %75 : vector<256x2xf32> to vector<256x2xbf16>
    %c12 = arith.constant 12 : index
    %c0_62 = arith.constant 0 : index
    %77 = vector.load %arg6[%c12, %c0_62] : memref<36x2xbf16, #tpu.memory_space<vmem>>, vector<2x2xbf16>
    %cst_63 = arith.constant dense<0.000000e+00> : vector<256x2xf32>
    %78 = tpu.matmul %76, %77, %cst_63 {dimension_numbers = #tpu.dot_dimension_numbers<[1], [0], [0], [1], [0, 0, 1, 1], [], []>} : vector<256x2xbf16>, vector<2x2xbf16>, vector<256x2xf32> -> vector<256x2xf32>
    %79 = arith.addf %73, %78 : vector<256x2xf32>
    %c2_64 = arith.constant 2 : index
    %c1_65 = arith.constant 1 : index
    %c0_66 = arith.constant 0 : index
    %80 = vector.load %arg11[%c2_64, %c1_65, %c0_66] : memref<18x18x2xf32, #tpu.memory_space<vmem>>, vector<16x16x2xf32>
    %81 = vector.shape_cast %80 : vector<16x16x2xf32> to vector<256x2xf32>
    %82 = arith.truncf %81 : vector<256x2xf32> to vector<256x2xbf16>
    %c14 = arith.constant 14 : index
    %c0_67 = arith.constant 0 : index
    %83 = vector.load %arg6[%c14, %c0_67] : memref<36x2xbf16, #tpu.memory_space<vmem>>, vector<2x2xbf16>
    %cst_68 = arith.constant dense<0.000000e+00> : vector<256x2xf32>
    %84 = tpu.matmul %82, %83, %cst_68 {dimension_numbers = #tpu.dot_dimension_numbers<[1], [0], [0], [1], [0, 0, 1, 1], [], []>} : vector<256x2xbf16>, vector<2x2xbf16>, vector<256x2xf32> -> vector<256x2xf32>
    %85 = arith.addf %79, %84 : vector<256x2xf32>
    %c2_69 = arith.constant 2 : index
    %c2_70 = arith.constant 2 : index
    %c0_71 = arith.constant 0 : index
    %86 = vector.load %arg11[%c2_69, %c2_70, %c0_71] : memref<18x18x2xf32, #tpu.memory_space<vmem>>, vector<16x16x2xf32>
    %87 = vector.shape_cast %86 : vector<16x16x2xf32> to vector<256x2xf32>
    %88 = arith.truncf %87 : vector<256x2xf32> to vector<256x2xbf16>
    %c16 = arith.constant 16 : index
    %c0_72 = arith.constant 0 : index
    %89 = vector.load %arg6[%c16, %c0_72] : memref<36x2xbf16, #tpu.memory_space<vmem>>, vector<2x2xbf16>
    %cst_73 = arith.constant dense<0.000000e+00> : vector<256x2xf32>
    %90 = tpu.matmul %88, %89, %cst_73 {dimension_numbers = #tpu.dot_dimension_numbers<[1], [0], [0], [1], [0, 0, 1, 1], [], []>} : vector<256x2xbf16>, vector<2x2xbf16>, vector<256x2xf32> -> vector<256x2xf32>
    %91 = arith.addf %85, %90 : vector<256x2xf32>
    %c0_74 = arith.constant 0 : index
    %c0_75 = arith.constant 0 : index
    %92 = vector.load %arg7[%c0_74, %c0_75] : memref<2x2xf32, #tpu.memory_space<vmem>>, vector<1x2xf32>
    %93 = vector.broadcast %92 : vector<1x2xf32> to vector<256x2xf32>
    %94 = arith.addf %91, %93 : vector<256x2xf32>
    %cst_76 = arith.constant 0.000000e+00 : f32
    %95 = vector.broadcast %cst_76 : f32 to vector<256x2xf32>
    %96 = arith.subf %95, %94 : vector<256x2xf32>
    %97 = math.exp %96 : vector<256x2xf32>
    %cst_77 = arith.constant 1.000000e+00 : f32
    %98 = vector.broadcast %cst_77 : f32 to vector<256x2xf32>
    %99 = arith.addf %98, %97 : vector<256x2xf32>
    %100 = tpu.reciprocal %99 {approx = true} : vector<256x2xf32> -> vector<256x2xf32>
    %101 = arith.mulf %94, %100 : vector<256x2xf32>
    %102 = vector.shape_cast %101 : vector<256x2xf32> to vector<16x16x2xf32>
    %c1_78 = arith.constant 1 : index
    %c1_79 = arith.constant 1 : index
    %c0_80 = arith.constant 0 : index
    %103 = vector.load %arg11[%c1_78, %c1_79, %c0_80] : memref<18x18x2xf32, #tpu.memory_space<vmem>>, vector<16x16x2xf32>
    tpu.vector_store %arg11[%c1_78, %c1_79, %c0_80], %102 {strides = array<i32>} : memref<18x18x2xf32, #tpu.memory_space<vmem>>, vector<16x16x2xf32>,
    %c0_81 = arith.constant 0 : index
    %c0_82 = arith.constant 0 : index
    %c0_83 = arith.constant 0 : index
    %104 = vector.load %arg11[%c0_81, %c0_82, %c0_83] : memref<18x18x2xf32, #tpu.memory_space<vmem>>, vector<16x16x2xf32>
    %105 = vector.shape_cast %104 : vector<16x16x2xf32> to vector<256x2xf32>
    %106 = arith.truncf %105 : vector<256x2xf32> to vector<256x2xbf16>
    %c18 = arith.constant 18 : index
    %c0_84 = arith.constant 0 : index
    %107 = vector.load %arg6[%c18, %c0_84] : memref<36x2xbf16, #tpu.memory_space<vmem>>, vector<2x2xbf16>
    %cst_85 = arith.constant dense<0.000000e+00> : vector<256x2xf32>
    %108 = tpu.matmul %106, %107, %cst_85 {dimension_numbers = #tpu.dot_dimension_numbers<[1], [0], [0], [1], [0, 0, 1, 1], [], []>} : vector<256x2xbf16>, vector<2x2xbf16>, vector<256x2xf32> -> vector<256x2xf32>
    %c0_86 = arith.constant 0 : index
    %c1_87 = arith.constant 1 : index
    %c0_88 = arith.constant 0 : index
    %109 = vector.load %arg11[%c0_86, %c1_87, %c0_88] : memref<18x18x2xf32, #tpu.memory_space<vmem>>, vector<16x16x2xf32>
    %110 = vector.shape_cast %109 : vector<16x16x2xf32> to vector<256x2xf32>
    %111 = arith.truncf %110 : vector<256x2xf32> to vector<256x2xbf16>
    %c20 = arith.constant 20 : index
    %c0_89 = arith.constant 0 : index
    %112 = vector.load %arg6[%c20, %c0_89] : memref<36x2xbf16, #tpu.memory_space<vmem>>, vector<2x2xbf16>
    %cst_90 = arith.constant dense<0.000000e+00> : vector<256x2xf32>
    %113 = tpu.matmul %111, %112, %cst_90 {dimension_numbers = #tpu.dot_dimension_numbers<[1], [0], [0], [1], [0, 0, 1, 1], [], []>} : vector<256x2xbf16>, vector<2x2xbf16>, vector<256x2xf32> -> vector<256x2xf32>
    %114 = arith.addf %108, %113 : vector<256x2xf32>
    %c0_91 = arith.constant 0 : index
    %c2_92 = arith.constant 2 : index
    %c0_93 = arith.constant 0 : index
    %115 = vector.load %arg11[%c0_91, %c2_92, %c0_93] : memref<18x18x2xf32, #tpu.memory_space<vmem>>, vector<16x16x2xf32>
    %116 = vector.shape_cast %115 : vector<16x16x2xf32> to vector<256x2xf32>
    %117 = arith.truncf %116 : vector<256x2xf32> to vector<256x2xbf16>
    %c22 = arith.constant 22 : index
    %c0_94 = arith.constant 0 : index
    %118 = vector.load %arg6[%c22, %c0_94] : memref<36x2xbf16, #tpu.memory_space<vmem>>, vector<2x2xbf16>
    %cst_95 = arith.constant dense<0.000000e+00> : vector<256x2xf32>
    %119 = tpu.matmul %117, %118, %cst_95 {dimension_numbers = #tpu.dot_dimension_numbers<[1], [0], [0], [1], [0, 0, 1, 1], [], []>} : vector<256x2xbf16>, vector<2x2xbf16>, vector<256x2xf32> -> vector<256x2xf32>
    %120 = arith.addf %114, %119 : vector<256x2xf32>
    %c1_96 = arith.constant 1 : index
    %c0_97 = arith.constant 0 : index
    %c0_98 = arith.constant 0 : index
    %121 = vector.load %arg11[%c1_96, %c0_97, %c0_98] : memref<18x18x2xf32, #tpu.memory_space<vmem>>, vector<16x16x2xf32>
    %122 = vector.shape_cast %121 : vector<16x16x2xf32> to vector<256x2xf32>
    %123 = arith.truncf %122 : vector<256x2xf32> to vector<256x2xbf16>
    %c24 = arith.constant 24 : index
    %c0_99 = arith.constant 0 : index
    %124 = vector.load %arg6[%c24, %c0_99] : memref<36x2xbf16, #tpu.memory_space<vmem>>, vector<2x2xbf16>
    %cst_100 = arith.constant dense<0.000000e+00> : vector<256x2xf32>
    %125 = tpu.matmul %123, %124, %cst_100 {dimension_numbers = #tpu.dot_dimension_numbers<[1], [0], [0], [1], [0, 0, 1, 1], [], []>} : vector<256x2xbf16>, vector<2x2xbf16>, vector<256x2xf32> -> vector<256x2xf32>
    %126 = arith.addf %120, %125 : vector<256x2xf32>
    %c1_101 = arith.constant 1 : index
    %c1_102 = arith.constant 1 : index
    %c0_103 = arith.constant 0 : index
    %127 = vector.load %arg11[%c1_101, %c1_102, %c0_103] : memref<18x18x2xf32, #tpu.memory_space<vmem>>, vector<16x16x2xf32>
    %128 = vector.shape_cast %127 : vector<16x16x2xf32> to vector<256x2xf32>
    %129 = arith.truncf %128 : vector<256x2xf32> to vector<256x2xbf16>
    %c26 = arith.constant 26 : index
    %c0_104 = arith.constant 0 : index
    %130 = vector.load %arg6[%c26, %c0_104] : memref<36x2xbf16, #tpu.memory_space<vmem>>, vector<2x2xbf16>
    %cst_105 = arith.constant dense<0.000000e+00> : vector<256x2xf32>
    %131 = tpu.matmul %129, %130, %cst_105 {dimension_numbers = #tpu.dot_dimension_numbers<[1], [0], [0], [1], [0, 0, 1, 1], [], []>} : vector<256x2xbf16>, vector<2x2xbf16>, vector<256x2xf32> -> vector<256x2xf32>
    %132 = arith.addf %126, %131 : vector<256x2xf32>
    %c1_106 = arith.constant 1 : index
    %c2_107 = arith.constant 2 : index
    %c0_108 = arith.constant 0 : index
    %133 = vector.load %arg11[%c1_106, %c2_107, %c0_108] : memref<18x18x2xf32, #tpu.memory_space<vmem>>, vector<16x16x2xf32>
    %134 = vector.shape_cast %133 : vector<16x16x2xf32> to vector<256x2xf32>
    %135 = arith.truncf %134 : vector<256x2xf32> to vector<256x2xbf16>
    %c28 = arith.constant 28 : index
    %c0_109 = arith.constant 0 : index
    %136 = vector.load %arg6[%c28, %c0_109] : memref<36x2xbf16, #tpu.memory_space<vmem>>, vector<2x2xbf16>
    %cst_110 = arith.constant dense<0.000000e+00> : vector<256x2xf32>
    %137 = tpu.matmul %135, %136, %cst_110 {dimension_numbers = #tpu.dot_dimension_numbers<[1], [0], [0], [1], [0, 0, 1, 1], [], []>} : vector<256x2xbf16>, vector<2x2xbf16>, vector<256x2xf32> -> vector<256x2xf32>
    %138 = arith.addf %132, %137 : vector<256x2xf32>
    %c2_111 = arith.constant 2 : index
    %c0_112 = arith.constant 0 : index
    %c0_113 = arith.constant 0 : index
    %139 = vector.load %arg11[%c2_111, %c0_112, %c0_113] : memref<18x18x2xf32, #tpu.memory_space<vmem>>, vector<16x16x2xf32>
    %140 = vector.shape_cast %139 : vector<16x16x2xf32> to vector<256x2xf32>
    %141 = arith.truncf %140 : vector<256x2xf32> to vector<256x2xbf16>
    %c30 = arith.constant 30 : index
    %c0_114 = arith.constant 0 : index
    %142 = vector.load %arg6[%c30, %c0_114] : memref<36x2xbf16, #tpu.memory_space<vmem>>, vector<2x2xbf16>
    %cst_115 = arith.constant dense<0.000000e+00> : vector<256x2xf32>
    %143 = tpu.matmul %141, %142, %cst_115 {dimension_numbers = #tpu.dot_dimension_numbers<[1], [0], [0], [1], [0, 0, 1, 1], [], []>} : vector<256x2xbf16>, vector<2x2xbf16>, vector<256x2xf32> -> vector<256x2xf32>
    %144 = arith.addf %138, %143 : vector<256x2xf32>
    %c2_116 = arith.constant 2 : index
    %c1_117 = arith.constant 1 : index
    %c0_118 = arith.constant 0 : index
    %145 = vector.load %arg11[%c2_116, %c1_117, %c0_118] : memref<18x18x2xf32, #tpu.memory_space<vmem>>, vector<16x16x2xf32>
    %146 = vector.shape_cast %145 : vector<16x16x2xf32> to vector<256x2xf32>
    %147 = arith.truncf %146 : vector<256x2xf32> to vector<256x2xbf16>
    %c32 = arith.constant 32 : index
    %c0_119 = arith.constant 0 : index
    %148 = vector.load %arg6[%c32, %c0_119] : memref<36x2xbf16, #tpu.memory_space<vmem>>, vector<2x2xbf16>
    %cst_120 = arith.constant dense<0.000000e+00> : vector<256x2xf32>
    %149 = tpu.matmul %147, %148, %cst_120 {dimension_numbers = #tpu.dot_dimension_numbers<[1], [0], [0], [1], [0, 0, 1, 1], [], []>} : vector<256x2xbf16>, vector<2x2xbf16>, vector<256x2xf32> -> vector<256x2xf32>
    %150 = arith.addf %144, %149 : vector<256x2xf32>
    %c2_121 = arith.constant 2 : index
    %c2_122 = arith.constant 2 : index
    %c0_123 = arith.constant 0 : index
    %151 = vector.load %arg11[%c2_121, %c2_122, %c0_123] : memref<18x18x2xf32, #tpu.memory_space<vmem>>, vector<16x16x2xf32>
    %152 = vector.shape_cast %151 : vector<16x16x2xf32> to vector<256x2xf32>
    %153 = arith.truncf %152 : vector<256x2xf32> to vector<256x2xbf16>
    %c34 = arith.constant 34 : index
    %c0_124 = arith.constant 0 : index
    %154 = vector.load %arg6[%c34, %c0_124] : memref<36x2xbf16, #tpu.memory_space<vmem>>, vector<2x2xbf16>
    %cst_125 = arith.constant dense<0.000000e+00> : vector<256x2xf32>
    %155 = tpu.matmul %153, %154, %cst_125 {dimension_numbers = #tpu.dot_dimension_numbers<[1], [0], [0], [1], [0, 0, 1, 1], [], []>} : vector<256x2xbf16>, vector<2x2xbf16>, vector<256x2xf32> -> vector<256x2xf32>
    %156 = arith.addf %150, %155 : vector<256x2xf32>
    %c1_126 = arith.constant 1 : index
    %c0_127 = arith.constant 0 : index
    %157 = vector.load %arg7[%c1_126, %c0_127] : memref<2x2xf32, #tpu.memory_space<vmem>>, vector<1x2xf32>
    %158 = vector.broadcast %157 : vector<1x2xf32> to vector<256x2xf32>
    %159 = arith.addf %156, %158 : vector<256x2xf32>
    %cst_128 = arith.constant 0.000000e+00 : f32
    %160 = vector.broadcast %cst_128 : f32 to vector<256x2xf32>
    %161 = arith.subf %160, %159 : vector<256x2xf32>
    %162 = math.exp %161 : vector<256x2xf32>
    %cst_129 = arith.constant 1.000000e+00 : f32
    %163 = vector.broadcast %cst_129 : f32 to vector<256x2xf32>
    %164 = arith.addf %163, %162 : vector<256x2xf32>
    %165 = tpu.reciprocal %164 {approx = true} : vector<256x2xf32> -> vector<256x2xf32>
    %166 = arith.mulf %159, %165 : vector<256x2xf32>
    %167 = arith.addf %166, %29 : vector<256x2xf32>
    %168 = arith.truncf %167 : vector<256x2xf32> to vector<256x2xbf16>
    %c4_130 = arith.constant 4 : index
    %c0_131 = arith.constant 0 : index
    %169 = vector.load %arg8[%c4_130, %c0_131] : memref<6x4xbf16, #tpu.memory_space<vmem>>, vector<2x4xbf16>
    %cst_132 = arith.constant dense<0.000000e+00> : vector<256x4xf32>
    %170 = tpu.matmul %168, %169, %cst_132 {dimension_numbers = #tpu.dot_dimension_numbers<[1], [0], [0], [1], [0, 0, 1, 1], [], []>} : vector<256x2xbf16>, vector<2x4xbf16>, vector<256x4xf32> -> vector<256x4xf32>
    %171 = arith.addf %36, %170 : vector<256x4xf32>
    %c0_133 = arith.constant 0 : index
    %c0_134 = arith.constant 0 : index
    %172 = vector.load %arg9[%c0_133, %c0_134] : memref<1x4xf32, #tpu.memory_space<vmem>>, vector<1x4xf32>
    %173 = vector.broadcast %172 : vector<1x4xf32> to vector<256x4xf32>
    %174 = arith.addf %171, %173 : vector<256x4xf32>
    %cst_135 = arith.constant 0.000000e+00 : f32
    %175 = vector.broadcast %cst_135 : f32 to vector<256x4xf32>
    %176 = arith.subf %175, %174 : vector<256x4xf32>
    %177 = math.exp %176 : vector<256x4xf32>
    %cst_136 = arith.constant 1.000000e+00 : f32
    %178 = vector.broadcast %cst_136 : f32 to vector<256x4xf32>
    %179 = arith.addf %178, %177 : vector<256x4xf32>
    %180 = tpu.reciprocal %179 {approx = true} : vector<256x4xf32> -> vector<256x4xf32>
    %181 = arith.mulf %174, %180 : vector<256x4xf32>
    %182 = vector.shape_cast %181 : vector<256x4xf32> to vector<16x16x4xf32>
    %c0_137 = arith.constant 0 : index
    %c0_138 = arith.constant 0 : index
    %c0_139 = arith.constant 0 : index
    %c0_140 = arith.constant 0 : index
    %183 = vector.load %arg10[%c0_137, %c0_138, %c0_139, %c0_140] : memref<1x16x16x4xf32, #tpu.memory_space<vmem>>, vector<1x16x16x4xf32>
    %184 = vector.shape_cast %183 : vector<1x16x16x4xf32> to vector<16x16x4xf32>
    %185 = vector.shape_cast %182 : vector<16x16x4xf32> to vector<1x16x16x4xf32>
    tpu.vector_store %arg10[%c0_137, %c0_138, %c0_139, %c0_140], %185 {strides = array<i32>} : memref<1x16x16x4xf32, #tpu.memory_space<vmem>>, vector<1x16x16x4xf32>,
    return
  }
  func.func @transform_0(%arg0: i32) -> (i32, i32, i32, i32) {
    %c0_i32 = arith.constant 0 : i32
    %c0_i32_0 = arith.constant 0 : i32
    %c0_i32_1 = arith.constant 0 : i32
    %c0_i32_2 = arith.constant 0 : i32
    return %arg0, %c0_i32, %c0_i32_0, %c0_i32_1 : i32, i32, i32, i32
  }
  func.func @transform_1(%arg0: i32) -> (i32, i32) {
    %c0_i32 = arith.constant 0 : i32
    %c0_i32_0 = arith.constant 0 : i32
    %c0_i32_1 = arith.constant 0 : i32
    return %c0_i32, %c0_i32_0 : i32, i32
  }
  func.func @transform_2(%arg0: i32) -> (i32, i32) {
    %c0_i32 = arith.constant 0 : i32
    %c0_i32_0 = arith.constant 0 : i32
    %c0_i32_1 = arith.constant 0 : i32
    return %c0_i32, %c0_i32_0 : i32, i32
  }
  func.func @transform_3(%arg0: i32) -> (i32, i32) {
    %c0_i32 = arith.constant 0 : i32
    %c0_i32_0 = arith.constant 0 : i32
    %c0_i32_1 = arith.constant 0 : i32
    return %c0_i32, %c0_i32_0 : i32, i32
  }
  func.func @transform_4(%arg0: i32) -> (i32, i32) {
    %c0_i32 = arith.constant 0 : i32
    %c0_i32_0 = arith.constant 0 : i32
    %c0_i32_1 = arith.constant 0 : i32
    return %c0_i32, %c0_i32_0 : i32, i32
  }
  func.func @transform_5(%arg0: i32) -> (i32, i32) {
    %c0_i32 = arith.constant 0 : i32
    %c0_i32_0 = arith.constant 0 : i32
    %c0_i32_1 = arith.constant 0 : i32
    return %c0_i32, %c0_i32_0 : i32, i32
  }
  func.func @transform_6(%arg0: i32) -> (i32, i32) {
    %c0_i32 = arith.constant 0 : i32
    %c0_i32_0 = arith.constant 0 : i32
    %c0_i32_1 = arith.constant 0 : i32
    return %c0_i32, %c0_i32_0 : i32, i32
  }
  func.func @transform_7(%arg0: i32) -> (i32, i32) {
    %c0_i32 = arith.constant 0 : i32
    %c0_i32_0 = arith.constant 0 : i32
    %c0_i32_1 = arith.constant 0 : i32
    return %c0_i32, %c0_i32_0 : i32, i32
  }
  func.func @transform_8(%arg0: i32) -> (i32, i32) {
    %c0_i32 = arith.constant 0 : i32
    %c0_i32_0 = arith.constant 0 : i32
    %c0_i32_1 = arith.constant 0 : i32
    return %c0_i32, %c0_i32_0 : i32, i32
  }
  func.func @transform_9(%arg0: i32) -> (i32, i32, i32, i32) {
    %c0_i32 = arith.constant 0 : i32
    %c0_i32_0 = arith.constant 0 : i32
    %c0_i32_1 = arith.constant 0 : i32
    %c0_i32_2 = arith.constant 0 : i32
    return %arg0, %c0_i32, %c0_i32_0, %c0_i32_1 : i32, i32, i32, i32
  }
}

</mosaic_0001>

<llo_original>
// kernel: c2f_pallas.1
$region0: #{c2f_pallas.1}
  #allocation0 [shape = 'u32[]', space=smem, size = 0x4, offset = 0x4, fixed_abs, tag = 'smem constant byte address 0x4 - core index']
  #allocation1 [shape = 'u32[72,128]{1,0:T(1,128)}', space=vmem, size = 0x9000, scoped, tag = 'internal scratch']
  #allocation2 [shape = 'f32[18,18,2]{2,1,0:T(8,128)}', space=vmem, size = 0x36000, scoped, tag = 'scratch operand']
  %s0 = inlined_call_operand.vmem [shape: f32[2,16,16,4], index: 0, kind: input, shape index: {}]
  %s1 = inlined_call_operand.vmem [shape: bf16[4,2], index: 1, kind: input, shape index: {}]
  %s2 = inlined_call_operand.vmem [shape: f32[1,2], index: 2, kind: input, shape index: {}]
  %s3 = inlined_call_operand.vmem [shape: bf16[4,2], index: 3, kind: input, shape index: {}]
  %s4 = inlined_call_operand.vmem [shape: f32[1,2], index: 4, kind: input, shape index: {}]
  %s5 = inlined_call_operand.vmem [shape: bf16[36,2], index: 5, kind: input, shape index: {}]
  %s6 = inlined_call_operand.vmem [shape: f32[2,2], index: 6, kind: input, shape index: {}]
  %s7 = inlined_call_operand.vmem [shape: bf16[6,4], index: 7, kind: input, shape index: {}]
  %s8 = inlined_call_operand.vmem [shape: f32[1,4], index: 8, kind: input, shape index: {}]
  %s9 = inlined_call_operand.vmem [shape: f32[2,16,16,4], index: 9, kind: output, shape index: {}]
  %s10 = sld [smem:[#allocation0]]
  $region69: #{c2f_pallas.1} parent=0
    _
  %s12 = ssub.s32 1, %s10
  %s13 = scalar_select 0, %s12, %s10
  loop: start=0, step=1, limit=4
  $region2: #{c2f_pallas.1} parent=0 // loop_pre_header
    _
  $region3: #{c2f_pallas.1} parent=0 // loop_header
    %s15 = sphi 0, %s19
    %p16 = scmp.ge.s32.totalorder %s15, 4
    %s25 = sphi 0, %s27
    %s28 = sphi 0, %s25
    %s29 = sphi 0, %s28
    %s45 = sphi 0, %s29
    %s49 = sphi 0, %s49
    %s51 = sphi 0, %s49
    %s52 = sphi 0, %s51
    %s66 = sphi 0, %s52
    %s70 = sphi 0, %s70
    %s72 = sphi 0, %s70
    %s73 = sphi 0, %s72
    %s87 = sphi 0, %s73
    %s91 = sphi 0, %s91
    %s93 = sphi 0, %s91
    %s94 = sphi 0, %s93
    %s108 = sphi 0, %s94
    %s112 = sphi 0, %s112
    %s114 = sphi 0, %s112
    %s115 = sphi 0, %s114
    %s129 = sphi 0, %s115
    %s133 = sphi 0, %s133
    %s135 = sphi 0, %s133
    %s136 = sphi 0, %s135
    %s150 = sphi 0, %s136
    %s154 = sphi 0, %s154
    %s156 = sphi 0, %s154
    %s157 = sphi 0, %s156
    %s171 = sphi 0, %s157
    %s175 = sphi 0, %s175
    %s177 = sphi 0, %s175
    %s178 = sphi 0, %s177
    %s192 = sphi 0, %s178
    %s196 = sphi 0, %s196
    %s198 = sphi 0, %s196
    %s199 = sphi 0, %s198
    %s213 = sphi 0, %s199
    %s219 = sphi 0, %s221
    %s222 = sphi 0, %s219
    %s223 = sphi 0, %s222
    %s239 = sphi 0, %s223
  $region4: #{c2f_pallas.1} parent=0 // loop_header_branch
    %18 = sbr.rel (%p16) target = $region8
  $region5: #{c2f_pallas.1} parent=0 // loop_body
    %s20 = ssub.s32 %s15, 1
    %s21 = ssub.s32 %s15, 2
    %s22 = sadd.s32 %s15, 1
    %s23 = ssub.s32 %s15, %s22
    %p24 = scmp.eq.s32.totalorder %s23, 0
    %s26 = sadd.s32 %s25, 1
    %s27 = scalar_select %p24, %s25, %s26
    %p30 = pneg %p24
    %p31 = scmp.eq.s32.totalorder %s15, 1
    %p32 = por %p30, %p31
    %p33 = scmp.ne.s32.totalorder %s25, %s28
    %p34 = scmp.eq.s32.totalorder %s15, 0
    %p35 = por %p33, %p34
    %p36 = scmp.ne.s32.totalorder %s25, %s28
    %p37 = scmp.eq.s32.totalorder %s20, 1
    %p38 = por %p36, %p37
    %p39 = scmp.ne.s32.totalorder %s28, %s29
    %p40 = scmp.eq.s32.totalorder %s20, 0
    %p41 = por %p39, %p40
    %p42 = scmp.ne.s32.totalorder %s28, %s29
    %p43 = scmp.eq.s32.totalorder %s21, 1
    %p44 = por %p42, %p43
    %p46 = scmp.ne.s32.totalorder %s29, %s45
    %p47 = scmp.eq.s32.totalorder %s21, 0
    %p48 = por %p46, %p47
    %s50 = sadd.s32 %s49, 1
    %p53 = scmp.eq.s32.totalorder %s15, 1
    %p54 = scmp.ne.s32.totalorder %s49, %s51
    %p55 = scmp.eq.s32.totalorder %s15, 0
    %p56 = por %p54, %p55
    %p57 = scmp.ne.s32.totalorder %s49, %s51
    %p58 = scmp.eq.s32.totalorder %s20, 1
    %p59 = por %p57, %p58
    %p60 = scmp.ne.s32.totalorder %s51, %s52
    %p61 = scmp.eq.s32.totalorder %s20, 0
    %p62 = por %p60, %p61
    %p63 = scmp.ne.s32.totalorder %s51, %s52
    %p64 = scmp.eq.s32.totalorder %s21, 1
    %p65 = por %p63, %p64
    %p67 = scmp.ne.s32.totalorder %s52, %s66
    %p68 = scmp.eq.s32.totalorder %s21, 0
    %p69 = por %p67, %p68
    %s71 = sadd.s32 %s70, 1
    %p74 = scmp.eq.s32.totalorder %s15, 1
    %p75 = scmp.ne.s32.totalorder %s70, %s72
    %p76 = scmp.eq.s32.totalorder %s15, 0
    %p77 = por %p75, %p76
    %p78 = scmp.ne.s32.totalorder %s70, %s72
    %p79 = scmp.eq.s32.totalorder %s20, 1
    %p80 = por %p78, %p79
    %p81 = scmp.ne.s32.totalorder %s72, %s73
    %p82 = scmp.eq.s32.totalorder %s20, 0
    %p83 = por %p81, %p82
    %p84 = scmp.ne.s32.totalorder %s72, %s73
    %p85 = scmp.eq.s32.totalorder %s21, 1
    %p86 = por %p84, %p85
    %p88 = scmp.ne.s32.totalorder %s73, %s87
    %p89 = scmp.eq.s32.totalorder %s21, 0
    %p90 = por %p88, %p89
    %s92 = sadd.s32 %s91, 1
    %p95 = scmp.eq.s32.totalorder %s15, 1
    %p96 = scmp.ne.s32.totalorder %s91, %s93
    %p97 = scmp.eq.s32.totalorder %s15, 0
    %p98 = por %p96, %p97
    %p99 = scmp.ne.s32.totalorder %s91, %s93
    %p100 = scmp.eq.s32.totalorder %s20, 1
    %p101 = por %p99, %p100
    %p102 = scmp.ne.s32.totalorder %s93, %s94
    %p103 = scmp.eq.s32.totalorder %s20, 0
    %p104 = por %p102, %p103
    %p105 = scmp.ne.s32.totalorder %s93, %s94
    %p106 = scmp.eq.s32.totalorder %s21, 1
    %p107 = por %p105, %p106
    %p109 = scmp.ne.s32.totalorder %s94, %s108
    %p110 = scmp.eq.s32.totalorder %s21, 0
    %p111 = por %p109, %p110
    %s113 = sadd.s32 %s112, 1
    %p116 = scmp.eq.s32.totalorder %s15, 1
    %p117 = scmp.ne.s32.totalorder %s112, %s114
    %p118 = scmp.eq.s32.totalorder %s15, 0
    %p119 = por %p117, %p118
    %p120 = scmp.ne.s32.totalorder %s112, %s114
    %p121 = scmp.eq.s32.totalorder %s20, 1
    %p122 = por %p120, %p121
    %p123 = scmp.ne.s32.totalorder %s114, %s115
    %p124 = scmp.eq.s32.totalorder %s20, 0
    %p125 = por %p123, %p124
    %p126 = scmp.ne.s32.totalorder %s114, %s115
    %p127 = scmp.eq.s32.totalorder %s21, 1
    %p128 = por %p126, %p127
    %p130 = scmp.ne.s32.totalorder %s115, %s129
    %p131 = scmp.eq.s32.totalorder %s21, 0
    %p132 = por %p130, %p131
    %s134 = sadd.s32 %s133, 1
    %p137 = scmp.eq.s32.totalorder %s15, 1
    %p138 = scmp.ne.s32.totalorder %s133, %s135
    %p139 = scmp.eq.s32.totalorder %s15, 0
    %p140 = por %p138, %p139
    %p141 = scmp.ne.s32.totalorder %s133, %s135
    %p142 = scmp.eq.s32.totalorder %s20, 1
    %p143 = por %p141, %p142
    %p144 = scmp.ne.s32.totalorder %s135, %s136
    %p145 = scmp.eq.s32.totalorder %s20, 0
    %p146 = por %p144, %p145
    %p147 = scmp.ne.s32.totalorder %s135, %s136
    %p148 = scmp.eq.s32.totalorder %s21, 1
    %p149 = por %p147, %p148
    %p151 = scmp.ne.s32.totalorder %s136, %s150
    %p152 = scmp.eq.s32.totalorder %s21, 0
    %p153 = por %p151, %p152
    %s155 = sadd.s32 %s154, 1
    %p158 = scmp.eq.s32.totalorder %s15, 1
    %p159 = scmp.ne.s32.totalorder %s154, %s156
    %p160 = scmp.eq.s32.totalorder %s15, 0
    %p161 = por %p159, %p160
    %p162 = scmp.ne.s32.totalorder %s154, %s156
    %p163 = scmp.eq.s32.totalorder %s20, 1
    %p164 = por %p162, %p163
    %p165 = scmp.ne.s32.totalorder %s156, %s157
    %p166 = scmp.eq.s32.totalorder %s20, 0
    %p167 = por %p165, %p166
    %p168 = scmp.ne.s32.totalorder %s156, %s157
    %p169 = scmp.eq.s32.totalorder %s21, 1
    %p170 = por %p168, %p169
    %p172 = scmp.ne.s32.totalorder %s157, %s171
    %p173 = scmp.eq.s32.totalorder %s21, 0
    %p174 = por %p172, %p173
    %s176 = sadd.s32 %s175, 1
    %p179 = scmp.eq.s32.totalorder %s15, 1
    %p180 = scmp.ne.s32.totalorder %s175, %s177
    %p181 = scmp.eq.s32.totalorder %s15, 0
    %p182 = por %p180, %p181
    %p183 = scmp.ne.s32.totalorder %s175, %s177
    %p184 = scmp.eq.s32.totalorder %s20, 1
    %p185 = por %p183, %p184
    %p186 = scmp.ne.s32.totalorder %s177, %s178
    %p187 = scmp.eq.s32.totalorder %s20, 0
    %p188 = por %p186, %p187
    %p189 = scmp.ne.s32.totalorder %s177, %s178
    %p190 = scmp.eq.s32.totalorder %s21, 1
    %p191 = por %p189, %p190
    %p193 = scmp.ne.s32.totalorder %s178, %s192
    %p194 = scmp.eq.s32.totalorder %s21, 0
    %p195 = por %p193, %p194
    %s197 = sadd.s32 %s196, 1
    %p200 = scmp.eq.s32.totalorder %s15, 1
    %p201 = scmp.ne.s32.totalorder %s196, %s198
    %p202 = scmp.eq.s32.totalorder %s15, 0
    %p203 = por %p201, %p202
    %p204 = scmp.ne.s32.totalorder %s196, %s198
    %p205 = scmp.eq.s32.totalorder %s20, 1
    %p206 = por %p204, %p205
    %p207 = scmp.ne.s32.totalorder %s198, %s199
    %p208 = scmp.eq.s32.totalorder %s20, 0
    %p209 = por %p207, %p208
    %p210 = scmp.ne.s32.totalorder %s198, %s199
    %p211 = scmp.eq.s32.totalorder %s21, 1
    %p212 = por %p210, %p211
    %p214 = scmp.ne.s32.totalorder %s199, %s213
    %p215 = scmp.eq.s32.totalorder %s21, 0
    %p216 = por %p214, %p215
    %s217 = ssub.s32 %s15, %s22
    %p218 = scmp.eq.s32.totalorder %s217, 0
    %s220 = sadd.s32 %s219, 1
    %s221 = scalar_select %p218, %s219, %s220
    %p224 = pneg %p218
    %p225 = scmp.eq.s32.totalorder %s15, 1
    %p226 = por %p224, %p225
    %p227 = scmp.ne.s32.totalorder %s219, %s222
    %p228 = scmp.eq.s32.totalorder %s15, 0
    %p229 = por %p227, %p228
    %p230 = scmp.ne.s32.totalorder %s219, %s222
    %p231 = scmp.eq.s32.totalorder %s20, 1
    %p232 = por %p230, %p231
    %p233 = scmp.ne.s32.totalorder %s222, %s223
    %p234 = scmp.eq.s32.totalorder %s20, 0
    %p235 = por %p233, %p234
    %p236 = scmp.ne.s32.totalorder %s222, %s223
    %p237 = scmp.eq.s32.totalorder %s21, 1
    %p238 = por %p236, %p237
    %p240 = scmp.ne.s32.totalorder %s223, %s239
    %p241 = scmp.eq.s32.totalorder %s21, 0
    %p242 = por %p240, %p241
    %p243 = scmp.le.s32.totalorder 1, %s15
    %p244 = scmp.lt.s32.totalorder %s15, 3
    %p245 = pnand %p243, %p244
    %p246 = pneg %p245
    // Predicated region
    $region9: #{c2f_pallas.1} parent=5 // pred_check
      _
    $region10: #{c2f_pallas.1} parent=5 // pred_check_branch
      %248 = sbr.rel (%p245) target = $region12
    $region11: #{c2f_pallas.1} parent=5 // pred_region
      %s249 = ssub.s32 %s15, 1
      // Predicated region
      $region13: #{c2f_pallas.1} parent=11 // pred_check
        %p250 = pneg %p62
      $region14: #{c2f_pallas.1} parent=11 // pred_check_branch
        %252 = sbr.rel (%p250) target = $region16
      $region15: #{c2f_pallas.1} parent=11 // pred_region
        _
      $region16: #{c2f_pallas.1} parent=11 // pred_fallthru
        _
      // Predicated region
      $region17: #{c2f_pallas.1} parent=11 // pred_check
        %p253 = pneg %p83
      $region18: #{c2f_pallas.1} parent=11 // pred_check_branch
        %255 = sbr.rel (%p253) target = $region20
      $region19: #{c2f_pallas.1} parent=11 // pred_region
        _
      $region20: #{c2f_pallas.1} parent=11 // pred_fallthru
        _
      // Predicated region
      $region21: #{c2f_pallas.1} parent=11 // pred_check
        %p256 = pneg %p104
      $region22: #{c2f_pallas.1} parent=11 // pred_check_branch
        %258 = sbr.rel (%p256) target = $region24
      $region23: #{c2f_pallas.1} parent=11 // pred_region
        _
      $region24: #{c2f_pallas.1} parent=11 // pred_fallthru
        _
      // Predicated region
      $region25: #{c2f_pallas.1} parent=11 // pred_check
        %p259 = pneg %p125
      $region26: #{c2f_pallas.1} parent=11 // pred_check_branch
        %261 = sbr.rel (%p259) target = $region28
      $region27: #{c2f_pallas.1} parent=11 // pred_region
        _
      $region28: #{c2f_pallas.1} parent=11 // pred_fallthru
        _
      // Predicated region
      $region29: #{c2f_pallas.1} parent=11 // pred_check
        %p262 = pneg %p146
      $region30: #{c2f_pallas.1} parent=11 // pred_check_branch
        %264 = sbr.rel (%p262) target = $region32
      $region31: #{c2f_pallas.1} parent=11 // pred_region
        _
      $region32: #{c2f_pallas.1} parent=11 // pred_fallthru
        _
      // Predicated region
      $region33: #{c2f_pallas.1} parent=11 // pred_check
        %p265 = pneg %p167
      $region34: #{c2f_pallas.1} parent=11 // pred_check_branch
        %267 = sbr.rel (%p265) target = $region36
      $region35: #{c2f_pallas.1} parent=11 // pred_region
        _
      $region36: #{c2f_pallas.1} parent=11 // pred_fallthru
        _
      // Predicated region
      $region37: #{c2f_pallas.1} parent=11 // pred_check
        %p268 = pneg %p188
      $region38: #{c2f_pallas.1} parent=11 // pred_check_branch
        %270 = sbr.rel (%p268) target = $region40
      $region39: #{c2f_pallas.1} parent=11 // pred_region
        _
      $region40: #{c2f_pallas.1} parent=11 // pred_fallthru
        _
      // Predicated region
      $region41: #{c2f_pallas.1} parent=11 // pred_check
        %p271 = pneg %p209
      $region42: #{c2f_pallas.1} parent=11 // pred_check_branch
        %273 = sbr.rel (%p271) target = $region44
      $region43: #{c2f_pallas.1} parent=11 // pred_region
        _
      $region44: #{c2f_pallas.1} parent=11 // pred_fallthru
        _
    $region12: #{c2f_pallas.1} parent=5 // pred_fallthru
      _
    %p274 = scmp.lt.s32.totalorder %s15, 2
    // Predicated region
    $region45: #{c2f_pallas.1} parent=5 // pred_check
      %p275 = pneg %p274
    $region46: #{c2f_pallas.1} parent=5 // pred_check_branch
      %277 = sbr.rel (%p275) target = $region48
    $region47: #{c2f_pallas.1} parent=5 // pred_region
      // Predicated region
      $region49: #{c2f_pallas.1} parent=47 // pred_check
        %p278 = pneg %p35
      $region50: #{c2f_pallas.1} parent=47 // pred_check_branch
        %280 = sbr.rel (%p278) target = $region52
      $region51: #{c2f_pallas.1} parent=47 // pred_region
        %p281 = scmp.lt.s32.totalorder %s15, 1
        %s282 = scalar_select %p281, %s15, 1
        %s283 = smul.addr %s282, 32
        %s284 = smul.addr %s283, 8
        %s285 = scalar_lea.vmem %s0, %s284
      $region52: #{c2f_pallas.1} parent=47 // pred_fallthru
        _
    $region48: #{c2f_pallas.1} parent=5 // pred_fallthru
      _
    %p286 = scmp.le.s32.totalorder 1, %s15
    %p287 = scmp.lt.s32.totalorder %s15, 3
    %p288 = pnand %p286, %p287
    %p289 = pneg %p288
    // Predicated region
    $region53: #{c2f_pallas.1} parent=5 // pred_check
      _
    $region54: #{c2f_pallas.1} parent=5 // pred_check_branch
      %291 = sbr.rel (%p288) target = $region56
    $region55: #{c2f_pallas.1} parent=5 // pred_region
      %s292 = ssub.s32 %s15, 1
      %p293 = scmp.lt.s32.totalorder %s20, 1
      %s294 = scalar_select %p293, %s20, 1
      %s295 = smul.addr %s294, 32
      %s296 = smul.addr %s295, 8
      %s297 = scalar_lea.vmem %s0, %s296
      %p298 = pneg %p41
      %p299 = pneg %p38
      %p300 = pneg %p62
      %p301 = pneg %p59
      %p302 = pneg %p83
      %p303 = pneg %p80
      %p304 = pneg %p104
      %p305 = pneg %p101
      %p306 = pneg %p125
      %p307 = pneg %p122
      %p308 = pneg %p146
      %p309 = pneg %p143
      %p310 = pneg %p167
      %p311 = pneg %p164
      %p312 = pneg %p188
      %p313 = pneg %p185
      %p314 = pneg %p209
      %p315 = pneg %p206
      %p316 = pneg %p235
      %p317 = pneg %p232
      %p318 = scmp.lt.s32.totalorder %s20, 1
      %s319 = scalar_select %p318, %s20, 1
      %s320 = smul.addr %s319, 32
      %s321 = smul.addr %s320, 8
      %s322 = scalar_lea.vmem %s9, %s321
      %p323 = scmp.lt.s32.totalorder %s20, 1
      %s324 = scalar_select %p323, %s20, 1
      %s325 = smul.addr %s324, 32
      %s326 = smul.addr %s325, 8
      %s327 = scalar_lea.vmem %s0, %s326
      %p328 = scmp.lt.s32.totalorder %s20, 1
      %s329 = scalar_select %p328, %s20, 1
      %s330 = smul.addr %s329, 32
      %s331 = smul.addr %s330, 8
      %s332 = scalar_lea.vmem %s9, %s331
      %vm334 = vcmask 15360
      %335 = vst.msk [vmem:[#allocation2] sm:$0xff] %vm334, 0.0
      %336 = vst.msk [vmem:[#allocation2 + $0x8] sm:$0xff] %vm334, 0.0
      %vm337 = vcmask 9216
      %338 = vst.msk [vmem:[#allocation2 + $0x10] sm:$0x3] %vm337, 0.0
      %339 = vst.msk [vmem:[#allocation2 + $0x18] sm:$0xff] %vm334, 0.0
      %340 = vst.msk [vmem:[#allocation2 + $0x20] sm:$0xff] %vm334, 0.0
      %341 = vst.msk [vmem:[#allocation2 + $0x28] sm:$0x3] %vm337, 0.0
      %342 = vst.msk [vmem:[#allocation2 + $0x30] sm:$0xff] %vm334, 0.0
      %343 = vst.msk [vmem:[#allocation2 + $0x38] sm:$0xff] %vm334, 0.0
      %344 = vst.msk [vmem:[#allocation2 + $0x40] sm:$0x3] %vm337, 0.0
      %345 = vst.msk [vmem:[#allocation2 + $0x48] sm:$0xff] %vm334, 0.0
      %346 = vst.msk [vmem:[#allocation2 + $0x50] sm:$0xff] %vm334, 0.0
      %347 = vst.msk [vmem:[#allocation2 + $0x58] sm:$0x3] %vm337, 0.0
      %348 = vst.msk [vmem:[#allocation2 + $0x60] sm:$0xff] %vm334, 0.0
      %349 = vst.msk [vmem:[#allocation2 + $0x68] sm:$0xff] %vm334, 0.0
      %350 = vst.msk [vmem:[#allocation2 + $0x70] sm:$0x3] %vm337, 0.0
      %351 = vst.msk [vmem:[#allocation2 + $0x78] sm:$0xff] %vm334, 0.0
      %352 = vst.msk [vmem:[#allocation2 + $0x80] sm:$0xff] %vm334, 0.0
      %353 = vst.msk [vmem:[#allocation2 + $0x88] sm:$0x3] %vm337, 0.0
      %354 = vst.msk [vmem:[#allocation2 + $0x90] sm:$0xff] %vm334, 0.0
      %355 = vst.msk [vmem:[#allocation2 + $0x98] sm:$0xff] %vm334, 0.0
      %356 = vst.msk [vmem:[#allocation2 + $0xa0] sm:$0x3] %vm337, 0.0
      %357 = vst.msk [vmem:[#allocation2 + $0xa8] sm:$0xff] %vm334, 0.0
      %358 = vst.msk [vmem:[#allocation2 + $0xb0] sm:$0xff] %vm334, 0.0
      %359 = vst.msk [vmem:[#allocation2 + $0xb8] sm:$0x3] %vm337, 0.0
      %360 = vst.msk [vmem:[#allocation2 + $0xc0] sm:$0xff] %vm334, 0.0
      %361 = vst.msk [vmem:[#allocation2 + $0xc8] sm:$0xff] %vm334, 0.0
      %362 = vst.msk [vmem:[#allocation2 + $0xd0] sm:$0x3] %vm337, 0.0
      %363 = vst.msk [vmem:[#allocation2 + $0xd8] sm:$0xff] %vm334, 0.0
      %364 = vst.msk [vmem:[#allocation2 + $0xe0] sm:$0xff] %vm334, 0.0
      %365 = vst.msk [vmem:[#allocation2 + $0xe8] sm:$0x3] %vm337, 0.0
      %366 = vst.msk [vmem:[#allocation2 + $0xf0] sm:$0xff] %vm334, 0.0
      %367 = vst.msk [vmem:[#allocation2 + $0xf8] sm:$0xff] %vm334, 0.0
      %368 = vst.msk [vmem:[#allocation2 + $0x100] sm:$0x3] %vm337, 0.0
      %369 = vst.msk [vmem:[#allocation2 + $0x108] sm:$0xff] %vm334, 0.0
      %370 = vst.msk [vmem:[#allocation2 + $0x110] sm:$0xff] %vm334, 0.0
      %371 = vst.msk [vmem:[#allocation2 + $0x118] sm:$0x3] %vm337, 0.0
      %372 = vst.msk [vmem:[#allocation2 + $0x120] sm:$0xff] %vm334, 0.0
      %373 = vst.msk [vmem:[#allocation2 + $0x128] sm:$0xff] %vm334, 0.0
      %374 = vst.msk [vmem:[#allocation2 + $0x130] sm:$0x3] %vm337, 0.0
      %375 = vst.msk [vmem:[#allocation2 + $0x138] sm:$0xff] %vm334, 0.0
      %376 = vst.msk [vmem:[#allocation2 + $0x140] sm:$0xff] %vm334, 0.0
      %377 = vst.msk [vmem:[#allocation2 + $0x148] sm:$0x3] %vm337, 0.0
      %378 = vst.msk [vmem:[#allocation2 + $0x150] sm:$0xff] %vm334, 0.0
      %379 = vst.msk [vmem:[#allocation2 + $0x158] sm:$0xff] %vm334, 0.0
      %380 = vst.msk [vmem:[#allocation2 + $0x160] sm:$0x3] %vm337, 0.0
      %381 = vst.msk [vmem:[#allocation2 + $0x168] sm:$0xff] %vm334, 0.0
      %382 = vst.msk [vmem:[#allocation2 + $0x170] sm:$0xff] %vm334, 0.0
      %383 = vst.msk [vmem:[#allocation2 + $0x178] sm:$0x3] %vm337, 0.0
      %384 = vst.msk [vmem:[#allocation2 + $0x180] sm:$0xff] %vm334, 0.0
      %385 = vst.msk [vmem:[#allocation2 + $0x188] sm:$0xff] %vm334, 0.0
      %386 = vst.msk [vmem:[#allocation2 + $0x190] sm:$0x3] %vm337, 0.0
      %387 = vst.msk [vmem:[#allocation2 + $0x198] sm:$0xff] %vm334, 0.0
      %388 = vst.msk [vmem:[#allocation2 + $0x1a0] sm:$0xff] %vm334, 0.0
      %389 = vst.msk [vmem:[#allocation2 + $0x1a8] sm:$0x3] %vm337, 0.0
      %v390 = vld [vmem:[%s327] sm:$0xff]
      %v391 = vld [vmem:[%s327 + $0x8] sm:$0xff]
      %v392 = vld [vmem:[%s327 + $0x10] sm:$0xff]
      %v393 = vld [vmem:[%s327 + $0x18] sm:$0xff]
      %v394 = vld [vmem:[%s327 + $0x20] sm:$0xff]
      %v395 = vld [vmem:[%s327 + $0x28] sm:$0xff]
      %v396 = vld [vmem:[%s327 + $0x30] sm:$0xff]
      %v397 = vld [vmem:[%s327 + $0x38] sm:$0xff]
      %v398 = vld [vmem:[%s327 + $0x40] sm:$0xff]
      %v399 = vld [vmem:[%s327 + $0x48] sm:$0xff]
      %v400 = vld [vmem:[%s327 + $0x50] sm:$0xff]
      %v401 = vld [vmem:[%s327 + $0x58] sm:$0xff]
      %v402 = vld [vmem:[%s327 + $0x60] sm:$0xff]
      %v403 = vld [vmem:[%s327 + $0x68] sm:$0xff]
      %v404 = vld [vmem:[%s327 + $0x70] sm:$0xff]
      %v405 = vld [vmem:[%s327 + $0x78] sm:$0xff]
      %v406 = vld [vmem:[%s327 + $0x80] sm:$0xff]
      %v407 = vld [vmem:[%s327 + $0x88] sm:$0xff]
      %v408 = vld [vmem:[%s327 + $0x90] sm:$0xff]
      %v409 = vld [vmem:[%s327 + $0x98] sm:$0xff]
      %v410 = vld [vmem:[%s327 + $0xa0] sm:$0xff]
      %v411 = vld [vmem:[%s327 + $0xa8] sm:$0xff]
      %v412 = vld [vmem:[%s327 + $0xb0] sm:$0xff]
      %v413 = vld [vmem:[%s327 + $0xb8] sm:$0xff]
      %v414 = vld [vmem:[%s327 + $0xc0] sm:$0xff]
      %v415 = vld [vmem:[%s327 + $0xc8] sm:$0xff]
      %v416 = vld [vmem:[%s327 + $0xd0] sm:$0xff]
      %v417 = vld [vmem:[%s327 + $0xd8] sm:$0xff]
      %v418 = vld [vmem:[%s327 + $0xe0] sm:$0xff]
      %v419 = vld [vmem:[%s327 + $0xe8] sm:$0xff]
      %v420 = vld [vmem:[%s327 + $0xf0] sm:$0xff]
      %v421 = vld [vmem:[%s327 + $0xf8] sm:$0xff]
      %v422 = vpack.c.bf16 %v391, %v390
      %v423 = vpack.c.bf16 %v393, %v392
      %v424 = vpack.c.bf16 %v395, %v394
      %v425 = vpack.c.bf16 %v397, %v396
      %v426 = vpack.c.bf16 %v399, %v398
      %v427 = vpack.c.bf16 %v401, %v400
      %v428 = vpack.c.bf16 %v403, %v402
      %v429 = vpack.c.bf16 %v405, %v404
      %v430 = vpack.c.bf16 %v407, %v406
      %v431 = vpack.c.bf16 %v409, %v408
      %v432 = vpack.c.bf16 %v411, %v410
      %v433 = vpack.c.bf16 %v413, %v412
      %v434 = vpack.c.bf16 %v415, %v414
      %v435 = vpack.c.bf16 %v417, %v416
      %v436 = vpack.c.bf16 %v419, %v418
      %v437 = vpack.c.bf16 %v421, %v420
      %v438 = vld [vmem:[%s1] sm:$0x3]
      %v439 = vld [vmem:[%s2] sm:$0x1]
      %v441 = vperm.slane %v439, 0
      %vm443 = vcmask 31744
      %v445 = vsel %vm443, %v422, 0
      %v448 = vsel %vm443, %v423, 0
      %v451 = vsel %vm443, %v424, 0
      %v454 = vsel %vm443, %v425, 0
      %v457 = vsel %vm443, %v426, 0
      %v460 = vsel %vm443, %v427, 0
      %v463 = vsel %vm443, %v428, 0
      %v466 = vsel %vm443, %v429, 0
      %v469 = vsel %vm443, %v430, 0
      %v472 = vsel %vm443, %v431, 0
      %v475 = vsel %vm443, %v432, 0
      %v478 = vsel %vm443, %v433, 0
      %v481 = vsel %vm443, %v434, 0
      %v484 = vsel %vm443, %v435, 0
      %v487 = vsel %vm443, %v436, 0
      %v490 = vsel %vm443, %v437, 0
      %vm492 = vcmask 1041408
      %v494 = vsel %vm492, %v438, 0
      %496 = vmatpush.bf16.msra.mxu0 0
      %497 = vmatpush.bf16.msra.mxu0 0
      %498 = vmatpush.bf16.msra.mxu0 0
      %499 = vmatpush.bf16.msra.mxu0 0
      %500 = vmatpush.bf16.msra.mxu0 0
      %501 = vmatpush.bf16.msra.mxu0 0
      %502 = vmatpush.bf16.msra.mxu0 0
      %503 = vmatpush.bf16.msra.mxu0 %v494
      %504 = vmatmul.bf16.gmra.mxu0 %v445
      %v505 = vpop.f32.mrf.mxu0
      %v506 = vadd.f32 %v441, %v505
      %v507 = vpop.f32.mrf.mxu0
      %v508 = vadd.f32 %v441, %v507
      %509 = vmatmul.bf16.gmra.mxu0 %v448
      %v510 = vpop.f32.mrf.mxu0
      %v511 = vadd.f32 %v441, %v510
      %v512 = vpop.f32.mrf.mxu0
      %v513 = vadd.f32 %v441, %v512
      %514 = vmatmul.bf16.gmra.mxu0 %v451
      %v515 = vpop.f32.mrf.mxu0
      %v516 = vadd.f32 %v441, %v515
      %v517 = vpop.f32.mrf.mxu0
      %v518 = vadd.f32 %v441, %v517
      %519 = vmatmul.bf16.gmra.mxu0 %v454
      %v520 = vpop.f32.mrf.mxu0
      %v521 = vadd.f32 %v441, %v520
      %v522 = vpop.f32.mrf.mxu0
      %v523 = vadd.f32 %v441, %v522
      %524 = vmatmul.bf16.gmra.mxu0 %v457
      %v525 = vpop.f32.mrf.mxu0
      %v526 = vadd.f32 %v441, %v525
      %v527 = vpop.f32.mrf.mxu0
      %v528 = vadd.f32 %v441, %v527
      %529 = vmatmul.bf16.gmra.mxu0 %v460
      %v530 = vpop.f32.mrf.mxu0
      %v531 = vadd.f32 %v441, %v530
      %v532 = vpop.f32.mrf.mxu0
      %v533 = vadd.f32 %v441, %v532
      %534 = vmatmul.bf16.gmra.mxu0 %v463
      %v535 = vpop.f32.mrf.mxu0
      %v536 = vadd.f32 %v441, %v535
      %v537 = vpop.f32.mrf.mxu0
      %v538 = vadd.f32 %v441, %v537
      %539 = vmatmul.bf16.gmra.mxu0 %v466
      %v540 = vpop.f32.mrf.mxu0
      %v541 = vadd.f32 %v441, %v540
      %v542 = vpop.f32.mrf.mxu0
      %v543 = vadd.f32 %v441, %v542
      %544 = vmatmul.bf16.gmra.mxu0 %v469
      %v545 = vpop.f32.mrf.mxu0
      %v546 = vadd.f32 %v441, %v545
      %v547 = vpop.f32.mrf.mxu0
      %v548 = vadd.f32 %v441, %v547
      %549 = vmatmul.bf16.gmra.mxu0 %v472
      %v550 = vpop.f32.mrf.mxu0
      %v551 = vadd.f32 %v441, %v550
      %v552 = vpop.f32.mrf.mxu0
      %v553 = vadd.f32 %v441, %v552
      %554 = vmatmul.bf16.gmra.mxu0 %v475
      %v555 = vpop.f32.mrf.mxu0
      %v556 = vadd.f32 %v441, %v555
      %v557 = vpop.f32.mrf.mxu0
      %v558 = vadd.f32 %v441, %v557
      %559 = vmatmul.bf16.gmra.mxu0 %v478
      %v560 = vpop.f32.mrf.mxu0
      %v561 = vadd.f32 %v441, %v560
      %v562 = vpop.f32.mrf.mxu0
      %v563 = vadd.f32 %v441, %v562
      %564 = vmatmul.bf16.gmra.mxu0 %v481
      %v565 = vpop.f32.mrf.mxu0
      %v566 = vadd.f32 %v441, %v565
      %v567 = vpop.f32.mrf.mxu0
      %v568 = vadd.f32 %v441, %v567
      %569 = vmatmul.bf16.gmra.mxu0 %v484
      %v570 = vpop.f32.mrf.mxu0
      %v571 = vadd.f32 %v441, %v570
      %v572 = vpop.f32.mrf.mxu0
      %v573 = vadd.f32 %v441, %v572
      %574 = vmatmul.bf16.gmra.mxu0 %v487
      %v575 = vpop.f32.mrf.mxu0
      %v576 = vadd.f32 %v441, %v575
      %v577 = vpop.f32.mrf.mxu0
      %v578 = vadd.f32 %v441, %v577
      %579 = vmatmul.bf16.gmra.mxu0 %v490
      %v580 = vpop.f32.mrf.mxu0
      %v581 = vadd.f32 %v441, %v580
      %v582 = vpop.f32.mrf.mxu0
      %v583 = vadd.f32 %v441, %v582
      %584 = vdwg.mxu0
      %v585 = vsub.f32 0.0, %v506
      %v586 = vsub.f32 0.0, %v508
      %v587 = vsub.f32 0.0, %v511
      %v588 = vsub.f32 0.0, %v513
      %v589 = vsub.f32 0.0, %v516
      %v590 = vsub.f32 0.0, %v518
      %v591 = vsub.f32 0.0, %v521
      %v592 = vsub.f32 0.0, %v523
      %v593 = vsub.f32 0.0, %v526
      %v594 = vsub.f32 0.0, %v528
      %v595 = vsub.f32 0.0, %v531
      %v596 = vsub.f32 0.0, %v533
      %v597 = vsub.f32 0.0, %v536
      %v598 = vsub.f32 0.0, %v538
      %v599 = vsub.f32 0.0, %v541
      %v600 = vsub.f32 0.0, %v543
      %v601 = vsub.f32 0.0, %v546
      %v602 = vsub.f32 0.0, %v548
      %v603 = vsub.f32 0.0, %v551
      %v604 = vsub.f32 0.0, %v553
      %v605 = vsub.f32 0.0, %v556
      %v606 = vsub.f32 0.0, %v558
      %v607 = vsub.f32 0.0, %v561
      %v608 = vsub.f32 0.0, %v563
      %v609 = vsub.f32 0.0, %v566
      %v610 = vsub.f32 0.0, %v568
      %v611 = vsub.f32 0.0, %v571
      %v612 = vsub.f32 0.0, %v573
      %v613 = vsub.f32 0.0, %v576
      %v614 = vsub.f32 0.0, %v578
      %v615 = vsub.f32 0.0, %v581
      %v616 = vsub.f32 0.0, %v583
      %v617 = vmul.f32 %v585, 1.442695
      %v618 = vpow.pop %v617
      %v619 = vmul.f32 %v586, 1.442695
      %v620 = vpow.pop %v619
      %v621 = vmul.f32 %v587, 1.442695
      %v622 = vpow.pop %v621
      %v623 = vmul.f32 %v588, 1.442695
      %v624 = vpow.pop %v623
      %v625 = vmul.f32 %v589, 1.442695
      %v626 = vpow.pop %v625
      %v627 = vmul.f32 %v590, 1.442695
      %v628 = vpow.pop %v627
      %v629 = vmul.f32 %v591, 1.442695
      %v630 = vpow.pop %v629
      %v631 = vmul.f32 %v592, 1.442695
      %v632 = vpow.pop %v631
      %v633 = vmul.f32 %v593, 1.442695
      %v634 = vpow.pop %v633
      %v635 = vmul.f32 %v594, 1.442695
      %v636 = vpow.pop %v635
      %v637 = vmul.f32 %v595, 1.442695
      %v638 = vpow.pop %v637
      %v639 = vmul.f32 %v596, 1.442695
      %v640 = vpow.pop %v639
      %v641 = vmul.f32 %v597, 1.442695
      %v642 = vpow.pop %v641
      %v643 = vmul.f32 %v598, 1.442695
      %v644 = vpow.pop %v643
      %v645 = vmul.f32 %v599, 1.442695
      %v646 = vpow.pop %v645
      %v647 = vmul.f32 %v600, 1.442695
      %v648 = vpow.pop %v647
      %v649 = vmul.f32 %v601, 1.442695
      %v650 = vpow.pop %v649
      %v651 = vmul.f32 %v602, 1.442695
      %v652 = vpow.pop %v651
      %v653 = vmul.f32 %v603, 1.442695
      %v654 = vpow.pop %v653
      %v655 = vmul.f32 %v604, 1.442695
      %v656 = vpow.pop %v655
      %v657 = vmul.f32 %v605, 1.442695
      %v658 = vpow.pop %v657
      %v659 = vmul.f32 %v606, 1.442695
      %v660 = vpow.pop %v659
      %v661 = vmul.f32 %v607, 1.442695
      %v662 = vpow.pop %v661
      %v663 = vmul.f32 %v608, 1.442695
      %v664 = vpow.pop %v663
      %v665 = vmul.f32 %v609, 1.442695
      %v666 = vpow.pop %v665
      %v667 = vmul.f32 %v610, 1.442695
      %v668 = vpow.pop %v667
      %v669 = vmul.f32 %v611, 1.442695
      %v670 = vpow.pop %v669
      %v671 = vmul.f32 %v612, 1.442695
      %v672 = vpow.pop %v671
      %v673 = vmul.f32 %v613, 1.442695
      %v674 = vpow.pop %v673
      %v675 = vmul.f32 %v614, 1.442695
      %v676 = vpow.pop %v675
      %v677 = vmul.f32 %v615, 1.442695
      %v678 = vpow.pop %v677
      %v679 = vmul.f32 %v616, 1.442695
      %v680 = vpow.pop %v679
      %v681 = vadd.f32 %v618, 1.0
      %v682 = vadd.f32 %v620, 1.0
      %v683 = vadd.f32 %v622, 1.0
      %v684 = vadd.f32 %v624, 1.0
      %v685 = vadd.f32 %v626, 1.0
      %v686 = vadd.f32 %v628, 1.0
      %v687 = vadd.f32 %v630, 1.0
      %v688 = vadd.f32 %v632, 1.0
      %v689 = vadd.f32 %v634, 1.0
      %v690 = vadd.f32 %v636, 1.0
      %v691 = vadd.f32 %v638, 1.0
      %v692 = vadd.f32 %v640, 1.0
      %v693 = vadd.f32 %v642, 1.0
      %v694 = vadd.f32 %v644, 1.0
      %v695 = vadd.f32 %v646, 1.0
      %v696 = vadd.f32 %v648, 1.0
      %v697 = vadd.f32 %v650, 1.0
      %v698 = vadd.f32 %v652, 1.0
      %v699 = vadd.f32 %v654, 1.0
      %v700 = vadd.f32 %v656, 1.0
      %v701 = vadd.f32 %v658, 1.0
      %v702 = vadd.f32 %v660, 1.0
      %v703 = vadd.f32 %v662, 1.0
      %v704 = vadd.f32 %v664, 1.0
      %v705 = vadd.f32 %v666, 1.0
      %v706 = vadd.f32 %v668, 1.0
      %v707 = vadd.f32 %v670, 1.0
      %v708 = vadd.f32 %v672, 1.0
      %v709 = vadd.f32 %v674, 1.0
      %v710 = vadd.f32 %v676, 1.0
      %v711 = vadd.f32 %v678, 1.0
      %v712 = vadd.f32 %v680, 1.0
      %v713 = vrcp.pop %v681
      %v714 = vrcp.pop %v682
      %v715 = vrcp.pop %v683
      %v716 = vrcp.pop %v684
      %v717 = vrcp.pop %v685
      %v718 = vrcp.pop %v686
      %v719 = vrcp.pop %v687
      %v720 = vrcp.pop %v688
      %v721 = vrcp.pop %v689
      %v722 = vrcp.pop %v690
      %v723 = vrcp.pop %v691
      %v724 = vrcp.pop %v692
      %v725 = vrcp.pop %v693
      %v726 = vrcp.pop %v694
      %v727 = vrcp.pop %v695
      %v728 = vrcp.pop %v696
      %v729 = vrcp.pop %v697
      %v730 = vrcp.pop %v698
      %v731 = vrcp.pop %v699
      %v732 = vrcp.pop %v700
      %v733 = vrcp.pop %v701
      %v734 = vrcp.pop %v702
      %v735 = vrcp.pop %v703
      %v736 = vrcp.pop %v704
      %v737 = vrcp.pop %v705
      %v738 = vrcp.pop %v706
      %v739 = vrcp.pop %v707
      %v740 = vrcp.pop %v708
      %v741 = vrcp.pop %v709
      %v742 = vrcp.pop %v710
      %v743 = vrcp.pop %v711
      %v744 = vrcp.pop %v712
      %v745 = vmul.f32 %v506, %v713
      %v746 = vmul.f32 %v508, %v714
      %v747 = vmul.f32 %v511, %v715
      %v748 = vmul.f32 %v513, %v716
      %v749 = vmul.f32 %v516, %v717
      %v750 = vmul.f32 %v518, %v718
      %v751 = vmul.f32 %v521, %v719
      %v752 = vmul.f32 %v523, %v720
      %v753 = vmul.f32 %v526, %v721
      %v754 = vmul.f32 %v528, %v722
      %v755 = vmul.f32 %v531, %v723
      %v756 = vmul.f32 %v533, %v724
      %v757 = vmul.f32 %v536, %v725
      %v758 = vmul.f32 %v538, %v726
      %v759 = vmul.f32 %v541, %v727
      %v760 = vmul.f32 %v543, %v728
      %v761 = vmul.f32 %v546, %v729
      %v762 = vmul.f32 %v548, %v730
      %v763 = vmul.f32 %v551, %v731
      %v764 = vmul.f32 %v553, %v732
      %v765 = vmul.f32 %v556, %v733
      %v766 = vmul.f32 %v558, %v734
      %v767 = vmul.f32 %v561, %v735
      %v768 = vmul.f32 %v563, %v736
      %v769 = vmul.f32 %v566, %v737
      %v770 = vmul.f32 %v568, %v738
      %v771 = vmul.f32 %v571, %v739
      %v772 = vmul.f32 %v573, %v740
      %v773 = vmul.f32 %v576, %v741
      %v774 = vmul.f32 %v578, %v742
      %v775 = vmul.f32 %v581, %v743
      %v776 = vmul.f32 %v583, %v744
      %v777 = vld [vmem:[%s3] sm:$0x3]
      %v778 = vld [vmem:[%s4] sm:$0x1]
      %v780 = vperm.slane %v778, 0
      %v783 = vsel %vm492, %v777, 0
      %785 = vmatpush.bf16.msra.mxu0 0
      %786 = vmatpush.bf16.msra.mxu0 0
      %787 = vmatpush.bf16.msra.mxu0 0
      %788 = vmatpush.bf16.msra.mxu0 0
      %789 = vmatpush.bf16.msra.mxu0 0
      %790 = vmatpush.bf16.msra.mxu0 0
      %791 = vmatpush.bf16.msra.mxu0 0
      %792 = vmatpush.bf16.msra.mxu0 %v783
      %793 = vmatmul.bf16.gmra.mxu0 %v445
      %v794 = vpop.f32.mrf.mxu0
      %v795 = vadd.f32 %v780, %v794
      %v796 = vpop.f32.mrf.mxu0
      %v797 = vadd.f32 %v780, %v796
      %798 = vmatmul.bf16.gmra.mxu0 %v448
      %v799 = vpop.f32.mrf.mxu0
      %v800 = vadd.f32 %v780, %v799
      %v801 = vpop.f32.mrf.mxu0
      %v802 = vadd.f32 %v780, %v801
      %803 = vmatmul.bf16.gmra.mxu0 %v451
      %v804 = vpop.f32.mrf.mxu0
      %v805 = vadd.f32 %v780, %v804
      %v806 = vpop.f32.mrf.mxu0
      %v807 = vadd.f32 %v780, %v806
      %808 = vmatmul.bf16.gmra.mxu0 %v454
      %v809 = vpop.f32.mrf.mxu0
      %v810 = vadd.f32 %v780, %v809
      %v811 = vpop.f32.mrf.mxu0
      %v812 = vadd.f32 %v780, %v811
      %813 = vmatmul.bf16.gmra.mxu0 %v457
      %v814 = vpop.f32.mrf.mxu0
      %v815 = vadd.f32 %v780, %v814
      %v816 = vpop.f32.mrf.mxu0
      %v817 = vadd.f32 %v780, %v816
      %818 = vmatmul.bf16.gmra.mxu0 %v460
      %v819 = vpop.f32.mrf.mxu0
      %v820 = vadd.f32 %v780, %v819
      %v821 = vpop.f32.mrf.mxu0
      %v822 = vadd.f32 %v780, %v821
      %823 = vmatmul.bf16.gmra.mxu0 %v463
      %v824 = vpop.f32.mrf.mxu0
      %v825 = vadd.f32 %v780, %v824
      %v826 = vpop.f32.mrf.mxu0
      %v827 = vadd.f32 %v780, %v826
      %828 = vmatmul.bf16.gmra.mxu0 %v466
      %v829 = vpop.f32.mrf.mxu0
      %v830 = vadd.f32 %v780, %v829
      %v831 = vpop.f32.mrf.mxu0
      %v832 = vadd.f32 %v780, %v831
      %833 = vmatmul.bf16.gmra.mxu0 %v469
      %v834 = vpop.f32.mrf.mxu0
      %v835 = vadd.f32 %v780, %v834
      %v836 = vpop.f32.mrf.mxu0
      %v837 = vadd.f32 %v780, %v836
      %838 = vmatmul.bf16.gmra.mxu0 %v472
      %v839 = vpop.f32.mrf.mxu0
      %v840 = vadd.f32 %v780, %v839
      %v841 = vpop.f32.mrf.mxu0
      %v842 = vadd.f32 %v780, %v841
      %843 = vmatmul.bf16.gmra.mxu0 %v475
      %v844 = vpop.f32.mrf.mxu0
      %v845 = vadd.f32 %v780, %v844
      %v846 = vpop.f32.mrf.mxu0
      %v847 = vadd.f32 %v780, %v846
      %848 = vmatmul.bf16.gmra.mxu0 %v478
      %v849 = vpop.f32.mrf.mxu0
      %v850 = vadd.f32 %v780, %v849
      %v851 = vpop.f32.mrf.mxu0
      %v852 = vadd.f32 %v780, %v851
      %853 = vmatmul.bf16.gmra.mxu0 %v481
      %v854 = vpop.f32.mrf.mxu0
      %v855 = vadd.f32 %v780, %v854
      %v856 = vpop.f32.mrf.mxu0
      %v857 = vadd.f32 %v780, %v856
      %858 = vmatmul.bf16.gmra.mxu0 %v484
      %v859 = vpop.f32.mrf.mxu0
      %v860 = vadd.f32 %v780, %v859
      %v861 = vpop.f32.mrf.mxu0
      %v862 = vadd.f32 %v780, %v861
      %863 = vmatmul.bf16.gmra.mxu0 %v487
      %v864 = vpop.f32.mrf.mxu0
      %v865 = vadd.f32 %v780, %v864
      %v866 = vpop.f32.mrf.mxu0
      %v867 = vadd.f32 %v780, %v866
      %868 = vmatmul.bf16.gmra.mxu0 %v490
      %v869 = vpop.f32.mrf.mxu0
      %v870 = vadd.f32 %v780, %v869
      %v871 = vpop.f32.mrf.mxu0
      %v872 = vadd.f32 %v780, %v871
      %873 = vdwg.mxu0
      %v874 = vsub.f32 0.0, %v795
      %v875 = vsub.f32 0.0, %v797
      %v876 = vsub.f32 0.0, %v800
      %v877 = vsub.f32 0.0, %v802
      %v878 = vsub.f32 0.0, %v805
      %v879 = vsub.f32 0.0, %v807
      %v880 = vsub.f32 0.0, %v810
      %v881 = vsub.f32 0.0, %v812
      %v882 = vsub.f32 0.0, %v815
      %v883 = vsub.f32 0.0, %v817
      %v884 = vsub.f32 0.0, %v820
      %v885 = vsub.f32 0.0, %v822
      %v886 = vsub.f32 0.0, %v825
      %v887 = vsub.f32 0.0, %v827
      %v888 = vsub.f32 0.0, %v830
      %v889 = vsub.f32 0.0, %v832
      %v890 = vsub.f32 0.0, %v835
      %v891 = vsub.f32 0.0, %v837
      %v892 = vsub.f32 0.0, %v840
      %v893 = vsub.f32 0.0, %v842
      %v894 = vsub.f32 0.0, %v845
      %v895 = vsub.f32 0.0, %v847
      %v896 = vsub.f32 0.0, %v850
      %v897 = vsub.f32 0.0, %v852
      %v898 = vsub.f32 0.0, %v855
      %v899 = vsub.f32 0.0, %v857
      %v900 = vsub.f32 0.0, %v860
      %v901 = vsub.f32 0.0, %v862
      %v902 = vsub.f32 0.0, %v865
      %v903 = vsub.f32 0.0, %v867
      %v904 = vsub.f32 0.0, %v870
      %v905 = vsub.f32 0.0, %v872
      %v906 = vmul.f32 %v874, 1.442695
      %v907 = vpow.pop %v906
      %v908 = vmul.f32 %v875, 1.442695
      %v909 = vpow.pop %v908
      %v910 = vmul.f32 %v876, 1.442695
      %v911 = vpow.pop %v910
      %v912 = vmul.f32 %v877, 1.442695
      %v913 = vpow.pop %v912
      %v914 = vmul.f32 %v878, 1.442695
      %v915 = vpow.pop %v914
      %v916 = vmul.f32 %v879, 1.442695
      %v917 = vpow.pop %v916
      %v918 = vmul.f32 %v880, 1.442695
      %v919 = vpow.pop %v918
      %v920 = vmul.f32 %v881, 1.442695
      %v921 = vpow.pop %v920
      %v922 = vmul.f32 %v882, 1.442695
      %v923 = vpow.pop %v922
      %v924 = vmul.f32 %v883, 1.442695
      %v925 = vpow.pop %v924
      %v926 = vmul.f32 %v884, 1.442695
      %v927 = vpow.pop %v926
      %v928 = vmul.f32 %v885, 1.442695
      %v929 = vpow.pop %v928
      %v930 = vmul.f32 %v886, 1.442695
      %v931 = vpow.pop %v930
      %v932 = vmul.f32 %v887, 1.442695
      %v933 = vpow.pop %v932
      %v934 = vmul.f32 %v888, 1.442695
      %v935 = vpow.pop %v934
      %v936 = vmul.f32 %v889, 1.442695
      %v937 = vpow.pop %v936
      %v938 = vmul.f32 %v890, 1.442695
      %v939 = vpow.pop %v938
      %v940 = vmul.f32 %v891, 1.442695
      %v941 = vpow.pop %v940
      %v942 = vmul.f32 %v892, 1.442695
      %v943 = vpow.pop %v942
      %v944 = vmul.f32 %v893, 1.442695
      %v945 = vpow.pop %v944
      %v946 = vmul.f32 %v894, 1.442695
      %v947 = vpow.pop %v946
      %v948 = vmul.f32 %v895, 1.442695
      %v949 = vpow.pop %v948
      %v950 = vmul.f32 %v896, 1.442695
      %v951 = vpow.pop %v950
      %v952 = vmul.f32 %v897, 1.442695
      %v953 = vpow.pop %v952
      %v954 = vmul.f32 %v898, 1.442695
      %v955 = vpow.pop %v954
      %v956 = vmul.f32 %v899, 1.442695
      %v957 = vpow.pop %v956
      %v958 = vmul.f32 %v900, 1.442695
      %v959 = vpow.pop %v958
      %v960 = vmul.f32 %v901, 1.442695
      %v961 = vpow.pop %v960
      %v962 = vmul.f32 %v902, 1.442695
      %v963 = vpow.pop %v962
      %v964 = vmul.f32 %v903, 1.442695
      %v965 = vpow.pop %v964
      %v966 = vmul.f32 %v904, 1.442695
      %v967 = vpow.pop %v966
      %v968 = vmul.f32 %v905, 1.442695
      %v969 = vpow.pop %v968
      %v970 = vadd.f32 %v907, 1.0
      %v971 = vadd.f32 %v909, 1.0
      %v972 = vadd.f32 %v911, 1.0
      %v973 = vadd.f32 %v913, 1.0
      %v974 = vadd.f32 %v915, 1.0
      %v975 = vadd.f32 %v917, 1.0
      %v976 = vadd.f32 %v919, 1.0
      %v977 = vadd.f32 %v921, 1.0
      %v978 = vadd.f32 %v923, 1.0
      %v979 = vadd.f32 %v925, 1.0
      %v980 = vadd.f32 %v927, 1.0
      %v981 = vadd.f32 %v929, 1.0
      %v982 = vadd.f32 %v931, 1.0
      %v983 = vadd.f32 %v933, 1.0
      %v984 = vadd.f32 %v935, 1.0
      %v985 = vadd.f32 %v937, 1.0
      %v986 = vadd.f32 %v939, 1.0
      %v987 = vadd.f32 %v941, 1.0
      %v988 = vadd.f32 %v943, 1.0
      %v989 = vadd.f32 %v945, 1.0
      %v990 = vadd.f32 %v947, 1.0
      %v991 = vadd.f32 %v949, 1.0
      %v992 = vadd.f32 %v951, 1.0
      %v993 = vadd.f32 %v953, 1.0
      %v994 = vadd.f32 %v955, 1.0
      %v995 = vadd.f32 %v957, 1.0
      %v996 = vadd.f32 %v959, 1.0
      %v997 = vadd.f32 %v961, 1.0
      %v998 = vadd.f32 %v963, 1.0
      %v999 = vadd.f32 %v965, 1.0
      %v1000 = vadd.f32 %v967, 1.0
      %v1001 = vadd.f32 %v969, 1.0
      %v1002 = vrcp.pop %v970
      %v1003 = vrcp.pop %v971
      %v1004 = vrcp.pop %v972
      %v1005 = vrcp.pop %v973
      %v1006 = vrcp.pop %v974
      %v1007 = vrcp.pop %v975
      %v1008 = vrcp.pop %v976
      %v1009 = vrcp.pop %v977
      %v1010 = vrcp.pop %v978
      %v1011 = vrcp.pop %v979
      %v1012 = vrcp.pop %v980
      %v1013 = vrcp.pop %v981
      %v1014 = vrcp.pop %v982
      %v1015 = vrcp.pop %v983
      %v1016 = vrcp.pop %v984
      %v1017 = vrcp.pop %v985
      %v1018 = vrcp.pop %v986
      %v1019 = vrcp.pop %v987
      %v1020 = vrcp.pop %v988
      %v1021 = vrcp.pop %v989
      %v1022 = vrcp.pop %v990
      %v1023 = vrcp.pop %v991
      %v1024 = vrcp.pop %v992
      %v1025 = vrcp.pop %v993
      %v1026 = vrcp.pop %v994
      %v1027 = vrcp.pop %v995
      %v1028 = vrcp.pop %v996
      %v1029 = vrcp.pop %v997
      %v1030 = vrcp.pop %v998
      %v1031 = vrcp.pop %v999
      %v1032 = vrcp.pop %v1000
      %v1033 = vrcp.pop %v1001
      %v1034 = vmul.f32 %v795, %v1002
      %v1035 = vmul.f32 %v797, %v1003
      %v1036 = vmul.f32 %v800, %v1004
      %v1037 = vmul.f32 %v802, %v1005
      %v1038 = vmul.f32 %v805, %v1006
      %v1039 = vmul.f32 %v807, %v1007
      %v1040 = vmul.f32 %v810, %v1008
      %v1041 = vmul.f32 %v812, %v1009
      %v1042 = vmul.f32 %v815, %v1010
      %v1043 = vmul.f32 %v817, %v1011
      %v1044 = vmul.f32 %v820, %v1012
      %v1045 = vmul.f32 %v822, %v1013
      %v1046 = vmul.f32 %v825, %v1014
      %v1047 = vmul.f32 %v827, %v1015
      %v1048 = vmul.f32 %v830, %v1016
      %v1049 = vmul.f32 %v832, %v1017
      %v1050 = vmul.f32 %v835, %v1018
      %v1051 = vmul.f32 %v837, %v1019
      %v1052 = vmul.f32 %v840, %v1020
      %v1053 = vmul.f32 %v842, %v1021
      %v1054 = vmul.f32 %v845, %v1022
      %v1055 = vmul.f32 %v847, %v1023
      %v1056 = vmul.f32 %v850, %v1024
      %v1057 = vmul.f32 %v852, %v1025
      %v1058 = vmul.f32 %v855, %v1026
      %v1059 = vmul.f32 %v857, %v1027
      %v1060 = vmul.f32 %v860, %v1028
      %v1061 = vmul.f32 %v862, %v1029
      %v1062 = vmul.f32 %v865, %v1030
      %v1063 = vmul.f32 %v867, %v1031
      %v1064 = vmul.f32 %v870, %v1032
      %v1065 = vmul.f32 %v872, %v1033
      %v1066 = vpack.c.bf16 %v746, %v745
      %v1067 = vpack.c.bf16 %v748, %v747
      %v1068 = vpack.c.bf16 %v750, %v749
      %v1069 = vpack.c.bf16 %v752, %v751
      %v1070 = vpack.c.bf16 %v754, %v753
      %v1071 = vpack.c.bf16 %v756, %v755
      %v1072 = vpack.c.bf16 %v758, %v757
      %v1073 = vpack.c.bf16 %v760, %v759
      %v1074 = vpack.c.bf16 %v762, %v761
      %v1075 = vpack.c.bf16 %v764, %v763
      %v1076 = vpack.c.bf16 %v766, %v765
      %v1077 = vpack.c.bf16 %v768, %v767
      %v1078 = vpack.c.bf16 %v770, %v769
      %v1079 = vpack.c.bf16 %v772, %v771
      %v1080 = vpack.c.bf16 %v774, %v773
      %v1081 = vpack.c.bf16 %v776, %v775
      %v1082 = vld [vmem:[%s7] sm:$0x1]
      %v1083 = vpack.c.bf16 %v1035, %v1034
      %v1084 = vpack.c.bf16 %v1037, %v1036
      %v1085 = vpack.c.bf16 %v1039, %v1038
      %v1086 = vpack.c.bf16 %v1041, %v1040
      %v1087 = vpack.c.bf16 %v1043, %v1042
      %v1088 = vpack.c.bf16 %v1045, %v1044
      %v1089 = vpack.c.bf16 %v1047, %v1046
      %v1090 = vpack.c.bf16 %v1049, %v1048
      %v1091 = vpack.c.bf16 %v1051, %v1050
      %v1092 = vpack.c.bf16 %v1053, %v1052
      %v1093 = vpack.c.bf16 %v1055, %v1054
      %v1094 = vpack.c.bf16 %v1057, %v1056
      %v1095 = vpack.c.bf16 %v1059, %v1058
      %v1096 = vpack.c.bf16 %v1061, %v1060
      %v1097 = vpack.c.bf16 %v1063, %v1062
      %v1098 = vpack.c.bf16 %v1065, %v1064
      %v1099 = vld [vmem:[%s7] sm:$0x2]
      %v1101 = vunpack.c.l.b16 %v1099
      %v1102 = vpack.c.b16 %v1101, %v1101
      %v1103 = vrot.slane %v1102, 1
      %v1105 = vsel %vm334, %v1083, 0
      %v1108 = vsel %vm334, %v1084, 0
      %v1111 = vsel %vm334, %v1085, 0
      %v1114 = vsel %vm334, %v1086, 0
      %v1117 = vsel %vm334, %v1087, 0
      %v1120 = vsel %vm334, %v1088, 0
      %v1123 = vsel %vm334, %v1089, 0
      %v1126 = vsel %vm334, %v1090, 0
      %v1129 = vsel %vm334, %v1091, 0
      %v1132 = vsel %vm334, %v1092, 0
      %v1135 = vsel %vm334, %v1093, 0
      %v1138 = vsel %vm334, %v1094, 0
      %v1141 = vsel %vm334, %v1095, 0
      %v1144 = vsel %vm334, %v1096, 0
      %v1147 = vsel %vm334, %v1097, 0
      %v1150 = vsel %vm334, %v1098, 0
      %vm1152 = vcmask 1040384
      %v1154 = vsel %vm1152, %v1103, 0
      %1156 = vmatpush.bf16.msra.mxu0 0
      %1157 = vmatpush.bf16.msra.mxu0 0
      %1158 = vmatpush.bf16.msra.mxu0 0
      %1159 = vmatpush.bf16.msra.mxu0 0
      %1160 = vmatpush.bf16.msra.mxu0 0
      %1161 = vmatpush.bf16.msra.mxu0 0
      %1162 = vmatpush.bf16.msra.mxu0 0
      %1163 = vmatpush.bf16.msra.mxu0 %v1154
      %1164 = vmatmul.bf16.gmra.mxu0 %v1105
      %v1165 = vpop.f32.mrf.mxu0
      %v1166 = vadd.f32 0.0, %v1165
      %v1167 = vpop.f32.mrf.mxu0
      %v1168 = vadd.f32 0.0, %v1167
      %1169 = vmatmul.bf16.gmra.mxu0 %v1108
      %v1170 = vpop.f32.mrf.mxu0
      %v1171 = vadd.f32 0.0, %v1170
      %v1172 = vpop.f32.mrf.mxu0
      %v1173 = vadd.f32 0.0, %v1172
      %1174 = vmatmul.bf16.gmra.mxu0 %v1111
      %v1175 = vpop.f32.mrf.mxu0
      %v1176 = vadd.f32 0.0, %v1175
      %v1177 = vpop.f32.mrf.mxu0
      %v1178 = vadd.f32 0.0, %v1177
      %1179 = vmatmul.bf16.gmra.mxu0 %v1114
      %v1180 = vpop.f32.mrf.mxu0
      %v1181 = vadd.f32 0.0, %v1180
      %v1182 = vpop.f32.mrf.mxu0
      %v1183 = vadd.f32 0.0, %v1182
      %1184 = vmatmul.bf16.gmra.mxu0 %v1117
      %v1185 = vpop.f32.mrf.mxu0
      %v1186 = vadd.f32 0.0, %v1185
      %v1187 = vpop.f32.mrf.mxu0
      %v1188 = vadd.f32 0.0, %v1187
      %1189 = vmatmul.bf16.gmra.mxu0 %v1120
      %v1190 = vpop.f32.mrf.mxu0
      %v1191 = vadd.f32 0.0, %v1190
      %v1192 = vpop.f32.mrf.mxu0
      %v1193 = vadd.f32 0.0, %v1192
      %1194 = vmatmul.bf16.gmra.mxu0 %v1123
      %v1195 = vpop.f32.mrf.mxu0
      %v1196 = vadd.f32 0.0, %v1195
      %v1197 = vpop.f32.mrf.mxu0
      %v1198 = vadd.f32 0.0, %v1197
      %1199 = vmatmul.bf16.gmra.mxu0 %v1126
      %v1200 = vpop.f32.mrf.mxu0
      %v1201 = vadd.f32 0.0, %v1200
      %v1202 = vpop.f32.mrf.mxu0
      %v1203 = vadd.f32 0.0, %v1202
      %1204 = vmatmul.bf16.gmra.mxu0 %v1129
      %v1205 = vpop.f32.mrf.mxu0
      %v1206 = vadd.f32 0.0, %v1205
      %v1207 = vpop.f32.mrf.mxu0
      %v1208 = vadd.f32 0.0, %v1207
      %1209 = vmatmul.bf16.gmra.mxu0 %v1132
      %v1210 = vpop.f32.mrf.mxu0
      %v1211 = vadd.f32 0.0, %v1210
      %v1212 = vpop.f32.mrf.mxu0
      %v1213 = vadd.f32 0.0, %v1212
      %1214 = vmatmul.bf16.gmra.mxu0 %v1135
      %v1215 = vpop.f32.mrf.mxu0
      %v1216 = vadd.f32 0.0, %v1215
      %v1217 = vpop.f32.mrf.mxu0
      %v1218 = vadd.f32 0.0, %v1217
      %1219 = vmatmul.bf16.gmra.mxu0 %v1138
      %v1220 = vpop.f32.mrf.mxu0
      %v1221 = vadd.f32 0.0, %v1220
      %v1222 = vpop.f32.mrf.mxu0
      %v1223 = vadd.f32 0.0, %v1222
      %1224 = vmatmul.bf16.gmra.mxu0 %v1141
      %v1225 = vpop.f32.mrf.mxu0
      %v1226 = vadd.f32 0.0, %v1225
      %v1227 = vpop.f32.mrf.mxu0
      %v1228 = vadd.f32 0.0, %v1227
      %1229 = vmatmul.bf16.gmra.mxu0 %v1144
      %v1230 = vpop.f32.mrf.mxu0
      %v1231 = vadd.f32 0.0, %v1230
      %v1232 = vpop.f32.mrf.mxu0
      %v1233 = vadd.f32 0.0, %v1232
      %1234 = vmatmul.bf16.gmra.mxu0 %v1147
      %v1235 = vpop.f32.mrf.mxu0
      %v1236 = vadd.f32 0.0, %v1235
      %v1237 = vpop.f32.mrf.mxu0
      %v1238 = vadd.f32 0.0, %v1237
      %1239 = vmatmul.bf16.gmra.mxu0 %v1150
      %v1240 = vpop.f32.mrf.mxu0
      %v1241 = vadd.f32 0.0, %v1240
      %v1242 = vpop.f32.mrf.mxu0
      %v1243 = vadd.f32 0.0, %v1242
      %1244 = vdwg.mxu0
      %v1246 = vsel %vm334, %v1066, 0
      %v1249 = vsel %vm334, %v1067, 0
      %v1252 = vsel %vm334, %v1068, 0
      %v1255 = vsel %vm334, %v1069, 0
      %v1258 = vsel %vm334, %v1070, 0
      %v1261 = vsel %vm334, %v1071, 0
      %v1264 = vsel %vm334, %v1072, 0
      %v1267 = vsel %vm334, %v1073, 0
      %v1270 = vsel %vm334, %v1074, 0
      %v1273 = vsel %vm334, %v1075, 0
      %v1276 = vsel %vm334, %v1076, 0
      %v1279 = vsel %vm334, %v1077, 0
      %v1282 = vsel %vm334, %v1078, 0
      %v1285 = vsel %vm334, %v1079, 0
      %v1288 = vsel %vm334, %v1080, 0
      %v1291 = vsel %vm334, %v1081, 0
      %v1294 = vsel %vm1152, %v1082, 0
      %1296 = vmatpush.bf16.msra.mxu0 0
      %1297 = vmatpush.bf16.msra.mxu0 0
      %1298 = vmatpush.bf16.msra.mxu0 0
      %1299 = vmatpush.bf16.msra.mxu0 0
      %1300 = vmatpush.bf16.msra.mxu0 0
      %1301 = vmatpush.bf16.msra.mxu0 0
      %1302 = vmatpush.bf16.msra.mxu0 0
      %1303 = vmatpush.bf16.msra.mxu0 %v1294
      %1304 = vmatmul.bf16.gmra.mxu0 %v1246
      %v1305 = vpop.f32.mrf.mxu0
      %v1306 = vadd.f32 %v1166, %v1305
      %v1307 = vpop.f32.mrf.mxu0
      %v1308 = vadd.f32 %v1168, %v1307
      %1309 = vmatmul.bf16.gmra.mxu0 %v1249
      %v1310 = vpop.f32.mrf.mxu0
      %v1311 = vadd.f32 %v1171, %v1310
      %v1312 = vpop.f32.mrf.mxu0
      %v1313 = vadd.f32 %v1173, %v1312
      %1314 = vmatmul.bf16.gmra.mxu0 %v1252
      %v1315 = vpop.f32.mrf.mxu0
      %v1316 = vadd.f32 %v1176, %v1315
      %v1317 = vpop.f32.mrf.mxu0
      %v1318 = vadd.f32 %v1178, %v1317
      %1319 = vmatmul.bf16.gmra.mxu0 %v1255
      %v1320 = vpop.f32.mrf.mxu0
      %v1321 = vadd.f32 %v1181, %v1320
      %v1322 = vpop.f32.mrf.mxu0
      %v1323 = vadd.f32 %v1183, %v1322
      %1324 = vmatmul.bf16.gmra.mxu0 %v1258
      %v1325 = vpop.f32.mrf.mxu0
      %v1326 = vadd.f32 %v1186, %v1325
      %v1327 = vpop.f32.mrf.mxu0
      %v1328 = vadd.f32 %v1188, %v1327
      %1329 = vmatmul.bf16.gmra.mxu0 %v1261
      %v1330 = vpop.f32.mrf.mxu0
      %v1331 = vadd.f32 %v1191, %v1330
      %v1332 = vpop.f32.mrf.mxu0
      %v1333 = vadd.f32 %v1193, %v1332
      %1334 = vmatmul.bf16.gmra.mxu0 %v1264
      %v1335 = vpop.f32.mrf.mxu0
      %v1336 = vadd.f32 %v1196, %v1335
      %v1337 = vpop.f32.mrf.mxu0
      %v1338 = vadd.f32 %v1198, %v1337
      %1339 = vmatmul.bf16.gmra.mxu0 %v1267
      %v1340 = vpop.f32.mrf.mxu0
      %v1341 = vadd.f32 %v1201, %v1340
      %v1342 = vpop.f32.mrf.mxu0
      %v1343 = vadd.f32 %v1203, %v1342
      %1344 = vmatmul.bf16.gmra.mxu0 %v1270
      %v1345 = vpop.f32.mrf.mxu0
      %v1346 = vadd.f32 %v1206, %v1345
      %v1347 = vpop.f32.mrf.mxu0
      %v1348 = vadd.f32 %v1208, %v1347
      %1349 = vmatmul.bf16.gmra.mxu0 %v1273
      %v1350 = vpop.f32.mrf.mxu0
      %v1351 = vadd.f32 %v1211, %v1350
      %v1352 = vpop.f32.mrf.mxu0
      %v1353 = vadd.f32 %v1213, %v1352
      %1354 = vmatmul.bf16.gmra.mxu0 %v1276
      %v1355 = vpop.f32.mrf.mxu0
      %v1356 = vadd.f32 %v1216, %v1355
      %v1357 = vpop.f32.mrf.mxu0
      %v1358 = vadd.f32 %v1218, %v1357
      %1359 = vmatmul.bf16.gmra.mxu0 %v1279
      %v1360 = vpop.f32.mrf.mxu0
      %v1361 = vadd.f32 %v1221, %v1360
      %v1362 = vpop.f32.mrf.mxu0
      %v1363 = vadd.f32 %v1223, %v1362
      %1364 = vmatmul.bf16.gmra.mxu0 %v1282
      %v1365 = vpop.f32.mrf.mxu0
      %v1366 = vadd.f32 %v1226, %v1365
      %v1367 = vpop.f32.mrf.mxu0
      %v1368 = vadd.f32 %v1228, %v1367
      %1369 = vmatmul.bf16.gmra.mxu0 %v1285
      %v1370 = vpop.f32.mrf.mxu0
      %v1371 = vadd.f32 %v1231, %v1370
      %v1372 = vpop.f32.mrf.mxu0
      %v1373 = vadd.f32 %v1233, %v1372
      %1374 = vmatmul.bf16.gmra.mxu0 %v1288
      %v1375 = vpop.f32.mrf.mxu0
      %v1376 = vadd.f32 %v1236, %v1375
      %v1377 = vpop.f32.mrf.mxu0
      %v1378 = vadd.f32 %v1238, %v1377
      %1379 = vmatmul.bf16.gmra.mxu0 %v1291
      %v1380 = vpop.f32.mrf.mxu0
      %v1381 = vadd.f32 %v1241, %v1380
      %v1382 = vpop.f32.mrf.mxu0
      %v1383 = vadd.f32 %v1243, %v1382
      %1384 = vdwg.mxu0
      %s1385 = scalar_lea.vmem [#allocation2], 24
      %1386 = vst.msk [vmem:[%s1385 + $0x1] sm:$0xff] %vm334, %v1034
      %1387 = vst.msk [vmem:[%s1385 + $0x9] sm:$0xff] %vm334, %v1035
      %1388 = vst.msk [vmem:[%s1385 + $0x19] sm:$0xff] %vm334, %v1036
      %1389 = vst.msk [vmem:[%s1385 + $0x21] sm:$0xff] %vm334, %v1037
      %1390 = vst.msk [vmem:[%s1385 + $0x31] sm:$0xff] %vm334, %v1038
      %1391 = vst.msk [vmem:[%s1385 + $0x39] sm:$0xff] %vm334, %v1039
      %1392 = vst.msk [vmem:[%s1385 + $0x49] sm:$0xff] %vm334, %v1040
      %1393 = vst.msk [vmem:[%s1385 + $0x51] sm:$0xff] %vm334, %v1041
      %1394 = vst.msk [vmem:[%s1385 + $0x61] sm:$0xff] %vm334, %v1042
      %1395 = vst.msk [vmem:[%s1385 + $0x69] sm:$0xff] %vm334, %v1043
      %1396 = vst.msk [vmem:[%s1385 + $0x79] sm:$0xff] %vm334, %v1044
      %1397 = vst.msk [vmem:[%s1385 + $0x81] sm:$0xff] %vm334, %v1045
      %1398 = vst.msk [vmem:[%s1385 + $0x91] sm:$0xff] %vm334, %v1046
      %1399 = vst.msk [vmem:[%s1385 + $0x99] sm:$0xff] %vm334, %v1047
      %1400 = vst.msk [vmem:[%s1385 + $0xa9] sm:$0xff] %vm334, %v1048
      %1401 = vst.msk [vmem:[%s1385 + $0xb1] sm:$0xff] %vm334, %v1049
      %1402 = vst.msk [vmem:[%s1385 + $0xc1] sm:$0xff] %vm334, %v1050
      %1403 = vst.msk [vmem:[%s1385 + $0xc9] sm:$0xff] %vm334, %v1051
      %1404 = vst.msk [vmem:[%s1385 + $0xd9] sm:$0xff] %vm334, %v1052
      %1405 = vst.msk [vmem:[%s1385 + $0xe1] sm:$0xff] %vm334, %v1053
      %1406 = vst.msk [vmem:[%s1385 + $0xf1] sm:$0xff] %vm334, %v1054
      %1407 = vst.msk [vmem:[%s1385 + $0xf9] sm:$0xff] %vm334, %v1055
      %1408 = vst.msk [vmem:[%s1385 + $0x109] sm:$0xff] %vm334, %v1056
      %1409 = vst.msk [vmem:[%s1385 + $0x111] sm:$0xff] %vm334, %v1057
      %1410 = vst.msk [vmem:[%s1385 + $0x121] sm:$0xff] %vm334, %v1058
      %1411 = vst.msk [vmem:[%s1385 + $0x129] sm:$0xff] %vm334, %v1059
      %1412 = vst.msk [vmem:[%s1385 + $0x139] sm:$0xff] %vm334, %v1060
      %1413 = vst.msk [vmem:[%s1385 + $0x141] sm:$0xff] %vm334, %v1061
      %1414 = vst.msk [vmem:[%s1385 + $0x151] sm:$0xff] %vm334, %v1062
      %1415 = vst.msk [vmem:[%s1385 + $0x159] sm:$0xff] %vm334, %v1063
      %1416 = vst.msk [vmem:[%s1385 + $0x169] sm:$0xff] %vm334, %v1064
      %1417 = vst.msk [vmem:[%s1385 + $0x171] sm:$0xff] %vm334, %v1065
      %v1418 = vld [vmem:[#allocation2] sm:$0xff]
      %v1419 = vld [vmem:[#allocation2 + $0x8] sm:$0xff]
      %v1420 = vld [vmem:[#allocation2 + $0x18] sm:$0xff]
      %v1421 = vld [vmem:[#allocation2 + $0x20] sm:$0xff]
      %v1422 = vld [vmem:[#allocation2 + $0x30] sm:$0xff]
      %v1423 = vld [vmem:[#allocation2 + $0x38] sm:$0xff]
      %v1424 = vld [vmem:[#allocation2 + $0x48] sm:$0xff]
      %v1425 = vld [vmem:[#allocation2 + $0x50] sm:$0xff]
      %v1426 = vld [vmem:[#allocation2 + $0x60] sm:$0xff]
      %v1427 = vld [vmem:[#allocation2 + $0x68] sm:$0xff]
      %v1428 = vld [vmem:[#allocation2 + $0x78] sm:$0xff]
      %v1429 = vld [vmem:[#allocation2 + $0x80] sm:$0xff]
      %v1430 = vld [vmem:[#allocation2 + $0x90] sm:$0xff]
      %v1431 = vld [vmem:[#allocation2 + $0x98] sm:$0xff]
      %v1432 = vld [vmem:[#allocation2 + $0xa8] sm:$0xff]
      %v1433 = vld [vmem:[#allocation2 + $0xb0] sm:$0xff]
      %v1434 = vld [vmem:[#allocation2 + $0xc0] sm:$0xff]
      %v1435 = vld [vmem:[#allocation2 + $0xc8] sm:$0xff]
      %v1436 = vld [vmem:[#allocation2 + $0xd8] sm:$0xff]
      %v1437 = vld [vmem:[#allocation2 + $0xe0] sm:$0xff]
      %v1438 = vld [vmem:[#allocation2 + $0xf0] sm:$0xff]
      %v1439 = vld [vmem:[#allocation2 + $0xf8] sm:$0xff]
      %v1440 = vld [vmem:[#allocation2 + $0x108] sm:$0xff]
      %v1441 = vld [vmem:[#allocation2 + $0x110] sm:$0xff]
      %v1442 = vld [vmem:[#allocation2 + $0x120] sm:$0xff]
      %v1443 = vld [vmem:[#allocation2 + $0x128] sm:$0xff]
      %v1444 = vld [vmem:[#allocation2 + $0x138] sm:$0xff]
      %v1445 = vld [vmem:[#allocation2 + $0x140] sm:$0xff]
      %v1446 = vld [vmem:[#allocation2 + $0x150] sm:$0xff]
      %v1447 = vld [vmem:[#allocation2 + $0x158] sm:$0xff]
      %v1448 = vld [vmem:[#allocation2 + $0x168] sm:$0xff]
      %v1449 = vld [vmem:[#allocation2 + $0x170] sm:$0xff]
      %v1450 = vpack.c.bf16 %v1419, %v1418
      %v1451 = vpack.c.bf16 %v1421, %v1420
      %v1452 = vpack.c.bf16 %v1423, %v1422
      %v1453 = vpack.c.bf16 %v1425, %v1424
      %v1454 = vpack.c.bf16 %v1427, %v1426
      %v1455 = vpack.c.bf16 %v1429, %v1428
      %v1456 = vpack.c.bf16 %v1431, %v1430
      %v1457 = vpack.c.bf16 %v1433, %v1432
      %v1458 = vpack.c.bf16 %v1435, %v1434
      %v1459 = vpack.c.bf16 %v1437, %v1436
      %v1460 = vpack.c.bf16 %v1439, %v1438
      %v1461 = vpack.c.bf16 %v1441, %v1440
      %v1462 = vpack.c.bf16 %v1443, %v1442
      %v1463 = vpack.c.bf16 %v1445, %v1444
      %v1464 = vpack.c.bf16 %v1447, %v1446
      %v1465 = vpack.c.bf16 %v1449, %v1448
      %v1466 = vld [vmem:[%s5] sm:$0x1]
      %v1467 = vld [vmem:[#allocation2 + $0x1] sm:$0xff]
      %v1468 = vld [vmem:[#allocation2 + $0x9] sm:$0xff]
      %v1469 = vld [vmem:[#allocation2 + $0x19] sm:$0xff]
      %v1470 = vld [vmem:[#allocation2 + $0x21] sm:$0xff]
      %v1471 = vld [vmem:[#allocation2 + $0x31] sm:$0xff]
      %v1472 = vld [vmem:[#allocation2 + $0x39] sm:$0xff]
      %v1473 = vld [vmem:[#allocation2 + $0x49] sm:$0xff]
      %v1474 = vld [vmem:[#allocation2 + $0x51] sm:$0xff]
      %v1475 = vld [vmem:[#allocation2 + $0x61] sm:$0xff]
      %v1476 = vld [vmem:[#allocation2 + $0x69] sm:$0xff]
      %v1477 = vld [vmem:[#allocation2 + $0x79] sm:$0xff]
      %v1478 = vld [vmem:[#allocation2 + $0x81] sm:$0xff]
      %v1479 = vld [vmem:[#allocation2 + $0x91] sm:$0xff]
      %v1480 = vld [vmem:[#allocation2 + $0x99] sm:$0xff]
      %v1481 = vld [vmem:[#allocation2 + $0xa9] sm:$0xff]
      %v1482 = vld [vmem:[#allocation2 + $0xb1] sm:$0xff]
      %v1483 = vld [vmem:[#allocation2 + $0xc1] sm:$0xff]
      %v1484 = vld [vmem:[#allocation2 + $0xc9] sm:$0xff]
      %v1485 = vld [vmem:[#allocation2 + $0xd9] sm:$0xff]
      %v1486 = vld [vmem:[#allocation2 + $0xe1] sm:$0xff]
      %v1487 = vld [vmem:[#allocation2 + $0xf1] sm:$0xff]
      %v1488 = vld [vmem:[#allocation2 + $0xf9] sm:$0xff]
      %v1489 = vld [vmem:[#allocation2 + $0x109] sm:$0xff]
      %v1490 = vld [vmem:[#allocation2 + $0x111] sm:$0xff]
      %v1491 = vld [vmem:[#allocation2 + $0x121] sm:$0xff]
      %v1492 = vld [vmem:[#allocation2 + $0x129] sm:$0xff]
      %v1493 = vld [vmem:[#allocation2 + $0x139] sm:$0xff]
      %v1494 = vld [vmem:[#allocation2 + $0x141] sm:$0xff]
      %v1495 = vld [vmem:[#allocation2 + $0x151] sm:$0xff]
      %v1496 = vld [vmem:[#allocation2 + $0x159] sm:$0xff]
      %v1497 = vld [vmem:[#allocation2 + $0x169] sm:$0xff]
      %v1498 = vld [vmem:[#allocation2 + $0x171] sm:$0xff]
      %v1499 = vpack.c.bf16 %v1468, %v1467
      %v1500 = vpack.c.bf16 %v1470, %v1469
      %v1501 = vpack.c.bf16 %v1472, %v1471
      %v1502 = vpack.c.bf16 %v1474, %v1473
      %v1503 = vpack.c.bf16 %v1476, %v1475
      %v1504 = vpack.c.bf16 %v1478, %v1477
      %v1505 = vpack.c.bf16 %v1480, %v1479
      %v1506 = vpack.c.bf16 %v1482, %v1481
      %v1507 = vpack.c.bf16 %v1484, %v1483
      %v1508 = vpack.c.bf16 %v1486, %v1485
      %v1509 = vpack.c.bf16 %v1488, %v1487
      %v1510 = vpack.c.bf16 %v1490, %v1489
      %v1511 = vpack.c.bf16 %v1492, %v1491
      %v1512 = vpack.c.bf16 %v1494, %v1493
      %v1513 = vpack.c.bf16 %v1496, %v1495
      %v1514 = vpack.c.bf16 %v1498, %v1497
      %v1515 = vld [vmem:[%s5] sm:$0x2]
      %v1517 = vunpack.c.l.b16 %v1515
      %v1518 = vpack.c.b16 %v1517, %v1517
      %v1519 = vrot.slane %v1518, 1
      %v1521 = vsel %vm334, %v1499, 0
      %v1524 = vsel %vm334, %v1500, 0
      %v1527 = vsel %vm334, %v1501, 0
      %v1530 = vsel %vm334, %v1502, 0
      %v1533 = vsel %vm334, %v1503, 0
      %v1536 = vsel %vm334, %v1504, 0
      %v1539 = vsel %vm334, %v1505, 0
      %v1542 = vsel %vm334, %v1506, 0
      %v1545 = vsel %vm334, %v1507, 0
      %v1548 = vsel %vm334, %v1508, 0
      %v1551 = vsel %vm334, %v1509, 0
      %v1554 = vsel %vm334, %v1510, 0
      %v1557 = vsel %vm334, %v1511, 0
      %v1560 = vsel %vm334, %v1512, 0
      %v1563 = vsel %vm334, %v1513, 0
      %v1566 = vsel %vm334, %v1514, 0
      %v1569 = vsel %vm1152, %v1519, 0
      %1571 = vmatpush.bf16.msra.mxu0 0
      %1572 = vmatpush.bf16.msra.mxu0 0
      %1573 = vmatpush.bf16.msra.mxu0 0
      %1574 = vmatpush.bf16.msra.mxu0 0
      %1575 = vmatpush.bf16.msra.mxu0 0
      %1576 = vmatpush.bf16.msra.mxu0 0
      %1577 = vmatpush.bf16.msra.mxu0 0
      %1578 = vmatpush.bf16.msra.mxu0 %v1569
      %1579 = vmatmul.bf16.gmra.mxu0 %v1521
      %v1580 = vpop.f32.mrf.mxu0
      %v1581 = vadd.f32 0.0, %v1580
      %v1582 = vpop.f32.mrf.mxu0
      %v1583 = vadd.f32 0.0, %v1582
      %1584 = vmatmul.bf16.gmra.mxu0 %v1524
      %v1585 = vpop.f32.mrf.mxu0
      %v1586 = vadd.f32 0.0, %v1585
      %v1587 = vpop.f32.mrf.mxu0
      %v1588 = vadd.f32 0.0, %v1587
      %1589 = vmatmul.bf16.gmra.mxu0 %v1527
      %v1590 = vpop.f32.mrf.mxu0
      %v1591 = vadd.f32 0.0, %v1590
      %v1592 = vpop.f32.mrf.mxu0
      %v1593 = vadd.f32 0.0, %v1592
      %1594 = vmatmul.bf16.gmra.mxu0 %v1530
      %v1595 = vpop.f32.mrf.mxu0
      %v1596 = vadd.f32 0.0, %v1595
      %v1597 = vpop.f32.mrf.mxu0
      %v1598 = vadd.f32 0.0, %v1597
      %1599 = vmatmul.bf16.gmra.mxu0 %v1533
      %v1600 = vpop.f32.mrf.mxu0
      %v1601 = vadd.f32 0.0, %v1600
      %v1602 = vpop.f32.mrf.mxu0
      %v1603 = vadd.f32 0.0, %v1602
      %1604 = vmatmul.bf16.gmra.mxu0 %v1536
      %v1605 = vpop.f32.mrf.mxu0
      %v1606 = vadd.f32 0.0, %v1605
      %v1607 = vpop.f32.mrf.mxu0
      %v1608 = vadd.f32 0.0, %v1607
      %1609 = vmatmul.bf16.gmra.mxu0 %v1539
      %v1610 = vpop.f32.mrf.mxu0
      %v1611 = vadd.f32 0.0, %v1610
      %v1612 = vpop.f32.mrf.mxu0
      %v1613 = vadd.f32 0.0, %v1612
      %1614 = vmatmul.bf16.gmra.mxu0 %v1542
      %v1615 = vpop.f32.mrf.mxu0
      %v1616 = vadd.f32 0.0, %v1615
      %v1617 = vpop.f32.mrf.mxu0
      %v1618 = vadd.f32 0.0, %v1617
      %1619 = vmatmul.bf16.gmra.mxu0 %v1545
      %v1620 = vpop.f32.mrf.mxu0
      %v1621 = vadd.f32 0.0, %v1620
      %v1622 = vpop.f32.mrf.mxu0
      %v1623 = vadd.f32 0.0, %v1622
      %1624 = vmatmul.bf16.gmra.mxu0 %v1548
      %v1625 = vpop.f32.mrf.mxu0
      %v1626 = vadd.f32 0.0, %v1625
      %v1627 = vpop.f32.mrf.mxu0
      %v1628 = vadd.f32 0.0, %v1627
      %1629 = vmatmul.bf16.gmra.mxu0 %v1551
      %v1630 = vpop.f32.mrf.mxu0
      %v1631 = vadd.f32 0.0, %v1630
      %v1632 = vpop.f32.mrf.mxu0
      %v1633 = vadd.f32 0.0, %v1632
      %1634 = vmatmul.bf16.gmra.mxu0 %v1554
      %v1635 = vpop.f32.mrf.mxu0
      %v1636 = vadd.f32 0.0, %v1635
      %v1637 = vpop.f32.mrf.mxu0
      %v1638 = vadd.f32 0.0, %v1637
      %1639 = vmatmul.bf16.gmra.mxu0 %v1557
      %v1640 = vpop.f32.mrf.mxu0
      %v1641 = vadd.f32 0.0, %v1640
      %v1642 = vpop.f32.mrf.mxu0
      %v1643 = vadd.f32 0.0, %v1642
      %1644 = vmatmul.bf16.gmra.mxu0 %v1560
      %v1645 = vpop.f32.mrf.mxu0
      %v1646 = vadd.f32 0.0, %v1645
      %v1647 = vpop.f32.mrf.mxu0
      %v1648 = vadd.f32 0.0, %v1647
      %1649 = vmatmul.bf16.gmra.mxu0 %v1563
      %v1650 = vpop.f32.mrf.mxu0
      %v1651 = vadd.f32 0.0, %v1650
      %v1652 = vpop.f32.mrf.mxu0
      %v1653 = vadd.f32 0.0, %v1652
      %1654 = vmatmul.bf16.gmra.mxu0 %v1566
      %v1655 = vpop.f32.mrf.mxu0
      %v1656 = vadd.f32 0.0, %v1655
      %v1657 = vpop.f32.mrf.mxu0
      %v1658 = vadd.f32 0.0, %v1657
      %1659 = vdwg.mxu0
      %v1661 = vsel %vm334, %v1450, 0
      %v1664 = vsel %vm334, %v1451, 0
      %v1667 = vsel %vm334, %v1452, 0
      %v1670 = vsel %vm334, %v1453, 0
      %v1673 = vsel %vm334, %v1454, 0
      %v1676 = vsel %vm334, %v1455, 0
      %v1679 = vsel %vm334, %v1456, 0
      %v1682 = vsel %vm334, %v1457, 0
      %v1685 = vsel %vm334, %v1458, 0
      %v1688 = vsel %vm334, %v1459, 0
      %v1691 = vsel %vm334, %v1460, 0
      %v1694 = vsel %vm334, %v1461, 0
      %v1697 = vsel %vm334, %v1462, 0
      %v1700 = vsel %vm334, %v1463, 0
      %v1703 = vsel %vm334, %v1464, 0
      %v1706 = vsel %vm334, %v1465, 0
      %v1709 = vsel %vm1152, %v1466, 0
      %1711 = vmatpush.bf16.msra.mxu0 0
      %1712 = vmatpush.bf16.msra.mxu0 0
      %1713 = vmatpush.bf16.msra.mxu0 0
      %1714 = vmatpush.bf16.msra.mxu0 0
      %1715 = vmatpush.bf16.msra.mxu0 0
      %1716 = vmatpush.bf16.msra.mxu0 0
      %1717 = vmatpush.bf16.msra.mxu0 0
      %1718 = vmatpush.bf16.msra.mxu0 %v1709
      %1719 = vmatmul.bf16.gmra.mxu0 %v1661
      %v1720 = vpop.f32.mrf.mxu0
      %v1721 = vadd.f32 %v1581, %v1720
      %v1722 = vpop.f32.mrf.mxu0
      %v1723 = vadd.f32 %v1583, %v1722
      %1724 = vmatmul.bf16.gmra.mxu0 %v1664
      %v1725 = vpop.f32.mrf.mxu0
      %v1726 = vadd.f32 %v1586, %v1725
      %v1727 = vpop.f32.mrf.mxu0
      %v1728 = vadd.f32 %v1588, %v1727
      %1729 = vmatmul.bf16.gmra.mxu0 %v1667
      %v1730 = vpop.f32.mrf.mxu0
      %v1731 = vadd.f32 %v1591, %v1730
      %v1732 = vpop.f32.mrf.mxu0
      %v1733 = vadd.f32 %v1593, %v1732
      %1734 = vmatmul.bf16.gmra.mxu0 %v1670
      %v1735 = vpop.f32.mrf.mxu0
      %v1736 = vadd.f32 %v1596, %v1735
      %v1737 = vpop.f32.mrf.mxu0
      %v1738 = vadd.f32 %v1598, %v1737
      %1739 = vmatmul.bf16.gmra.mxu0 %v1673
      %v1740 = vpop.f32.mrf.mxu0
      %v1741 = vadd.f32 %v1601, %v1740
      %v1742 = vpop.f32.mrf.mxu0
      %v1743 = vadd.f32 %v1603, %v1742
      %1744 = vmatmul.bf16.gmra.mxu0 %v1676
      %v1745 = vpop.f32.mrf.mxu0
      %v1746 = vadd.f32 %v1606, %v1745
      %v1747 = vpop.f32.mrf.mxu0
      %v1748 = vadd.f32 %v1608, %v1747
      %1749 = vmatmul.bf16.gmra.mxu0 %v1679
      %v1750 = vpop.f32.mrf.mxu0
      %v1751 = vadd.f32 %v1611, %v1750
      %v1752 = vpop.f32.mrf.mxu0
      %v1753 = vadd.f32 %v1613, %v1752
      %1754 = vmatmul.bf16.gmra.mxu0 %v1682
      %v1755 = vpop.f32.mrf.mxu0
      %v1756 = vadd.f32 %v1616, %v1755
      %v1757 = vpop.f32.mrf.mxu0
      %v1758 = vadd.f32 %v1618, %v1757
      %1759 = vmatmul.bf16.gmra.mxu0 %v1685
      %v1760 = vpop.f32.mrf.mxu0
      %v1761 = vadd.f32 %v1621, %v1760
      %v1762 = vpop.f32.mrf.mxu0
      %v1763 = vadd.f32 %v1623, %v1762
      %1764 = vmatmul.bf16.gmra.mxu0 %v1688
      %v1765 = vpop.f32.mrf.mxu0
      %v1766 = vadd.f32 %v1626, %v1765
      %v1767 = vpop.f32.mrf.mxu0
      %v1768 = vadd.f32 %v1628, %v1767
      %1769 = vmatmul.bf16.gmra.mxu0 %v1691
      %v1770 = vpop.f32.mrf.mxu0
      %v1771 = vadd.f32 %v1631, %v1770
      %v1772 = vpop.f32.mrf.mxu0
      %v1773 = vadd.f32 %v1633, %v1772
      %1774 = vmatmul.bf16.gmra.mxu0 %v1694
      %v1775 = vpop.f32.mrf.mxu0
      %v1776 = vadd.f32 %v1636, %v1775
      %v1777 = vpop.f32.mrf.mxu0
      %v1778 = vadd.f32 %v1638, %v1777
      %1779 = vmatmul.bf16.gmra.mxu0 %v1697
      %v1780 = vpop.f32.mrf.mxu0
      %v1781 = vadd.f32 %v1641, %v1780
      %v1782 = vpop.f32.mrf.mxu0
      %v1783 = vadd.f32 %v1643, %v1782
      %1784 = vmatmul.bf16.gmra.mxu0 %v1700
      %v1785 = vpop.f32.mrf.mxu0
      %v1786 = vadd.f32 %v1646, %v1785
      %v1787 = vpop.f32.mrf.mxu0
      %v1788 = vadd.f32 %v1648, %v1787
      %1789 = vmatmul.bf16.gmra.mxu0 %v1703
      %v1790 = vpop.f32.mrf.mxu0
      %v1791 = vadd.f32 %v1651, %v1790
      %v1792 = vpop.f32.mrf.mxu0
      %v1793 = vadd.f32 %v1653, %v1792
      %1794 = vmatmul.bf16.gmra.mxu0 %v1706
      %v1795 = vpop.f32.mrf.mxu0
      %v1796 = vadd.f32 %v1656, %v1795
      %v1797 = vpop.f32.mrf.mxu0
      %v1798 = vadd.f32 %v1658, %v1797
      %1799 = vdwg.mxu0
      %v1800 = vld [vmem:[#allocation2 + $0x2] sm:$0xff]
      %v1801 = vld [vmem:[#allocation2 + $0xa] sm:$0xff]
      %v1802 = vld [vmem:[#allocation2 + $0x1a] sm:$0xff]
      %v1803 = vld [vmem:[#allocation2 + $0x22] sm:$0xff]
      %v1804 = vld [vmem:[#allocation2 + $0x32] sm:$0xff]
      %v1805 = vld [vmem:[#allocation2 + $0x3a] sm:$0xff]
      %v1806 = vld [vmem:[#allocation2 + $0x4a] sm:$0xff]
      %v1807 = vld [vmem:[#allocation2 + $0x52] sm:$0xff]
      %v1808 = vld [vmem:[#allocation2 + $0x62] sm:$0xff]
      %v1809 = vld [vmem:[#allocation2 + $0x6a] sm:$0xff]
      %v1810 = vld [vmem:[#allocation2 + $0x7a] sm:$0xff]
      %v1811 = vld [vmem:[#allocation2 + $0x82] sm:$0xff]
      %v1812 = vld [vmem:[#allocation2 + $0x92] sm:$0xff]
      %v1813 = vld [vmem:[#allocation2 + $0x9a] sm:$0xff]
      %v1814 = vld [vmem:[#allocation2 + $0xaa] sm:$0xff]
      %v1815 = vld [vmem:[#allocation2 + $0xb2] sm:$0xff]
      %v1816 = vld [vmem:[#allocation2 + $0xc2] sm:$0xff]
      %v1817 = vld [vmem:[#allocation2 + $0xca] sm:$0xff]
      %v1818 = vld [vmem:[#allocation2 + $0xda] sm:$0xff]
      %v1819 = vld [vmem:[#allocation2 + $0xe2] sm:$0xff]
      %v1820 = vld [vmem:[#allocation2 + $0xf2] sm:$0xff]
      %v1821 = vld [vmem:[#allocation2 + $0xfa] sm:$0xff]
      %v1822 = vld [vmem:[#allocation2 + $0x10a] sm:$0xff]
      %v1823 = vld [vmem:[#allocation2 + $0x112] sm:$0xff]
      %v1824 = vld [vmem:[#allocation2 + $0x122] sm:$0xff]
      %v1825 = vld [vmem:[#allocation2 + $0x12a] sm:$0xff]
      %v1826 = vld [vmem:[#allocation2 + $0x13a] sm:$0xff]
      %v1827 = vld [vmem:[#allocation2 + $0x142] sm:$0xff]
      %v1828 = vld [vmem:[#allocation2 + $0x152] sm:$0xff]
      %v1829 = vld [vmem:[#allocation2 + $0x15a] sm:$0xff]
      %v1830 = vld [vmem:[#allocation2 + $0x16a] sm:$0xff]
      %v1831 = vld [vmem:[#allocation2 + $0x172] sm:$0xff]
      %v1832 = vpack.c.bf16 %v1801, %v1800
      %v1833 = vpack.c.bf16 %v1803, %v1802
      %v1834 = vpack.c.bf16 %v1805, %v1804
      %v1835 = vpack.c.bf16 %v1807, %v1806
      %v1836 = vpack.c.bf16 %v1809, %v1808
      %v1837 = vpack.c.bf16 %v1811, %v1810
      %v1838 = vpack.c.bf16 %v1813, %v1812
      %v1839 = vpack.c.bf16 %v1815, %v1814
      %v1840 = vpack.c.bf16 %v1817, %v1816
      %v1841 = vpack.c.bf16 %v1819, %v1818
      %v1842 = vpack.c.bf16 %v1821, %v1820
      %v1843 = vpack.c.bf16 %v1823, %v1822
      %v1844 = vpack.c.bf16 %v1825, %v1824
      %v1845 = vpack.c.bf16 %v1827, %v1826
      %v1846 = vpack.c.bf16 %v1829, %v1828
      %v1847 = vpack.c.bf16 %v1831, %v1830
      %v1848 = vld [vmem:[%s5] sm:$0x4]
      %v1850 = vunpack.c.l.b16 %v1848
      %v1851 = vpack.c.b16 %v1850, %v1850
      %v1852 = vrot.slane %v1851, 2
      %v1854 = vsel %vm334, %v1832, 0
      %v1857 = vsel %vm334, %v1833, 0
      %v1860 = vsel %vm334, %v1834, 0
      %v1863 = vsel %vm334, %v1835, 0
      %v1866 = vsel %vm334, %v1836, 0
      %v1869 = vsel %vm334, %v1837, 0
      %v1872 = vsel %vm334, %v1838, 0
      %v1875 = vsel %vm334, %v1839, 0
      %v1878 = vsel %vm334, %v1840, 0
      %v1881 = vsel %vm334, %v1841, 0
      %v1884 = vsel %vm334, %v1842, 0
      %v1887 = vsel %vm334, %v1843, 0
      %v1890 = vsel %vm334, %v1844, 0
      %v1893 = vsel %vm334, %v1845, 0
      %v1896 = vsel %vm334, %v1846, 0
      %v1899 = vsel %vm334, %v1847, 0
      %v1902 = vsel %vm1152, %v1852, 0
      %1904 = vmatpush.bf16.msra.mxu0 0
      %1905 = vmatpush.bf16.msra.mxu0 0
      %1906 = vmatpush.bf16.msra.mxu0 0
      %1907 = vmatpush.bf16.msra.mxu0 0
      %1908 = vmatpush.bf16.msra.mxu0 0
      %1909 = vmatpush.bf16.msra.mxu0 0
      %1910 = vmatpush.bf16.msra.mxu0 0
      %1911 = vmatpush.bf16.msra.mxu0 %v1902
      %1912 = vmatmul.bf16.gmra.mxu0 %v1854
      %v1913 = vpop.f32.mrf.mxu0
      %v1914 = vadd.f32 0.0, %v1913
      %v1915 = vpop.f32.mrf.mxu0
      %v1916 = vadd.f32 0.0, %v1915
      %1917 = vmatmul.bf16.gmra.mxu0 %v1857
      %v1918 = vpop.f32.mrf.mxu0
      %v1919 = vadd.f32 0.0, %v1918
      %v1920 = vpop.f32.mrf.mxu0
      %v1921 = vadd.f32 0.0, %v1920
      %1922 = vmatmul.bf16.gmra.mxu0 %v1860
      %v1923 = vpop.f32.mrf.mxu0
      %v1924 = vadd.f32 0.0, %v1923
      %v1925 = vpop.f32.mrf.mxu0
      %v1926 = vadd.f32 0.0, %v1925
      %1927 = vmatmul.bf16.gmra.mxu0 %v1863
      %v1928 = vpop.f32.mrf.mxu0
      %v1929 = vadd.f32 0.0, %v1928
      %v1930 = vpop.f32.mrf.mxu0
      %v1931 = vadd.f32 0.0, %v1930
      %1932 = vmatmul.bf16.gmra.mxu0 %v1866
      %v1933 = vpop.f32.mrf.mxu0
      %v1934 = vadd.f32 0.0, %v1933
      %v1935 = vpop.f32.mrf.mxu0
      %v1936 = vadd.f32 0.0, %v1935
      %1937 = vmatmul.bf16.gmra.mxu0 %v1869
      %v1938 = vpop.f32.mrf.mxu0
      %v1939 = vadd.f32 0.0, %v1938
      %v1940 = vpop.f32.mrf.mxu0
      %v1941 = vadd.f32 0.0, %v1940
      %1942 = vmatmul.bf16.gmra.mxu0 %v1872
      %v1943 = vpop.f32.mrf.mxu0
      %v1944 = vadd.f32 0.0, %v1943
      %v1945 = vpop.f32.mrf.mxu0
      %v1946 = vadd.f32 0.0, %v1945
      %1947 = vmatmul.bf16.gmra.mxu0 %v1875
      %v1948 = vpop.f32.mrf.mxu0
      %v1949 = vadd.f32 0.0, %v1948
      %v1950 = vpop.f32.mrf.mxu0
      %v1951 = vadd.f32 0.0, %v1950
      %1952 = vmatmul.bf16.gmra.mxu0 %v1878
      %v1953 = vpop.f32.mrf.mxu0
      %v1954 = vadd.f32 0.0, %v1953
      %v1955 = vpop.f32.mrf.mxu0
      %v1956 = vadd.f32 0.0, %v1955
      %1957 = vmatmul.bf16.gmra.mxu0 %v1881
      %v1958 = vpop.f32.mrf.mxu0
      %v1959 = vadd.f32 0.0, %v1958
      %v1960 = vpop.f32.mrf.mxu0
      %v1961 = vadd.f32 0.0, %v1960
      %1962 = vmatmul.bf16.gmra.mxu0 %v1884
      %v1963 = vpop.f32.mrf.mxu0
      %v1964 = vadd.f32 0.0, %v1963
      %v1965 = vpop.f32.mrf.mxu0
      %v1966 = vadd.f32 0.0, %v1965
      %1967 = vmatmul.bf16.gmra.mxu0 %v1887
      %v1968 = vpop.f32.mrf.mxu0
      %v1969 = vadd.f32 0.0, %v1968
      %v1970 = vpop.f32.mrf.mxu0
      %v1971 = vadd.f32 0.0, %v1970
      %1972 = vmatmul.bf16.gmra.mxu0 %v1890
      %v1973 = vpop.f32.mrf.mxu0
      %v1974 = vadd.f32 0.0, %v1973
      %v1975 = vpop.f32.mrf.mxu0
      %v1976 = vadd.f32 0.0, %v1975
      %1977 = vmatmul.bf16.gmra.mxu0 %v1893
      %v1978 = vpop.f32.mrf.mxu0
      %v1979 = vadd.f32 0.0, %v1978
      %v1980 = vpop.f32.mrf.mxu0
      %v1981 = vadd.f32 0.0, %v1980
      %1982 = vmatmul.bf16.gmra.mxu0 %v1896
      %v1983 = vpop.f32.mrf.mxu0
      %v1984 = vadd.f32 0.0, %v1983
      %v1985 = vpop.f32.mrf.mxu0
      %v1986 = vadd.f32 0.0, %v1985
      %1987 = vmatmul.bf16.gmra.mxu0 %v1899
      %v1988 = vpop.f32.mrf.mxu0
      %v1989 = vadd.f32 0.0, %v1988
      %v1990 = vpop.f32.mrf.mxu0
      %v1991 = vadd.f32 0.0, %v1990
      %1992 = vdwg.mxu0
      %v1993 = vadd.f32 %v1721, %v1914
      %v1994 = vadd.f32 %v1723, %v1916
      %v1995 = vadd.f32 %v1726, %v1919
      %v1996 = vadd.f32 %v1728, %v1921
      %v1997 = vadd.f32 %v1731, %v1924
      %v1998 = vadd.f32 %v1733, %v1926
      %v1999 = vadd.f32 %v1736, %v1929
      %v2000 = vadd.f32 %v1738, %v1931
      %v2001 = vadd.f32 %v1741, %v1934
      %v2002 = vadd.f32 %v1743, %v1936
      %v2003 = vadd.f32 %v1746, %v1939
      %v2004 = vadd.f32 %v1748, %v1941
      %v2005 = vadd.f32 %v1751, %v1944
      %v2006 = vadd.f32 %v1753, %v1946
      %v2007 = vadd.f32 %v1756, %v1949
      %v2008 = vadd.f32 %v1758, %v1951
      %v2009 = vadd.f32 %v1761, %v1954
      %v2010 = vadd.f32 %v1763, %v1956
      %v2011 = vadd.f32 %v1766, %v1959
      %v2012 = vadd.f32 %v1768, %v1961
      %v2013 = vadd.f32 %v1771, %v1964
      %v2014 = vadd.f32 %v1773, %v1966
      %v2015 = vadd.f32 %v1776, %v1969
      %v2016 = vadd.f32 %v1778, %v1971
      %v2017 = vadd.f32 %v1781, %v1974
      %v2018 = vadd.f32 %v1783, %v1976
      %v2019 = vadd.f32 %v1786, %v1979
      %v2020 = vadd.f32 %v1788, %v1981
      %v2021 = vadd.f32 %v1791, %v1984
      %v2022 = vadd.f32 %v1793, %v1986
      %v2023 = vadd.f32 %v1796, %v1989
      %v2024 = vadd.f32 %v1798, %v1991
      %v2025 = vld [vmem:[%s1385] sm:$0xff]
      %v2026 = vld [vmem:[%s1385 + $0x8] sm:$0xff]
      %v2027 = vld [vmem:[%s1385 + $0x18] sm:$0xff]
      %v2028 = vld [vmem:[%s1385 + $0x20] sm:$0xff]
      %v2029 = vld [vmem:[%s1385 + $0x30] sm:$0xff]
      %v2030 = vld [vmem:[%s1385 + $0x38] sm:$0xff]
      %v2031 = vld [vmem:[%s1385 + $0x48] sm:$0xff]
      %v2032 = vld [vmem:[%s1385 + $0x50] sm:$0xff]
      %v2033 = vld [vmem:[%s1385 + $0x60] sm:$0xff]
      %v2034 = vld [vmem:[%s1385 + $0x68] sm:$0xff]
      %v2035 = vld [vmem:[%s1385 + $0x78] sm:$0xff]
      %v2036 = vld [vmem:[%s1385 + $0x80] sm:$0xff]
      %v2037 = vld [vmem:[%s1385 + $0x90] sm:$0xff]
      %v2038 = vld [vmem:[%s1385 + $0x98] sm:$0xff]
      %v2039 = vld [vmem:[%s1385 + $0xa8] sm:$0xff]
      %v2040 = vld [vmem:[%s1385 + $0xb0] sm:$0xff]
      %v2041 = vld [vmem:[%s1385 + $0xc0] sm:$0xff]
      %v2042 = vld [vmem:[%s1385 + $0xc8] sm:$0xff]
      %v2043 = vld [vmem:[%s1385 + $0xd8] sm:$0xff]
      %v2044 = vld [vmem:[%s1385 + $0xe0] sm:$0xff]
      %v2045 = vld [vmem:[%s1385 + $0xf0] sm:$0xff]
      %v2046 = vld [vmem:[%s1385 + $0xf8] sm:$0xff]
      %v2047 = vld [vmem:[%s1385 + $0x108] sm:$0xff]
      %v2048 = vld [vmem:[%s1385 + $0x110] sm:$0xff]
      %v2049 = vld [vmem:[%s1385 + $0x120] sm:$0xff]
      %v2050 = vld [vmem:[%s1385 + $0x128] sm:$0xff]
      %v2051 = vld [vmem:[%s1385 + $0x138] sm:$0xff]
      %v2052 = vld [vmem:[%s1385 + $0x140] sm:$0xff]
      %v2053 = vld [vmem:[%s1385 + $0x150] sm:$0xff]
      %v2054 = vld [vmem:[%s1385 + $0x158] sm:$0xff]
      %v2055 = vld [vmem:[%s1385 + $0x168] sm:$0xff]
      %v2056 = vld [vmem:[%s1385 + $0x170] sm:$0xff]
      %v2057 = vpack.c.bf16 %v2026, %v2025
      %v2058 = vpack.c.bf16 %v2028, %v2027
      %v2059 = vpack.c.bf16 %v2030, %v2029
      %v2060 = vpack.c.bf16 %v2032, %v2031
      %v2061 = vpack.c.bf16 %v2034, %v2033
      %v2062 = vpack.c.bf16 %v2036, %v2035
      %v2063 = vpack.c.bf16 %v2038, %v2037
      %v2064 = vpack.c.bf16 %v2040, %v2039
      %v2065 = vpack.c.bf16 %v2042, %v2041
      %v2066 = vpack.c.bf16 %v2044, %v2043
      %v2067 = vpack.c.bf16 %v2046, %v2045
      %v2068 = vpack.c.bf16 %v2048, %v2047
      %v2069 = vpack.c.bf16 %v2050, %v2049
      %v2070 = vpack.c.bf16 %v2052, %v2051
      %v2071 = vpack.c.bf16 %v2054, %v2053
      %v2072 = vpack.c.bf16 %v2056, %v2055
      %v2073 = vld [vmem:[%s5] sm:$0x8]
      %v2075 = vunpack.c.l.b16 %v2073
      %v2076 = vpack.c.b16 %v2075, %v2075
      %v2077 = vrot.slane %v2076, 3
      %v2079 = vsel %vm334, %v2057, 0
      %v2082 = vsel %vm334, %v2058, 0
      %v2085 = vsel %vm334, %v2059, 0
      %v2088 = vsel %vm334, %v2060, 0
      %v2091 = vsel %vm334, %v2061, 0
      %v2094 = vsel %vm334, %v2062, 0
      %v2097 = vsel %vm334, %v2063, 0
      %v2100 = vsel %vm334, %v2064, 0
      %v2103 = vsel %vm334, %v2065, 0
      %v2106 = vsel %vm334, %v2066, 0
      %v2109 = vsel %vm334, %v2067, 0
      %v2112 = vsel %vm334, %v2068, 0
      %v2115 = vsel %vm334, %v2069, 0
      %v2118 = vsel %vm334, %v2070, 0
      %v2121 = vsel %vm334, %v2071, 0
      %v2124 = vsel %vm334, %v2072, 0
      %v2127 = vsel %vm1152, %v2077, 0
      %2129 = vmatpush.bf16.msra.mxu0 0
      %2130 = vmatpush.bf16.msra.mxu0 0
      %2131 = vmatpush.bf16.msra.mxu0 0
      %2132 = vmatpush.bf16.msra.mxu0 0
      %2133 = vmatpush.bf16.msra.mxu0 0
      %2134 = vmatpush.bf16.msra.mxu0 0
      %2135 = vmatpush.bf16.msra.mxu0 0
      %2136 = vmatpush.bf16.msra.mxu0 %v2127
      %2137 = vmatmul.bf16.gmra.mxu0 %v2079
      %v2138 = vpop.f32.mrf.mxu0
      %v2139 = vadd.f32 0.0, %v2138
      %v2140 = vpop.f32.mrf.mxu0
      %v2141 = vadd.f32 0.0, %v2140
      %2142 = vmatmul.bf16.gmra.mxu0 %v2082
      %v2143 = vpop.f32.mrf.mxu0
      %v2144 = vadd.f32 0.0, %v2143
      %v2145 = vpop.f32.mrf.mxu0
      %v2146 = vadd.f32 0.0, %v2145
      %2147 = vmatmul.bf16.gmra.mxu0 %v2085
      %v2148 = vpop.f32.mrf.mxu0
      %v2149 = vadd.f32 0.0, %v2148
      %v2150 = vpop.f32.mrf.mxu0
      %v2151 = vadd.f32 0.0, %v2150
      %2152 = vmatmul.bf16.gmra.mxu0 %v2088
      %v2153 = vpop.f32.mrf.mxu0
      %v2154 = vadd.f32 0.0, %v2153
      %v2155 = vpop.f32.mrf.mxu0
      %v2156 = vadd.f32 0.0, %v2155
      %2157 = vmatmul.bf16.gmra.mxu0 %v2091
      %v2158 = vpop.f32.mrf.mxu0
      %v2159 = vadd.f32 0.0, %v2158
      %v2160 = vpop.f32.mrf.mxu0
      %v2161 = vadd.f32 0.0, %v2160
      %2162 = vmatmul.bf16.gmra.mxu0 %v2094
      %v2163 = vpop.f32.mrf.mxu0
      %v2164 = vadd.f32 0.0, %v2163
      %v2165 = vpop.f32.mrf.mxu0
      %v2166 = vadd.f32 0.0, %v2165
      %2167 = vmatmul.bf16.gmra.mxu0 %v2097
      %v2168 = vpop.f32.mrf.mxu0
      %v2169 = vadd.f32 0.0, %v2168
      %v2170 = vpop.f32.mrf.mxu0
      %v2171 = vadd.f32 0.0, %v2170
      %2172 = vmatmul.bf16.gmra.mxu0 %v2100
      %v2173 = vpop.f32.mrf.mxu0
      %v2174 = vadd.f32 0.0, %v2173
      %v2175 = vpop.f32.mrf.mxu0
      %v2176 = vadd.f32 0.0, %v2175
      %2177 = vmatmul.bf16.gmra.mxu0 %v2103
      %v2178 = vpop.f32.mrf.mxu0
      %v2179 = vadd.f32 0.0, %v2178
      %v2180 = vpop.f32.mrf.mxu0
      %v2181 = vadd.f32 0.0, %v2180
      %2182 = vmatmul.bf16.gmra.mxu0 %v2106
      %v2183 = vpop.f32.mrf.mxu0
      %v2184 = vadd.f32 0.0, %v2183
      %v2185 = vpop.f32.mrf.mxu0
      %v2186 = vadd.f32 0.0, %v2185
      %2187 = vmatmul.bf16.gmra.mxu0 %v2109
      %v2188 = vpop.f32.mrf.mxu0
      %v2189 = vadd.f32 0.0, %v2188
      %v2190 = vpop.f32.mrf.mxu0
      %v2191 = vadd.f32 0.0, %v2190
      %2192 = vmatmul.bf16.gmra.mxu0 %v2112
      %v2193 = vpop.f32.mrf.mxu0
      %v2194 = vadd.f32 0.0, %v2193
      %v2195 = vpop.f32.mrf.mxu0
      %v2196 = vadd.f32 0.0, %v2195
      %2197 = vmatmul.bf16.gmra.mxu0 %v2115
      %v2198 = vpop.f32.mrf.mxu0
      %v2199 = vadd.f32 0.0, %v2198
      %v2200 = vpop.f32.mrf.mxu0
      %v2201 = vadd.f32 0.0, %v2200
      %2202 = vmatmul.bf16.gmra.mxu0 %v2118
      %v2203 = vpop.f32.mrf.mxu0
      %v2204 = vadd.f32 0.0, %v2203
      %v2205 = vpop.f32.mrf.mxu0
      %v2206 = vadd.f32 0.0, %v2205
      %2207 = vmatmul.bf16.gmra.mxu0 %v2121
      %v2208 = vpop.f32.mrf.mxu0
      %v2209 = vadd.f32 0.0, %v2208
      %v2210 = vpop.f32.mrf.mxu0
      %v2211 = vadd.f32 0.0, %v2210
      %2212 = vmatmul.bf16.gmra.mxu0 %v2124
      %v2213 = vpop.f32.mrf.mxu0
      %v2214 = vadd.f32 0.0, %v2213
      %v2215 = vpop.f32.mrf.mxu0
      %v2216 = vadd.f32 0.0, %v2215
      %2217 = vdwg.mxu0
      %v2218 = vadd.f32 %v1993, %v2139
      %v2219 = vadd.f32 %v1994, %v2141
      %v2220 = vadd.f32 %v1995, %v2144
      %v2221 = vadd.f32 %v1996, %v2146
      %v2222 = vadd.f32 %v1997, %v2149
      %v2223 = vadd.f32 %v1998, %v2151
      %v2224 = vadd.f32 %v1999, %v2154
      %v2225 = vadd.f32 %v2000, %v2156
      %v2226 = vadd.f32 %v2001, %v2159
      %v2227 = vadd.f32 %v2002, %v2161
      %v2228 = vadd.f32 %v2003, %v2164
      %v2229 = vadd.f32 %v2004, %v2166
      %v2230 = vadd.f32 %v2005, %v2169
      %v2231 = vadd.f32 %v2006, %v2171
      %v2232 = vadd.f32 %v2007, %v2174
      %v2233 = vadd.f32 %v2008, %v2176
      %v2234 = vadd.f32 %v2009, %v2179
      %v2235 = vadd.f32 %v2010, %v2181
      %v2236 = vadd.f32 %v2011, %v2184
      %v2237 = vadd.f32 %v2012, %v2186
      %v2238 = vadd.f32 %v2013, %v2189
      %v2239 = vadd.f32 %v2014, %v2191
      %v2240 = vadd.f32 %v2015, %v2194
      %v2241 = vadd.f32 %v2016, %v2196
      %v2242 = vadd.f32 %v2017, %v2199
      %v2243 = vadd.f32 %v2018, %v2201
      %v2244 = vadd.f32 %v2019, %v2204
      %v2245 = vadd.f32 %v2020, %v2206
      %v2246 = vadd.f32 %v2021, %v2209
      %v2247 = vadd.f32 %v2022, %v2211
      %v2248 = vadd.f32 %v2023, %v2214
      %v2249 = vadd.f32 %v2024, %v2216
      %v2250 = vld [vmem:[%s1385 + $0x1] sm:$0xff]
      %v2251 = vld [vmem:[%s1385 + $0x9] sm:$0xff]
      %v2252 = vld [vmem:[%s1385 + $0x19] sm:$0xff]
      %v2253 = vld [vmem:[%s1385 + $0x21] sm:$0xff]
      %v2254 = vld [vmem:[%s1385 + $0x31] sm:$0xff]
      %v2255 = vld [vmem:[%s1385 + $0x39] sm:$0xff]
      %v2256 = vld [vmem:[%s1385 + $0x49] sm:$0xff]
      %v2257 = vld [vmem:[%s1385 + $0x51] sm:$0xff]
      %v2258 = vld [vmem:[%s1385 + $0x61] sm:$0xff]
      %v2259 = vld [vmem:[%s1385 + $0x69] sm:$0xff]
      %v2260 = vld [vmem:[%s1385 + $0x79] sm:$0xff]
      %v2261 = vld [vmem:[%s1385 + $0x81] sm:$0xff]
      %v2262 = vld [vmem:[%s1385 + $0x91] sm:$0xff]
      %v2263 = vld [vmem:[%s1385 + $0x99] sm:$0xff]
      %v2264 = vld [vmem:[%s1385 + $0xa9] sm:$0xff]
      %v2265 = vld [vmem:[%s1385 + $0xb1] sm:$0xff]
      %v2266 = vld [vmem:[%s1385 + $0xc1] sm:$0xff]
      %v2267 = vld [vmem:[%s1385 + $0xc9] sm:$0xff]
      %v2268 = vld [vmem:[%s1385 + $0xd9] sm:$0xff]
      %v2269 = vld [vmem:[%s1385 + $0xe1] sm:$0xff]
      %v2270 = vld [vmem:[%s1385 + $0xf1] sm:$0xff]
      %v2271 = vld [vmem:[%s1385 + $0xf9] sm:$0xff]
      %v2272 = vld [vmem:[%s1385 + $0x109] sm:$0xff]
      %v2273 = vld [vmem:[%s1385 + $0x111] sm:$0xff]
      %v2274 = vld [vmem:[%s1385 + $0x121] sm:$0xff]
      %v2275 = vld [vmem:[%s1385 + $0x129] sm:$0xff]
      %v2276 = vld [vmem:[%s1385 + $0x139] sm:$0xff]
      %v2277 = vld [vmem:[%s1385 + $0x141] sm:$0xff]
      %v2278 = vld [vmem:[%s1385 + $0x151] sm:$0xff]
      %v2279 = vld [vmem:[%s1385 + $0x159] sm:$0xff]
      %v2280 = vld [vmem:[%s1385 + $0x169] sm:$0xff]
      %v2281 = vld [vmem:[%s1385 + $0x171] sm:$0xff]
      %v2282 = vpack.c.bf16 %v2251, %v2250
      %v2283 = vpack.c.bf16 %v2253, %v2252
      %v2284 = vpack.c.bf16 %v2255, %v2254
      %v2285 = vpack.c.bf16 %v2257, %v2256
      %v2286 = vpack.c.bf16 %v2259, %v2258
      %v2287 = vpack.c.bf16 %v2261, %v2260
      %v2288 = vpack.c.bf16 %v2263, %v2262
      %v2289 = vpack.c.bf16 %v2265, %v2264
      %v2290 = vpack.c.bf16 %v2267, %v2266
      %v2291 = vpack.c.bf16 %v2269, %v2268
      %v2292 = vpack.c.bf16 %v2271, %v2270
      %v2293 = vpack.c.bf16 %v2273, %v2272
      %v2294 = vpack.c.bf16 %v2275, %v2274
      %v2295 = vpack.c.bf16 %v2277, %v2276
      %v2296 = vpack.c.bf16 %v2279, %v2278
      %v2297 = vpack.c.bf16 %v2281, %v2280
      %v2298 = vld [vmem:[%s5 + $0x4] sm:$0x1]
      %v2300 = vsel %vm334, %v2282, 0
      %v2303 = vsel %vm334, %v2283, 0
      %v2306 = vsel %vm334, %v2284, 0
      %v2309 = vsel %vm334, %v2285, 0
      %v2312 = vsel %vm334, %v2286, 0
      %v2315 = vsel %vm334, %v2287, 0
      %v2318 = vsel %vm334, %v2288, 0
      %v2321 = vsel %vm334, %v2289, 0
      %v2324 = vsel %vm334, %v2290, 0
      %v2327 = vsel %vm334, %v2291, 0
      %v2330 = vsel %vm334, %v2292, 0
      %v2333 = vsel %vm334, %v2293, 0
      %v2336 = vsel %vm334, %v2294, 0
      %v2339 = vsel %vm334, %v2295, 0
      %v2342 = vsel %vm334, %v2296, 0
      %v2345 = vsel %vm334, %v2297, 0
      %v2348 = vsel %vm1152, %v2298, 0
      %2350 = vmatpush.bf16.msra.mxu0 0
      %2351 = vmatpush.bf16.msra.mxu0 0
      %2352 = vmatpush.bf16.msra.mxu0 0
      %2353 = vmatpush.bf16.msra.mxu0 0
      %2354 = vmatpush.bf16.msra.mxu0 0
      %2355 = vmatpush.bf16.msra.mxu0 0
      %2356 = vmatpush.bf16.msra.mxu0 0
      %2357 = vmatpush.bf16.msra.mxu0 %v2348
      %2358 = vmatmul.bf16.gmra.mxu0 %v2300
      %v2359 = vpop.f32.mrf.mxu0
      %v2360 = vadd.f32 0.0, %v2359
      %v2361 = vpop.f32.mrf.mxu0
      %v2362 = vadd.f32 0.0, %v2361
      %2363 = vmatmul.bf16.gmra.mxu0 %v2303
      %v2364 = vpop.f32.mrf.mxu0
      %v2365 = vadd.f32 0.0, %v2364
      %v2366 = vpop.f32.mrf.mxu0
      %v2367 = vadd.f32 0.0, %v2366
      %2368 = vmatmul.bf16.gmra.mxu0 %v2306
      %v2369 = vpop.f32.mrf.mxu0
      %v2370 = vadd.f32 0.0, %v2369
      %v2371 = vpop.f32.mrf.mxu0
      %v2372 = vadd.f32 0.0, %v2371
      %2373 = vmatmul.bf16.gmra.mxu0 %v2309
      %v2374 = vpop.f32.mrf.mxu0
      %v2375 = vadd.f32 0.0, %v2374
      %v2376 = vpop.f32.mrf.mxu0
      %v2377 = vadd.f32 0.0, %v2376
      %2378 = vmatmul.bf16.gmra.mxu0 %v2312
      %v2379 = vpop.f32.mrf.mxu0
      %v2380 = vadd.f32 0.0, %v2379
      %v2381 = vpop.f32.mrf.mxu0
      %v2382 = vadd.f32 0.0, %v2381
      %2383 = vmatmul.bf16.gmra.mxu0 %v2315
      %v2384 = vpop.f32.mrf.mxu0
      %v2385 = vadd.f32 0.0, %v2384
      %v2386 = vpop.f32.mrf.mxu0
      %v2387 = vadd.f32 0.0, %v2386
      %2388 = vmatmul.bf16.gmra.mxu0 %v2318
      %v2389 = vpop.f32.mrf.mxu0
      %v2390 = vadd.f32 0.0, %v2389
      %v2391 = vpop.f32.mrf.mxu0
      %v2392 = vadd.f32 0.0, %v2391
      %2393 = vmatmul.bf16.gmra.mxu0 %v2321
      %v2394 = vpop.f32.mrf.mxu0
      %v2395 = vadd.f32 0.0, %v2394
      %v2396 = vpop.f32.mrf.mxu0
      %v2397 = vadd.f32 0.0, %v2396
      %2398 = vmatmul.bf16.gmra.mxu0 %v2324
      %v2399 = vpop.f32.mrf.mxu0
      %v2400 = vadd.f32 0.0, %v2399
      %v2401 = vpop.f32.mrf.mxu0
      %v2402 = vadd.f32 0.0, %v2401
      %2403 = vmatmul.bf16.gmra.mxu0 %v2327
      %v2404 = vpop.f32.mrf.mxu0
      %v2405 = vadd.f32 0.0, %v2404
      %v2406 = vpop.f32.mrf.mxu0
      %v2407 = vadd.f32 0.0, %v2406
      %2408 = vmatmul.bf16.gmra.mxu0 %v2330
      %v2409 = vpop.f32.mrf.mxu0
      %v2410 = vadd.f32 0.0, %v2409
      %v2411 = vpop.f32.mrf.mxu0
      %v2412 = vadd.f32 0.0, %v2411
      %2413 = vmatmul.bf16.gmra.mxu0 %v2333
      %v2414 = vpop.f32.mrf.mxu0
      %v2415 = vadd.f32 0.0, %v2414
      %v2416 = vpop.f32.mrf.mxu0
      %v2417 = vadd.f32 0.0, %v2416
      %2418 = vmatmul.bf16.gmra.mxu0 %v2336
      %v2419 = vpop.f32.mrf.mxu0
      %v2420 = vadd.f32 0.0, %v2419
      %v2421 = vpop.f32.mrf.mxu0
      %v2422 = vadd.f32 0.0, %v2421
      %2423 = vmatmul.bf16.gmra.mxu0 %v2339
      %v2424 = vpop.f32.mrf.mxu0
      %v2425 = vadd.f32 0.0, %v2424
      %v2426 = vpop.f32.mrf.mxu0
      %v2427 = vadd.f32 0.0, %v2426
      %2428 = vmatmul.bf16.gmra.mxu0 %v2342
      %v2429 = vpop.f32.mrf.mxu0
      %v2430 = vadd.f32 0.0, %v2429
      %v2431 = vpop.f32.mrf.mxu0
      %v2432 = vadd.f32 0.0, %v2431
      %2433 = vmatmul.bf16.gmra.mxu0 %v2345
      %v2434 = vpop.f32.mrf.mxu0
      %v2435 = vadd.f32 0.0, %v2434
      %v2436 = vpop.f32.mrf.mxu0
      %v2437 = vadd.f32 0.0, %v2436
      %2438 = vdwg.mxu0
      %v2439 = vadd.f32 %v2218, %v2360
      %v2440 = vadd.f32 %v2219, %v2362
      %v2441 = vadd.f32 %v2220, %v2365
      %v2442 = vadd.f32 %v2221, %v2367
      %v2443 = vadd.f32 %v2222, %v2370
      %v2444 = vadd.f32 %v2223, %v2372
      %v2445 = vadd.f32 %v2224, %v2375
      %v2446 = vadd.f32 %v2225, %v2377
      %v2447 = vadd.f32 %v2226, %v2380
      %v2448 = vadd.f32 %v2227, %v2382
      %v2449 = vadd.f32 %v2228, %v2385
      %v2450 = vadd.f32 %v2229, %v2387
      %v2451 = vadd.f32 %v2230, %v2390
      %v2452 = vadd.f32 %v2231, %v2392
      %v2453 = vadd.f32 %v2232, %v2395
      %v2454 = vadd.f32 %v2233, %v2397
      %v2455 = vadd.f32 %v2234, %v2400
      %v2456 = vadd.f32 %v2235, %v2402
      %v2457 = vadd.f32 %v2236, %v2405
      %v2458 = vadd.f32 %v2237, %v2407
      %v2459 = vadd.f32 %v2238, %v2410
      %v2460 = vadd.f32 %v2239, %v2412
      %v2461 = vadd.f32 %v2240, %v2415
      %v2462 = vadd.f32 %v2241, %v2417
      %v2463 = vadd.f32 %v2242, %v2420
      %v2464 = vadd.f32 %v2243, %v2422
      %v2465 = vadd.f32 %v2244, %v2425
      %v2466 = vadd.f32 %v2245, %v2427
      %v2467 = vadd.f32 %v2246, %v2430
      %v2468 = vadd.f32 %v2247, %v2432
      %v2469 = vadd.f32 %v2248, %v2435
      %v2470 = vadd.f32 %v2249, %v2437
      %v2471 = vld [vmem:[%s1385 + $0x2] sm:$0xff]
      %v2472 = vld [vmem:[%s1385 + $0xa] sm:$0xff]
      %v2473 = vld [vmem:[%s1385 + $0x1a] sm:$0xff]
      %v2474 = vld [vmem:[%s1385 + $0x22] sm:$0xff]
      %v2475 = vld [vmem:[%s1385 + $0x32] sm:$0xff]
      %v2476 = vld [vmem:[%s1385 + $0x3a] sm:$0xff]
      %v2477 = vld [vmem:[%s1385 + $0x4a] sm:$0xff]
      %v2478 = vld [vmem:[%s1385 + $0x52] sm:$0xff]
      %v2479 = vld [vmem:[%s1385 + $0x62] sm:$0xff]
      %v2480 = vld [vmem:[%s1385 + $0x6a] sm:$0xff]
      %v2481 = vld [vmem:[%s1385 + $0x7a] sm:$0xff]
      %v2482 = vld [vmem:[%s1385 + $0x82] sm:$0xff]
      %v2483 = vld [vmem:[%s1385 + $0x92] sm:$0xff]
      %v2484 = vld [vmem:[%s1385 + $0x9a] sm:$0xff]
      %v2485 = vld [vmem:[%s1385 + $0xaa] sm:$0xff]
      %v2486 = vld [vmem:[%s1385 + $0xb2] sm:$0xff]
      %v2487 = vld [vmem:[%s1385 + $0xc2] sm:$0xff]
      %v2488 = vld [vmem:[%s1385 + $0xca] sm:$0xff]
      %v2489 = vld [vmem:[%s1385 + $0xda] sm:$0xff]
      %v2490 = vld [vmem:[%s1385 + $0xe2] sm:$0xff]
      %v2491 = vld [vmem:[%s1385 + $0xf2] sm:$0xff]
      %v2492 = vld [vmem:[%s1385 + $0xfa] sm:$0xff]
      %v2493 = vld [vmem:[%s1385 + $0x10a] sm:$0xff]
      %v2494 = vld [vmem:[%s1385 + $0x112] sm:$0xff]
      %v2495 = vld [vmem:[%s1385 + $0x122] sm:$0xff]
      %v2496 = vld [vmem:[%s1385 + $0x12a] sm:$0xff]
      %v2497 = vld [vmem:[%s1385 + $0x13a] sm:$0xff]
      %v2498 = vld [vmem:[%s1385 + $0x142] sm:$0xff]
      %v2499 = vld [vmem:[%s1385 + $0x152] sm:$0xff]
      %v2500 = vld [vmem:[%s1385 + $0x15a] sm:$0xff]
      %v2501 = vld [vmem:[%s1385 + $0x16a] sm:$0xff]
      %v2502 = vld [vmem:[%s1385 + $0x172] sm:$0xff]
      %v2503 = vpack.c.bf16 %v2472, %v2471
      %v2504 = vpack.c.bf16 %v2474, %v2473
      %v2505 = vpack.c.bf16 %v2476, %v2475
      %v2506 = vpack.c.bf16 %v2478, %v2477
      %v2507 = vpack.c.bf16 %v2480, %v2479
      %v2508 = vpack.c.bf16 %v2482, %v2481
      %v2509 = vpack.c.bf16 %v2484, %v2483
      %v2510 = vpack.c.bf16 %v2486, %v2485
      %v2511 = vpack.c.bf16 %v2488, %v2487
      %v2512 = vpack.c.bf16 %v2490, %v2489
      %v2513 = vpack.c.bf16 %v2492, %v2491
      %v2514 = vpack.c.bf16 %v2494, %v2493
      %v2515 = vpack.c.bf16 %v2496, %v2495
      %v2516 = vpack.c.bf16 %v2498, %v2497
      %v2517 = vpack.c.bf16 %v2500, %v2499
      %v2518 = vpack.c.bf16 %v2502, %v2501
      %v2519 = vld [vmem:[%s5 + $0x4] sm:$0x2]
      %v2521 = vunpack.c.l.b16 %v2519
      %v2522 = vpack.c.b16 %v2521, %v2521
      %v2523 = vrot.slane %v2522, 1
      %v2525 = vsel %vm334, %v2503, 0
      %v2528 = vsel %vm334, %v2504, 0
      %v2531 = vsel %vm334, %v2505, 0
      %v2534 = vsel %vm334, %v2506, 0
      %v2537 = vsel %vm334, %v2507, 0
      %v2540 = vsel %vm334, %v2508, 0
      %v2543 = vsel %vm334, %v2509, 0
      %v2546 = vsel %vm334, %v2510, 0
      %v2549 = vsel %vm334, %v2511, 0
      %v2552 = vsel %vm334, %v2512, 0
      %v2555 = vsel %vm334, %v2513, 0
      %v2558 = vsel %vm334, %v2514, 0
      %v2561 = vsel %vm334, %v2515, 0
      %v2564 = vsel %vm334, %v2516, 0
      %v2567 = vsel %vm334, %v2517, 0
      %v2570 = vsel %vm334, %v2518, 0
      %v2573 = vsel %vm1152, %v2523, 0
      %2575 = vmatpush.bf16.msra.mxu0 0
      %2576 = vmatpush.bf16.msra.mxu0 0
      %2577 = vmatpush.bf16.msra.mxu0 0
      %2578 = vmatpush.bf16.msra.mxu0 0
      %2579 = vmatpush.bf16.msra.mxu0 0
      %2580 = vmatpush.bf16.msra.mxu0 0
      %2581 = vmatpush.bf16.msra.mxu0 0
      %2582 = vmatpush.bf16.msra.mxu0 %v2573
      %2583 = vmatmul.bf16.gmra.mxu0 %v2525
      %v2584 = vpop.f32.mrf.mxu0
      %v2585 = vadd.f32 0.0, %v2584
      %v2586 = vpop.f32.mrf.mxu0
      %v2587 = vadd.f32 0.0, %v2586
      %2588 = vmatmul.bf16.gmra.mxu0 %v2528
      %v2589 = vpop.f32.mrf.mxu0
      %v2590 = vadd.f32 0.0, %v2589
      %v2591 = vpop.f32.mrf.mxu0
      %v2592 = vadd.f32 0.0, %v2591
      %2593 = vmatmul.bf16.gmra.mxu0 %v2531
      %v2594 = vpop.f32.mrf.mxu0
      %v2595 = vadd.f32 0.0, %v2594
      %v2596 = vpop.f32.mrf.mxu0
      %v2597 = vadd.f32 0.0, %v2596
      %2598 = vmatmul.bf16.gmra.mxu0 %v2534
      %v2599 = vpop.f32.mrf.mxu0
      %v2600 = vadd.f32 0.0, %v2599
      %v2601 = vpop.f32.mrf.mxu0
      %v2602 = vadd.f32 0.0, %v2601
      %2603 = vmatmul.bf16.gmra.mxu0 %v2537
      %v2604 = vpop.f32.mrf.mxu0
      %v2605 = vadd.f32 0.0, %v2604
      %v2606 = vpop.f32.mrf.mxu0
      %v2607 = vadd.f32 0.0, %v2606
      %2608 = vmatmul.bf16.gmra.mxu0 %v2540
      %v2609 = vpop.f32.mrf.mxu0
      %v2610 = vadd.f32 0.0, %v2609
      %v2611 = vpop.f32.mrf.mxu0
      %v2612 = vadd.f32 0.0, %v2611
      %2613 = vmatmul.bf16.gmra.mxu0 %v2543
      %v2614 = vpop.f32.mrf.mxu0
      %v2615 = vadd.f32 0.0, %v2614
      %v2616 = vpop.f32.mrf.mxu0
      %v2617 = vadd.f32 0.0, %v2616
      %2618 = vmatmul.bf16.gmra.mxu0 %v2546
      %v2619 = vpop.f32.mrf.mxu0
      %v2620 = vadd.f32 0.0, %v2619
      %v2621 = vpop.f32.mrf.mxu0
      %v2622 = vadd.f32 0.0, %v2621
      %2623 = vmatmul.bf16.gmra.mxu0 %v2549
      %v2624 = vpop.f32.mrf.mxu0
      %v2625 = vadd.f32 0.0, %v2624
      %v2626 = vpop.f32.mrf.mxu0
      %v2627 = vadd.f32 0.0, %v2626
      %2628 = vmatmul.bf16.gmra.mxu0 %v2552
      %v2629 = vpop.f32.mrf.mxu0
      %v2630 = vadd.f32 0.0, %v2629
      %v2631 = vpop.f32.mrf.mxu0
      %v2632 = vadd.f32 0.0, %v2631
      %2633 = vmatmul.bf16.gmra.mxu0 %v2555
      %v2634 = vpop.f32.mrf.mxu0
      %v2635 = vadd.f32 0.0, %v2634
      %v2636 = vpop.f32.mrf.mxu0
      %v2637 = vadd.f32 0.0, %v2636
      %2638 = vmatmul.bf16.gmra.mxu0 %v2558
      %v2639 = vpop.f32.mrf.mxu0
      %v2640 = vadd.f32 0.0, %v2639
      %v2641 = vpop.f32.mrf.mxu0
      %v2642 = vadd.f32 0.0, %v2641
      %2643 = vmatmul.bf16.gmra.mxu0 %v2561
      %v2644 = vpop.f32.mrf.mxu0
      %v2645 = vadd.f32 0.0, %v2644
      %v2646 = vpop.f32.mrf.mxu0
      %v2647 = vadd.f32 0.0, %v2646
      %2648 = vmatmul.bf16.gmra.mxu0 %v2564
      %v2649 = vpop.f32.mrf.mxu0
      %v2650 = vadd.f32 0.0, %v2649
      %v2651 = vpop.f32.mrf.mxu0
      %v2652 = vadd.f32 0.0, %v2651
      %2653 = vmatmul.bf16.gmra.mxu0 %v2567
      %v2654 = vpop.f32.mrf.mxu0
      %v2655 = vadd.f32 0.0, %v2654
      %v2656 = vpop.f32.mrf.mxu0
      %v2657 = vadd.f32 0.0, %v2656
      %2658 = vmatmul.bf16.gmra.mxu0 %v2570
      %v2659 = vpop.f32.mrf.mxu0
      %v2660 = vadd.f32 0.0, %v2659
      %v2661 = vpop.f32.mrf.mxu0
      %v2662 = vadd.f32 0.0, %v2661
      %2663 = vdwg.mxu0
      %v2664 = vadd.f32 %v2439, %v2585
      %v2665 = vadd.f32 %v2440, %v2587
      %v2666 = vadd.f32 %v2441, %v2590
      %v2667 = vadd.f32 %v2442, %v2592
      %v2668 = vadd.f32 %v2443, %v2595
      %v2669 = vadd.f32 %v2444, %v2597
      %v2670 = vadd.f32 %v2445, %v2600
      %v2671 = vadd.f32 %v2446, %v2602
      %v2672 = vadd.f32 %v2447, %v2605
      %v2673 = vadd.f32 %v2448, %v2607
      %v2674 = vadd.f32 %v2449, %v2610
      %v2675 = vadd.f32 %v2450, %v2612
      %v2676 = vadd.f32 %v2451, %v2615
      %v2677 = vadd.f32 %v2452, %v2617
      %v2678 = vadd.f32 %v2453, %v2620
      %v2679 = vadd.f32 %v2454, %v2622
      %v2680 = vadd.f32 %v2455, %v2625
      %v2681 = vadd.f32 %v2456, %v2627
      %v2682 = vadd.f32 %v2457, %v2630
      %v2683 = vadd.f32 %v2458, %v2632
      %v2684 = vadd.f32 %v2459, %v2635
      %v2685 = vadd.f32 %v2460, %v2637
      %v2686 = vadd.f32 %v2461, %v2640
      %v2687 = vadd.f32 %v2462, %v2642
      %v2688 = vadd.f32 %v2463, %v2645
      %v2689 = vadd.f32 %v2464, %v2647
      %v2690 = vadd.f32 %v2465, %v2650
      %v2691 = vadd.f32 %v2466, %v2652
      %v2692 = vadd.f32 %v2467, %v2655
      %v2693 = vadd.f32 %v2468, %v2657
      %v2694 = vadd.f32 %v2469, %v2660
      %v2695 = vadd.f32 %v2470, %v2662
      %s2696 = scalar_lea.vmem [#allocation2], 48
      %v2697 = vld [vmem:[%s2696] sm:$0xff]
      %v2698 = vld [vmem:[%s2696 + $0x8] sm:$0xff]
      %v2699 = vld [vmem:[%s2696 + $0x18] sm:$0xff]
      %v2700 = vld [vmem:[%s2696 + $0x20] sm:$0xff]
      %v2701 = vld [vmem:[%s2696 + $0x30] sm:$0xff]
      %v2702 = vld [vmem:[%s2696 + $0x38] sm:$0xff]
      %v2703 = vld [vmem:[%s2696 + $0x48] sm:$0xff]
      %v2704 = vld [vmem:[%s2696 + $0x50] sm:$0xff]
      %v2705 = vld [vmem:[%s2696 + $0x60] sm:$0xff]
      %v2706 = vld [vmem:[%s2696 + $0x68] sm:$0xff]
      %v2707 = vld [vmem:[%s2696 + $0x78] sm:$0xff]
      %v2708 = vld [vmem:[%s2696 + $0x80] sm:$0xff]
      %v2709 = vld [vmem:[%s2696 + $0x90] sm:$0xff]
      %v2710 = vld [vmem:[%s2696 + $0x98] sm:$0xff]
      %v2711 = vld [vmem:[%s2696 + $0xa8] sm:$0xff]
      %v2712 = vld [vmem:[%s2696 + $0xb0] sm:$0xff]
      %v2713 = vld [vmem:[%s2696 + $0xc0] sm:$0xff]
      %v2714 = vld [vmem:[%s2696 + $0xc8] sm:$0xff]
      %v2715 = vld [vmem:[%s2696 + $0xd8] sm:$0xff]
      %v2716 = vld [vmem:[%s2696 + $0xe0] sm:$0xff]
      %v2717 = vld [vmem:[%s2696 + $0xf0] sm:$0xff]
      %v2718 = vld [vmem:[%s2696 + $0xf8] sm:$0xff]
      %v2719 = vld [vmem:[%s2696 + $0x108] sm:$0xff]
      %v2720 = vld [vmem:[%s2696 + $0x110] sm:$0xff]
      %v2721 = vld [vmem:[%s2696 + $0x120] sm:$0xff]
      %v2722 = vld [vmem:[%s2696 + $0x128] sm:$0xff]
      %v2723 = vld [vmem:[%s2696 + $0x138] sm:$0xff]
      %v2724 = vld [vmem:[%s2696 + $0x140] sm:$0xff]
      %v2725 = vld [vmem:[%s2696 + $0x150] sm:$0xff]
      %v2726 = vld [vmem:[%s2696 + $0x158] sm:$0xff]
      %v2727 = vld [vmem:[%s2696 + $0x168] sm:$0xff]
      %v2728 = vld [vmem:[%s2696 + $0x170] sm:$0xff]
      %v2729 = vpack.c.bf16 %v2698, %v2697
      %v2730 = vpack.c.bf16 %v2700, %v2699
      %v2731 = vpack.c.bf16 %v2702, %v2701
      %v2732 = vpack.c.bf16 %v2704, %v2703
      %v2733 = vpack.c.bf16 %v2706, %v2705
      %v2734 = vpack.c.bf16 %v2708, %v2707
      %v2735 = vpack.c.bf16 %v2710, %v2709
      %v2736 = vpack.c.bf16 %v2712, %v2711
      %v2737 = vpack.c.bf16 %v2714, %v2713
      %v2738 = vpack.c.bf16 %v2716, %v2715
      %v2739 = vpack.c.bf16 %v2718, %v2717
      %v2740 = vpack.c.bf16 %v2720, %v2719
      %v2741 = vpack.c.bf16 %v2722, %v2721
      %v2742 = vpack.c.bf16 %v2724, %v2723
      %v2743 = vpack.c.bf16 %v2726, %v2725
      %v2744 = vpack.c.bf16 %v2728, %v2727
      %v2745 = vld [vmem:[%s5 + $0x4] sm:$0x4]
      %v2747 = vunpack.c.l.b16 %v2745
      %v2748 = vpack.c.b16 %v2747, %v2747
      %v2749 = vrot.slane %v2748, 2
      %v2751 = vsel %vm334, %v2729, 0
      %v2754 = vsel %vm334, %v2730, 0
      %v2757 = vsel %vm334, %v2731, 0
      %v2760 = vsel %vm334, %v2732, 0
      %v2763 = vsel %vm334, %v2733, 0
      %v2766 = vsel %vm334, %v2734, 0
      %v2769 = vsel %vm334, %v2735, 0
      %v2772 = vsel %vm334, %v2736, 0
      %v2775 = vsel %vm334, %v2737, 0
      %v2778 = vsel %vm334, %v2738, 0
      %v2781 = vsel %vm334, %v2739, 0
      %v2784 = vsel %vm334, %v2740, 0
      %v2787 = vsel %vm334, %v2741, 0
      %v2790 = vsel %vm334, %v2742, 0
      %v2793 = vsel %vm334, %v2743, 0
      %v2796 = vsel %vm334, %v2744, 0
      %v2799 = vsel %vm1152, %v2749, 0
      %2801 = vmatpush.bf16.msra.mxu0 0
      %2802 = vmatpush.bf16.msra.mxu0 0
      %2803 = vmatpush.bf16.msra.mxu0 0
      %2804 = vmatpush.bf16.msra.mxu0 0
      %2805 = vmatpush.bf16.msra.mxu0 0
      %2806 = vmatpush.bf16.msra.mxu0 0
      %2807 = vmatpush.bf16.msra.mxu0 0
      %2808 = vmatpush.bf16.msra.mxu0 %v2799
      %2809 = vmatmul.bf16.gmra.mxu0 %v2751
      %v2810 = vpop.f32.mrf.mxu0
      %v2811 = vadd.f32 0.0, %v2810
      %v2812 = vpop.f32.mrf.mxu0
      %v2813 = vadd.f32 0.0, %v2812
      %2814 = vmatmul.bf16.gmra.mxu0 %v2754
      %v2815 = vpop.f32.mrf.mxu0
      %v2816 = vadd.f32 0.0, %v2815
      %v2817 = vpop.f32.mrf.mxu0
      %v2818 = vadd.f32 0.0, %v2817
      %2819 = vmatmul.bf16.gmra.mxu0 %v2757
      %v2820 = vpop.f32.mrf.mxu0
      %v2821 = vadd.f32 0.0, %v2820
      %v2822 = vpop.f32.mrf.mxu0
      %v2823 = vadd.f32 0.0, %v2822
      %2824 = vmatmul.bf16.gmra.mxu0 %v2760
      %v2825 = vpop.f32.mrf.mxu0
      %v2826 = vadd.f32 0.0, %v2825
      %v2827 = vpop.f32.mrf.mxu0
      %v2828 = vadd.f32 0.0, %v2827
      %2829 = vmatmul.bf16.gmra.mxu0 %v2763
      %v2830 = vpop.f32.mrf.mxu0
      %v2831 = vadd.f32 0.0, %v2830
      %v2832 = vpop.f32.mrf.mxu0
      %v2833 = vadd.f32 0.0, %v2832
      %2834 = vmatmul.bf16.gmra.mxu0 %v2766
      %v2835 = vpop.f32.mrf.mxu0
      %v2836 = vadd.f32 0.0, %v2835
      %v2837 = vpop.f32.mrf.mxu0
      %v2838 = vadd.f32 0.0, %v2837
      %2839 = vmatmul.bf16.gmra.mxu0 %v2769
      %v2840 = vpop.f32.mrf.mxu0
      %v2841 = vadd.f32 0.0, %v2840
      %v2842 = vpop.f32.mrf.mxu0
      %v2843 = vadd.f32 0.0, %v2842
      %2844 = vmatmul.bf16.gmra.mxu0 %v2772
      %v2845 = vpop.f32.mrf.mxu0
      %v2846 = vadd.f32 0.0, %v2845
      %v2847 = vpop.f32.mrf.mxu0
      %v2848 = vadd.f32 0.0, %v2847
      %2849 = vmatmul.bf16.gmra.mxu0 %v2775
      %v2850 = vpop.f32.mrf.mxu0
      %v2851 = vadd.f32 0.0, %v2850
      %v2852 = vpop.f32.mrf.mxu0
      %v2853 = vadd.f32 0.0, %v2852
      %2854 = vmatmul.bf16.gmra.mxu0 %v2778
      %v2855 = vpop.f32.mrf.mxu0
      %v2856 = vadd.f32 0.0, %v2855
      %v2857 = vpop.f32.mrf.mxu0
      %v2858 = vadd.f32 0.0, %v2857
      %2859 = vmatmul.bf16.gmra.mxu0 %v2781
      %v2860 = vpop.f32.mrf.mxu0
      %v2861 = vadd.f32 0.0, %v2860
      %v2862 = vpop.f32.mrf.mxu0
      %v2863 = vadd.f32 0.0, %v2862
      %2864 = vmatmul.bf16.gmra.mxu0 %v2784
      %v2865 = vpop.f32.mrf.mxu0
      %v2866 = vadd.f32 0.0, %v2865
      %v2867 = vpop.f32.mrf.mxu0
      %v2868 = vadd.f32 0.0, %v2867
      %2869 = vmatmul.bf16.gmra.mxu0 %v2787
      %v2870 = vpop.f32.mrf.mxu0
      %v2871 = vadd.f32 0.0, %v2870
      %v2872 = vpop.f32.mrf.mxu0
      %v2873 = vadd.f32 0.0, %v2872
      %2874 = vmatmul.bf16.gmra.mxu0 %v2790
      %v2875 = vpop.f32.mrf.mxu0
      %v2876 = vadd.f32 0.0, %v2875
      %v2877 = vpop.f32.mrf.mxu0
      %v2878 = vadd.f32 0.0, %v2877
      %2879 = vmatmul.bf16.gmra.mxu0 %v2793
      %v2880 = vpop.f32.mrf.mxu0
      %v2881 = vadd.f32 0.0, %v2880
      %v2882 = vpop.f32.mrf.mxu0
      %v2883 = vadd.f32 0.0, %v2882
      %2884 = vmatmul.bf16.gmra.mxu0 %v2796
      %v2885 = vpop.f32.mrf.mxu0
      %v2886 = vadd.f32 0.0, %v2885
      %v2887 = vpop.f32.mrf.mxu0
      %v2888 = vadd.f32 0.0, %v2887
      %2889 = vdwg.mxu0
      %v2890 = vadd.f32 %v2664, %v2811
      %v2891 = vadd.f32 %v2665, %v2813
      %v2892 = vadd.f32 %v2666, %v2816
      %v2893 = vadd.f32 %v2667, %v2818
      %v2894 = vadd.f32 %v2668, %v2821
      %v2895 = vadd.f32 %v2669, %v2823
      %v2896 = vadd.f32 %v2670, %v2826
      %v2897 = vadd.f32 %v2671, %v2828
      %v2898 = vadd.f32 %v2672, %v2831
      %v2899 = vadd.f32 %v2673, %v2833
      %v2900 = vadd.f32 %v2674, %v2836
      %v2901 = vadd.f32 %v2675, %v2838
      %v2902 = vadd.f32 %v2676, %v2841
      %v2903 = vadd.f32 %v2677, %v2843
      %v2904 = vadd.f32 %v2678, %v2846
      %v2905 = vadd.f32 %v2679, %v2848
      %v2906 = vadd.f32 %v2680, %v2851
      %v2907 = vadd.f32 %v2681, %v2853
      %v2908 = vadd.f32 %v2682, %v2856
      %v2909 = vadd.f32 %v2683, %v2858
      %v2910 = vadd.f32 %v2684, %v2861
      %v2911 = vadd.f32 %v2685, %v2863
      %v2912 = vadd.f32 %v2686, %v2866
      %v2913 = vadd.f32 %v2687, %v2868
      %v2914 = vadd.f32 %v2688, %v2871
      %v2915 = vadd.f32 %v2689, %v2873
      %v2916 = vadd.f32 %v2690, %v2876
      %v2917 = vadd.f32 %v2691, %v2878
      %v2918 = vadd.f32 %v2692, %v2881
      %v2919 = vadd.f32 %v2693, %v2883
      %v2920 = vadd.f32 %v2694, %v2886
      %v2921 = vadd.f32 %v2695, %v2888
      %v2922 = vld [vmem:[%s2696 + $0x1] sm:$0xff]
      %v2923 = vld [vmem:[%s2696 + $0x9] sm:$0xff]
      %v2924 = vld [vmem:[%s2696 + $0x19] sm:$0xff]
      %v2925 = vld [vmem:[%s2696 + $0x21] sm:$0xff]
      %v2926 = vld [vmem:[%s2696 + $0x31] sm:$0xff]
      %v2927 = vld [vmem:[%s2696 + $0x39] sm:$0xff]
      %v2928 = vld [vmem:[%s2696 + $0x49] sm:$0xff]
      %v2929 = vld [vmem:[%s2696 + $0x51] sm:$0xff]
      %v2930 = vld [vmem:[%s2696 + $0x61] sm:$0xff]
      %v2931 = vld [vmem:[%s2696 + $0x69] sm:$0xff]
      %v2932 = vld [vmem:[%s2696 + $0x79] sm:$0xff]
      %v2933 = vld [vmem:[%s2696 + $0x81] sm:$0xff]
      %v2934 = vld [vmem:[%s2696 + $0x91] sm:$0xff]
      %v2935 = vld [vmem:[%s2696 + $0x99] sm:$0xff]
      %v2936 = vld [vmem:[%s2696 + $0xa9] sm:$0xff]
      %v2937 = vld [vmem:[%s2696 + $0xb1] sm:$0xff]
      %v2938 = vld [vmem:[%s2696 + $0xc1] sm:$0xff]
      %v2939 = vld [vmem:[%s2696 + $0xc9] sm:$0xff]
      %v2940 = vld [vmem:[%s2696 + $0xd9] sm:$0xff]
      %v2941 = vld [vmem:[%s2696 + $0xe1] sm:$0xff]
      %v2942 = vld [vmem:[%s2696 + $0xf1] sm:$0xff]
      %v2943 = vld [vmem:[%s2696 + $0xf9] sm:$0xff]
      %v2944 = vld [vmem:[%s2696 + $0x109] sm:$0xff]
      %v2945 = vld [vmem:[%s2696 + $0x111] sm:$0xff]
      %v2946 = vld [vmem:[%s2696 + $0x121] sm:$0xff]
      %v2947 = vld [vmem:[%s2696 + $0x129] sm:$0xff]
      %v2948 = vld [vmem:[%s2696 + $0x139] sm:$0xff]
      %v2949 = vld [vmem:[%s2696 + $0x141] sm:$0xff]
      %v2950 = vld [vmem:[%s2696 + $0x151] sm:$0xff]
      %v2951 = vld [vmem:[%s2696 + $0x159] sm:$0xff]
      %v2952 = vld [vmem:[%s2696 + $0x169] sm:$0xff]
      %v2953 = vld [vmem:[%s2696 + $0x171] sm:$0xff]
      %v2954 = vpack.c.bf16 %v2923, %v2922
      %v2955 = vpack.c.bf16 %v2925, %v2924
      %v2956 = vpack.c.bf16 %v2927, %v2926
      %v2957 = vpack.c.bf16 %v2929, %v2928
      %v2958 = vpack.c.bf16 %v2931, %v2930
      %v2959 = vpack.c.bf16 %v2933, %v2932
      %v2960 = vpack.c.bf16 %v2935, %v2934
      %v2961 = vpack.c.bf16 %v2937, %v2936
      %v2962 = vpack.c.bf16 %v2939, %v2938
      %v2963 = vpack.c.bf16 %v2941, %v2940
      %v2964 = vpack.c.bf16 %v2943, %v2942
      %v2965 = vpack.c.bf16 %v2945, %v2944
      %v2966 = vpack.c.bf16 %v2947, %v2946
      %v2967 = vpack.c.bf16 %v2949, %v2948
      %v2968 = vpack.c.bf16 %v2951, %v2950
      %v2969 = vpack.c.bf16 %v2953, %v2952
      %v2970 = vld [vmem:[%s5 + $0x4] sm:$0x8]
      %v2972 = vunpack.c.l.b16 %v2970
      %v2973 = vpack.c.b16 %v2972, %v2972
      %v2974 = vrot.slane %v2973, 3
      %v2976 = vsel %vm334, %v2954, 0
      %v2979 = vsel %vm334, %v2955, 0
      %v2982 = vsel %vm334, %v2956, 0
      %v2985 = vsel %vm334, %v2957, 0
      %v2988 = vsel %vm334, %v2958, 0
      %v2991 = vsel %vm334, %v2959, 0
      %v2994 = vsel %vm334, %v2960, 0
      %v2997 = vsel %vm334, %v2961, 0
      %v3000 = vsel %vm334, %v2962, 0
      %v3003 = vsel %vm334, %v2963, 0
      %v3006 = vsel %vm334, %v2964, 0
      %v3009 = vsel %vm334, %v2965, 0
      %v3012 = vsel %vm334, %v2966, 0
      %v3015 = vsel %vm334, %v2967, 0
      %v3018 = vsel %vm334, %v2968, 0
      %v3021 = vsel %vm334, %v2969, 0
      %v3024 = vsel %vm1152, %v2974, 0
      %3026 = vmatpush.bf16.msra.mxu0 0
      %3027 = vmatpush.bf16.msra.mxu0 0
      %3028 = vmatpush.bf16.msra.mxu0 0
      %3029 = vmatpush.bf16.msra.mxu0 0
      %3030 = vmatpush.bf16.msra.mxu0 0
      %3031 = vmatpush.bf16.msra.mxu0 0
      %3032 = vmatpush.bf16.msra.mxu0 0
      %3033 = vmatpush.bf16.msra.mxu0 %v3024
      %3034 = vmatmul.bf16.gmra.mxu0 %v2976
      %v3035 = vpop.f32.mrf.mxu0
      %v3036 = vadd.f32 0.0, %v3035
      %v3037 = vpop.f32.mrf.mxu0
      %v3038 = vadd.f32 0.0, %v3037
      %3039 = vmatmul.bf16.gmra.mxu0 %v2979
      %v3040 = vpop.f32.mrf.mxu0
      %v3041 = vadd.f32 0.0, %v3040
      %v3042 = vpop.f32.mrf.mxu0
      %v3043 = vadd.f32 0.0, %v3042
      %3044 = vmatmul.bf16.gmra.mxu0 %v2982
      %v3045 = vpop.f32.mrf.mxu0
      %v3046 = vadd.f32 0.0, %v3045
      %v3047 = vpop.f32.mrf.mxu0
      %v3048 = vadd.f32 0.0, %v3047
      %3049 = vmatmul.bf16.gmra.mxu0 %v2985
      %v3050 = vpop.f32.mrf.mxu0
      %v3051 = vadd.f32 0.0, %v3050
      %v3052 = vpop.f32.mrf.mxu0
      %v3053 = vadd.f32 0.0, %v3052
      %3054 = vmatmul.bf16.gmra.mxu0 %v2988
      %v3055 = vpop.f32.mrf.mxu0
      %v3056 = vadd.f32 0.0, %v3055
      %v3057 = vpop.f32.mrf.mxu0
      %v3058 = vadd.f32 0.0, %v3057
      %3059 = vmatmul.bf16.gmra.mxu0 %v2991
      %v3060 = vpop.f32.mrf.mxu0
      %v3061 = vadd.f32 0.0, %v3060
      %v3062 = vpop.f32.mrf.mxu0
      %v3063 = vadd.f32 0.0, %v3062
      %3064 = vmatmul.bf16.gmra.mxu0 %v2994
      %v3065 = vpop.f32.mrf.mxu0
      %v3066 = vadd.f32 0.0, %v3065
      %v3067 = vpop.f32.mrf.mxu0
      %v3068 = vadd.f32 0.0, %v3067
      %3069 = vmatmul.bf16.gmra.mxu0 %v2997
      %v3070 = vpop.f32.mrf.mxu0
      %v3071 = vadd.f32 0.0, %v3070
      %v3072 = vpop.f32.mrf.mxu0
      %v3073 = vadd.f32 0.0, %v3072
      %3074 = vmatmul.bf16.gmra.mxu0 %v3000
      %v3075 = vpop.f32.mrf.mxu0
      %v3076 = vadd.f32 0.0, %v3075
      %v3077 = vpop.f32.mrf.mxu0
      %v3078 = vadd.f32 0.0, %v3077
      %3079 = vmatmul.bf16.gmra.mxu0 %v3003
      %v3080 = vpop.f32.mrf.mxu0
      %v3081 = vadd.f32 0.0, %v3080
      %v3082 = vpop.f32.mrf.mxu0
      %v3083 = vadd.f32 0.0, %v3082
      %3084 = vmatmul.bf16.gmra.mxu0 %v3006
      %v3085 = vpop.f32.mrf.mxu0
      %v3086 = vadd.f32 0.0, %v3085
      %v3087 = vpop.f32.mrf.mxu0
      %v3088 = vadd.f32 0.0, %v3087
      %3089 = vmatmul.bf16.gmra.mxu0 %v3009
      %v3090 = vpop.f32.mrf.mxu0
      %v3091 = vadd.f32 0.0, %v3090
      %v3092 = vpop.f32.mrf.mxu0
      %v3093 = vadd.f32 0.0, %v3092
      %3094 = vmatmul.bf16.gmra.mxu0 %v3012
      %v3095 = vpop.f32.mrf.mxu0
      %v3096 = vadd.f32 0.0, %v3095
      %v3097 = vpop.f32.mrf.mxu0
      %v3098 = vadd.f32 0.0, %v3097
      %3099 = vmatmul.bf16.gmra.mxu0 %v3015
      %v3100 = vpop.f32.mrf.mxu0
      %v3101 = vadd.f32 0.0, %v3100
      %v3102 = vpop.f32.mrf.mxu0
      %v3103 = vadd.f32 0.0, %v3102
      %3104 = vmatmul.bf16.gmra.mxu0 %v3018
      %v3105 = vpop.f32.mrf.mxu0
      %v3106 = vadd.f32 0.0, %v3105
      %v3107 = vpop.f32.mrf.mxu0
      %v3108 = vadd.f32 0.0, %v3107
      %3109 = vmatmul.bf16.gmra.mxu0 %v3021
      %v3110 = vpop.f32.mrf.mxu0
      %v3111 = vadd.f32 0.0, %v3110
      %v3112 = vpop.f32.mrf.mxu0
      %v3113 = vadd.f32 0.0, %v3112
      %3114 = vdwg.mxu0
      %v3115 = vadd.f32 %v2890, %v3036
      %v3116 = vadd.f32 %v2891, %v3038
      %v3117 = vadd.f32 %v2892, %v3041
      %v3118 = vadd.f32 %v2893, %v3043
      %v3119 = vadd.f32 %v2894, %v3046
      %v3120 = vadd.f32 %v2895, %v3048
      %v3121 = vadd.f32 %v2896, %v3051
      %v3122 = vadd.f32 %v2897, %v3053
      %v3123 = vadd.f32 %v2898, %v3056
      %v3124 = vadd.f32 %v2899, %v3058
      %v3125 = vadd.f32 %v2900, %v3061
      %v3126 = vadd.f32 %v2901, %v3063
      %v3127 = vadd.f32 %v2902, %v3066
      %v3128 = vadd.f32 %v2903, %v3068
      %v3129 = vadd.f32 %v2904, %v3071
      %v3130 = vadd.f32 %v2905, %v3073
      %v3131 = vadd.f32 %v2906, %v3076
      %v3132 = vadd.f32 %v2907, %v3078
      %v3133 = vadd.f32 %v2908, %v3081
      %v3134 = vadd.f32 %v2909, %v3083
      %v3135 = vadd.f32 %v2910, %v3086
      %v3136 = vadd.f32 %v2911, %v3088
      %v3137 = vadd.f32 %v2912, %v3091
      %v3138 = vadd.f32 %v2913, %v3093
      %v3139 = vadd.f32 %v2914, %v3096
      %v3140 = vadd.f32 %v2915, %v3098
      %v3141 = vadd.f32 %v2916, %v3101
      %v3142 = vadd.f32 %v2917, %v3103
      %v3143 = vadd.f32 %v2918, %v3106
      %v3144 = vadd.f32 %v2919, %v3108
      %v3145 = vadd.f32 %v2920, %v3111
      %v3146 = vadd.f32 %v2921, %v3113
      %v3147 = vld [vmem:[%s2696 + $0x2] sm:$0xff]
      %v3148 = vld [vmem:[%s2696 + $0xa] sm:$0xff]
      %v3149 = vld [vmem:[%s2696 + $0x1a] sm:$0xff]
      %v3150 = vld [vmem:[%s2696 + $0x22] sm:$0xff]
      %v3151 = vld [vmem:[%s2696 + $0x32] sm:$0xff]
      %v3152 = vld [vmem:[%s2696 + $0x3a] sm:$0xff]
      %v3153 = vld [vmem:[%s2696 + $0x4a] sm:$0xff]
      %v3154 = vld [vmem:[%s2696 + $0x52] sm:$0xff]
      %v3155 = vld [vmem:[%s2696 + $0x62] sm:$0xff]
      %v3156 = vld [vmem:[%s2696 + $0x6a] sm:$0xff]
      %v3157 = vld [vmem:[%s2696 + $0x7a] sm:$0xff]
      %v3158 = vld [vmem:[%s2696 + $0x82] sm:$0xff]
      %v3159 = vld [vmem:[%s2696 + $0x92] sm:$0xff]
      %v3160 = vld [vmem:[%s2696 + $0x9a] sm:$0xff]
      %v3161 = vld [vmem:[%s2696 + $0xaa] sm:$0xff]
      %v3162 = vld [vmem:[%s2696 + $0xb2] sm:$0xff]
      %v3163 = vld [vmem:[%s2696 + $0xc2] sm:$0xff]
      %v3164 = vld [vmem:[%s2696 + $0xca] sm:$0xff]
      %v3165 = vld [vmem:[%s2696 + $0xda] sm:$0xff]
      %v3166 = vld [vmem:[%s2696 + $0xe2] sm:$0xff]
      %v3167 = vld [vmem:[%s2696 + $0xf2] sm:$0xff]
      %v3168 = vld [vmem:[%s2696 + $0xfa] sm:$0xff]
      %v3169 = vld [vmem:[%s2696 + $0x10a] sm:$0xff]
      %v3170 = vld [vmem:[%s2696 + $0x112] sm:$0xff]
      %v3171 = vld [vmem:[%s2696 + $0x122] sm:$0xff]
      %v3172 = vld [vmem:[%s2696 + $0x12a] sm:$0xff]
      %v3173 = vld [vmem:[%s2696 + $0x13a] sm:$0xff]
      %v3174 = vld [vmem:[%s2696 + $0x142] sm:$0xff]
      %v3175 = vld [vmem:[%s2696 + $0x152] sm:$0xff]
      %v3176 = vld [vmem:[%s2696 + $0x15a] sm:$0xff]
      %v3177 = vld [vmem:[%s2696 + $0x16a] sm:$0xff]
      %v3178 = vld [vmem:[%s2696 + $0x172] sm:$0xff]
      %v3179 = vpack.c.bf16 %v3148, %v3147
      %v3180 = vpack.c.bf16 %v3150, %v3149
      %v3181 = vpack.c.bf16 %v3152, %v3151
      %v3182 = vpack.c.bf16 %v3154, %v3153
      %v3183 = vpack.c.bf16 %v3156, %v3155
      %v3184 = vpack.c.bf16 %v3158, %v3157
      %v3185 = vpack.c.bf16 %v3160, %v3159
      %v3186 = vpack.c.bf16 %v3162, %v3161
      %v3187 = vpack.c.bf16 %v3164, %v3163
      %v3188 = vpack.c.bf16 %v3166, %v3165
      %v3189 = vpack.c.bf16 %v3168, %v3167
      %v3190 = vpack.c.bf16 %v3170, %v3169
      %v3191 = vpack.c.bf16 %v3172, %v3171
      %v3192 = vpack.c.bf16 %v3174, %v3173
      %v3193 = vpack.c.bf16 %v3176, %v3175
      %v3194 = vpack.c.bf16 %v3178, %v3177
      %v3195 = vld [vmem:[%s5 + $0x8] sm:$0x1]
      %v3197 = vsel %vm334, %v3179, 0
      %v3200 = vsel %vm334, %v3180, 0
      %v3203 = vsel %vm334, %v3181, 0
      %v3206 = vsel %vm334, %v3182, 0
      %v3209 = vsel %vm334, %v3183, 0
      %v3212 = vsel %vm334, %v3184, 0
      %v3215 = vsel %vm334, %v3185, 0
      %v3218 = vsel %vm334, %v3186, 0
      %v3221 = vsel %vm334, %v3187, 0
      %v3224 = vsel %vm334, %v3188, 0
      %v3227 = vsel %vm334, %v3189, 0
      %v3230 = vsel %vm334, %v3190, 0
      %v3233 = vsel %vm334, %v3191, 0
      %v3236 = vsel %vm334, %v3192, 0
      %v3239 = vsel %vm334, %v3193, 0
      %v3242 = vsel %vm334, %v3194, 0
      %v3245 = vsel %vm1152, %v3195, 0
      %3247 = vmatpush.bf16.msra.mxu0 0
      %3248 = vmatpush.bf16.msra.mxu0 0
      %3249 = vmatpush.bf16.msra.mxu0 0
      %3250 = vmatpush.bf16.msra.mxu0 0
      %3251 = vmatpush.bf16.msra.mxu0 0
      %3252 = vmatpush.bf16.msra.mxu0 0
      %3253 = vmatpush.bf16.msra.mxu0 0
      %3254 = vmatpush.bf16.msra.mxu0 %v3245
      %3255 = vmatmul.bf16.gmra.mxu0 %v3197
      %v3256 = vpop.f32.mrf.mxu0
      %v3257 = vadd.f32 0.0, %v3256
      %v3258 = vpop.f32.mrf.mxu0
      %v3259 = vadd.f32 0.0, %v3258
      %3260 = vmatmul.bf16.gmra.mxu0 %v3200
      %v3261 = vpop.f32.mrf.mxu0
      %v3262 = vadd.f32 0.0, %v3261
      %v3263 = vpop.f32.mrf.mxu0
      %v3264 = vadd.f32 0.0, %v3263
      %3265 = vmatmul.bf16.gmra.mxu0 %v3203
      %v3266 = vpop.f32.mrf.mxu0
      %v3267 = vadd.f32 0.0, %v3266
      %v3268 = vpop.f32.mrf.mxu0
      %v3269 = vadd.f32 0.0, %v3268
      %3270 = vmatmul.bf16.gmra.mxu0 %v3206
      %v3271 = vpop.f32.mrf.mxu0
      %v3272 = vadd.f32 0.0, %v3271
      %v3273 = vpop.f32.mrf.mxu0
      %v3274 = vadd.f32 0.0, %v3273
      %3275 = vmatmul.bf16.gmra.mxu0 %v3209
      %v3276 = vpop.f32.mrf.mxu0
      %v3277 = vadd.f32 0.0, %v3276
      %v3278 = vpop.f32.mrf.mxu0
      %v3279 = vadd.f32 0.0, %v3278
      %3280 = vmatmul.bf16.gmra.mxu0 %v3212
      %v3281 = vpop.f32.mrf.mxu0
      %v3282 = vadd.f32 0.0, %v3281
      %v3283 = vpop.f32.mrf.mxu0
      %v3284 = vadd.f32 0.0, %v3283
      %3285 = vmatmul.bf16.gmra.mxu0 %v3215
      %v3286 = vpop.f32.mrf.mxu0
      %v3287 = vadd.f32 0.0, %v3286
      %v3288 = vpop.f32.mrf.mxu0
      %v3289 = vadd.f32 0.0, %v3288
      %3290 = vmatmul.bf16.gmra.mxu0 %v3218
      %v3291 = vpop.f32.mrf.mxu0
      %v3292 = vadd.f32 0.0, %v3291
      %v3293 = vpop.f32.mrf.mxu0
      %v3294 = vadd.f32 0.0, %v3293
      %3295 = vmatmul.bf16.gmra.mxu0 %v3221
      %v3296 = vpop.f32.mrf.mxu0
      %v3297 = vadd.f32 0.0, %v3296
      %v3298 = vpop.f32.mrf.mxu0
      %v3299 = vadd.f32 0.0, %v3298
      %3300 = vmatmul.bf16.gmra.mxu0 %v3224
      %v3301 = vpop.f32.mrf.mxu0
      %v3302 = vadd.f32 0.0, %v3301
      %v3303 = vpop.f32.mrf.mxu0
      %v3304 = vadd.f32 0.0, %v3303
      %3305 = vmatmul.bf16.gmra.mxu0 %v3227
      %v3306 = vpop.f32.mrf.mxu0
      %v3307 = vadd.f32 0.0, %v3306
      %v3308 = vpop.f32.mrf.mxu0
      %v3309 = vadd.f32 0.0, %v3308
      %3310 = vmatmul.bf16.gmra.mxu0 %v3230
      %v3311 = vpop.f32.mrf.mxu0
      %v3312 = vadd.f32 0.0, %v3311
      %v3313 = vpop.f32.mrf.mxu0
      %v3314 = vadd.f32 0.0, %v3313
      %3315 = vmatmul.bf16.gmra.mxu0 %v3233
      %v3316 = vpop.f32.mrf.mxu0
      %v3317 = vadd.f32 0.0, %v3316
      %v3318 = vpop.f32.mrf.mxu0
      %v3319 = vadd.f32 0.0, %v3318
      %3320 = vmatmul.bf16.gmra.mxu0 %v3236
      %v3321 = vpop.f32.mrf.mxu0
      %v3322 = vadd.f32 0.0, %v3321
      %v3323 = vpop.f32.mrf.mxu0
      %v3324 = vadd.f32 0.0, %v3323
      %3325 = vmatmul.bf16.gmra.mxu0 %v3239
      %v3326 = vpop.f32.mrf.mxu0
      %v3327 = vadd.f32 0.0, %v3326
      %v3328 = vpop.f32.mrf.mxu0
      %v3329 = vadd.f32 0.0, %v3328
      %3330 = vmatmul.bf16.gmra.mxu0 %v3242
      %v3331 = vpop.f32.mrf.mxu0
      %v3332 = vadd.f32 0.0, %v3331
      %v3333 = vpop.f32.mrf.mxu0
      %v3334 = vadd.f32 0.0, %v3333
      %3335 = vdwg.mxu0
      %v3336 = vadd.f32 %v3115, %v3257
      %v3337 = vadd.f32 %v3116, %v3259
      %v3338 = vadd.f32 %v3117, %v3262
      %v3339 = vadd.f32 %v3118, %v3264
      %v3340 = vadd.f32 %v3119, %v3267
      %v3341 = vadd.f32 %v3120, %v3269
      %v3342 = vadd.f32 %v3121, %v3272
      %v3343 = vadd.f32 %v3122, %v3274
      %v3344 = vadd.f32 %v3123, %v3277
      %v3345 = vadd.f32 %v3124, %v3279
      %v3346 = vadd.f32 %v3125, %v3282
      %v3347 = vadd.f32 %v3126, %v3284
      %v3348 = vadd.f32 %v3127, %v3287
      %v3349 = vadd.f32 %v3128, %v3289
      %v3350 = vadd.f32 %v3129, %v3292
      %v3351 = vadd.f32 %v3130, %v3294
      %v3352 = vadd.f32 %v3131, %v3297
      %v3353 = vadd.f32 %v3132, %v3299
      %v3354 = vadd.f32 %v3133, %v3302
      %v3355 = vadd.f32 %v3134, %v3304
      %v3356 = vadd.f32 %v3135, %v3307
      %v3357 = vadd.f32 %v3136, %v3309
      %v3358 = vadd.f32 %v3137, %v3312
      %v3359 = vadd.f32 %v3138, %v3314
      %v3360 = vadd.f32 %v3139, %v3317
      %v3361 = vadd.f32 %v3140, %v3319
      %v3362 = vadd.f32 %v3141, %v3322
      %v3363 = vadd.f32 %v3142, %v3324
      %v3364 = vadd.f32 %v3143, %v3327
      %v3365 = vadd.f32 %v3144, %v3329
      %v3366 = vadd.f32 %v3145, %v3332
      %v3367 = vadd.f32 %v3146, %v3334
      %v3368 = vld [vmem:[%s6] sm:$0x1]
      %v3369 = vperm.slane %v3368, 0
      %v3370 = vadd.f32 %v3336, %v3369
      %v3371 = vadd.f32 %v3337, %v3369
      %v3372 = vadd.f32 %v3338, %v3369
      %v3373 = vadd.f32 %v3339, %v3369
      %v3374 = vadd.f32 %v3340, %v3369
      %v3375 = vadd.f32 %v3341, %v3369
      %v3376 = vadd.f32 %v3342, %v3369
      %v3377 = vadd.f32 %v3343, %v3369
      %v3378 = vadd.f32 %v3344, %v3369
      %v3379 = vadd.f32 %v3345, %v3369
      %v3380 = vadd.f32 %v3346, %v3369
      %v3381 = vadd.f32 %v3347, %v3369
      %v3382 = vadd.f32 %v3348, %v3369
      %v3383 = vadd.f32 %v3349, %v3369
      %v3384 = vadd.f32 %v3350, %v3369
      %v3385 = vadd.f32 %v3351, %v3369
      %v3386 = vadd.f32 %v3352, %v3369
      %v3387 = vadd.f32 %v3353, %v3369
      %v3388 = vadd.f32 %v3354, %v3369
      %v3389 = vadd.f32 %v3355, %v3369
      %v3390 = vadd.f32 %v3356, %v3369
      %v3391 = vadd.f32 %v3357, %v3369
      %v3392 = vadd.f32 %v3358, %v3369
      %v3393 = vadd.f32 %v3359, %v3369
      %v3394 = vadd.f32 %v3360, %v3369
      %v3395 = vadd.f32 %v3361, %v3369
      %v3396 = vadd.f32 %v3362, %v3369
      %v3397 = vadd.f32 %v3363, %v3369
      %v3398 = vadd.f32 %v3364, %v3369
      %v3399 = vadd.f32 %v3365, %v3369
      %v3400 = vadd.f32 %v3366, %v3369
      %v3401 = vadd.f32 %v3367, %v3369
      %v3402 = vsub.f32 0.0, %v3370
      %v3403 = vsub.f32 0.0, %v3371
      %v3404 = vsub.f32 0.0, %v3372
      %v3405 = vsub.f32 0.0, %v3373
      %v3406 = vsub.f32 0.0, %v3374
      %v3407 = vsub.f32 0.0, %v3375
      %v3408 = vsub.f32 0.0, %v3376
      %v3409 = vsub.f32 0.0, %v3377
      %v3410 = vsub.f32 0.0, %v3378
      %v3411 = vsub.f32 0.0, %v3379
      %v3412 = vsub.f32 0.0, %v3380
      %v3413 = vsub.f32 0.0, %v3381
      %v3414 = vsub.f32 0.0, %v3382
      %v3415 = vsub.f32 0.0, %v3383
      %v3416 = vsub.f32 0.0, %v3384
      %v3417 = vsub.f32 0.0, %v3385
      %v3418 = vsub.f32 0.0, %v3386
      %v3419 = vsub.f32 0.0, %v3387
      %v3420 = vsub.f32 0.0, %v3388
      %v3421 = vsub.f32 0.0, %v3389
      %v3422 = vsub.f32 0.0, %v3390
      %v3423 = vsub.f32 0.0, %v3391
      %v3424 = vsub.f32 0.0, %v3392
      %v3425 = vsub.f32 0.0, %v3393
      %v3426 = vsub.f32 0.0, %v3394
      %v3427 = vsub.f32 0.0, %v3395
      %v3428 = vsub.f32 0.0, %v3396
      %v3429 = vsub.f32 0.0, %v3397
      %v3430 = vsub.f32 0.0, %v3398
      %v3431 = vsub.f32 0.0, %v3399
      %v3432 = vsub.f32 0.0, %v3400
      %v3433 = vsub.f32 0.0, %v3401
      %v3434 = vmul.f32 %v3402, 1.442695
      %v3435 = vpow.pop %v3434
      %v3436 = vmul.f32 %v3403, 1.442695
      %v3437 = vpow.pop %v3436
      %v3438 = vmul.f32 %v3404, 1.442695
      %v3439 = vpow.pop %v3438
      %v3440 = vmul.f32 %v3405, 1.442695
      %v3441 = vpow.pop %v3440
      %v3442 = vmul.f32 %v3406, 1.442695
      %v3443 = vpow.pop %v3442
      %v3444 = vmul.f32 %v3407, 1.442695
      %v3445 = vpow.pop %v3444
      %v3446 = vmul.f32 %v3408, 1.442695
      %v3447 = vpow.pop %v3446
      %v3448 = vmul.f32 %v3409, 1.442695
      %v3449 = vpow.pop %v3448
      %v3450 = vmul.f32 %v3410, 1.442695
      %v3451 = vpow.pop %v3450
      %v3452 = vmul.f32 %v3411, 1.442695
      %v3453 = vpow.pop %v3452
      %v3454 = vmul.f32 %v3412, 1.442695
      %v3455 = vpow.pop %v3454
      %v3456 = vmul.f32 %v3413, 1.442695
      %v3457 = vpow.pop %v3456
      %v3458 = vmul.f32 %v3414, 1.442695
      %v3459 = vpow.pop %v3458
      %v3460 = vmul.f32 %v3415, 1.442695
      %v3461 = vpow.pop %v3460
      %v3462 = vmul.f32 %v3416, 1.442695
      %v3463 = vpow.pop %v3462
      %v3464 = vmul.f32 %v3417, 1.442695
      %v3465 = vpow.pop %v3464
      %v3466 = vmul.f32 %v3418, 1.442695
      %v3467 = vpow.pop %v3466
      %v3468 = vmul.f32 %v3419, 1.442695
      %v3469 = vpow.pop %v3468
      %v3470 = vmul.f32 %v3420, 1.442695
      %v3471 = vpow.pop %v3470
      %v3472 = vmul.f32 %v3421, 1.442695
      %v3473 = vpow.pop %v3472
      %v3474 = vmul.f32 %v3422, 1.442695
      %v3475 = vpow.pop %v3474
      %v3476 = vmul.f32 %v3423, 1.442695
      %v3477 = vpow.pop %v3476
      %v3478 = vmul.f32 %v3424, 1.442695
      %v3479 = vpow.pop %v3478
      %v3480 = vmul.f32 %v3425, 1.442695
      %v3481 = vpow.pop %v3480
      %v3482 = vmul.f32 %v3426, 1.442695
      %v3483 = vpow.pop %v3482
      %v3484 = vmul.f32 %v3427, 1.442695
      %v3485 = vpow.pop %v3484
      %v3486 = vmul.f32 %v3428, 1.442695
      %v3487 = vpow.pop %v3486
      %v3488 = vmul.f32 %v3429, 1.442695
      %v3489 = vpow.pop %v3488
      %v3490 = vmul.f32 %v3430, 1.442695
      %v3491 = vpow.pop %v3490
      %v3492 = vmul.f32 %v3431, 1.442695
      %v3493 = vpow.pop %v3492
      %v3494 = vmul.f32 %v3432, 1.442695
      %v3495 = vpow.pop %v3494
      %v3496 = vmul.f32 %v3433, 1.442695
      %v3497 = vpow.pop %v3496
      %v3498 = vadd.f32 %v3435, 1.0
      %v3499 = vadd.f32 %v3437, 1.0
      %v3500 = vadd.f32 %v3439, 1.0
      %v3501 = vadd.f32 %v3441, 1.0
      %v3502 = vadd.f32 %v3443, 1.0
      %v3503 = vadd.f32 %v3445, 1.0
      %v3504 = vadd.f32 %v3447, 1.0
      %v3505 = vadd.f32 %v3449, 1.0
      %v3506 = vadd.f32 %v3451, 1.0
      %v3507 = vadd.f32 %v3453, 1.0
      %v3508 = vadd.f32 %v3455, 1.0
      %v3509 = vadd.f32 %v3457, 1.0
      %v3510 = vadd.f32 %v3459, 1.0
      %v3511 = vadd.f32 %v3461, 1.0
      %v3512 = vadd.f32 %v3463, 1.0
      %v3513 = vadd.f32 %v3465, 1.0
      %v3514 = vadd.f32 %v3467, 1.0
      %v3515 = vadd.f32 %v3469, 1.0
      %v3516 = vadd.f32 %v3471, 1.0
      %v3517 = vadd.f32 %v3473, 1.0
      %v3518 = vadd.f32 %v3475, 1.0
      %v3519 = vadd.f32 %v3477, 1.0
      %v3520 = vadd.f32 %v3479, 1.0
      %v3521 = vadd.f32 %v3481, 1.0
      %v3522 = vadd.f32 %v3483, 1.0
      %v3523 = vadd.f32 %v3485, 1.0
      %v3524 = vadd.f32 %v3487, 1.0
      %v3525 = vadd.f32 %v3489, 1.0
      %v3526 = vadd.f32 %v3491, 1.0
      %v3527 = vadd.f32 %v3493, 1.0
      %v3528 = vadd.f32 %v3495, 1.0
      %v3529 = vadd.f32 %v3497, 1.0
      %v3530 = vrcp.pop %v3498
      %v3531 = vrcp.pop %v3499
      %v3532 = vrcp.pop %v3500
      %v3533 = vrcp.pop %v3501
      %v3534 = vrcp.pop %v3502
      %v3535 = vrcp.pop %v3503
      %v3536 = vrcp.pop %v3504
      %v3537 = vrcp.pop %v3505
      %v3538 = vrcp.pop %v3506
      %v3539 = vrcp.pop %v3507
      %v3540 = vrcp.pop %v3508
      %v3541 = vrcp.pop %v3509
      %v3542 = vrcp.pop %v3510
      %v3543 = vrcp.pop %v3511
      %v3544 = vrcp.pop %v3512
      %v3545 = vrcp.pop %v3513
      %v3546 = vrcp.pop %v3514
      %v3547 = vrcp.pop %v3515
      %v3548 = vrcp.pop %v3516
      %v3549 = vrcp.pop %v3517
      %v3550 = vrcp.pop %v3518
      %v3551 = vrcp.pop %v3519
      %v3552 = vrcp.pop %v3520
      %v3553 = vrcp.pop %v3521
      %v3554 = vrcp.pop %v3522
      %v3555 = vrcp.pop %v3523
      %v3556 = vrcp.pop %v3524
      %v3557 = vrcp.pop %v3525
      %v3558 = vrcp.pop %v3526
      %v3559 = vrcp.pop %v3527
      %v3560 = vrcp.pop %v3528
      %v3561 = vrcp.pop %v3529
      %v3562 = vmul.f32 %v3370, %v3530
      %v3563 = vmul.f32 %v3371, %v3531
      %v3564 = vmul.f32 %v3372, %v3532
      %v3565 = vmul.f32 %v3373, %v3533
      %v3566 = vmul.f32 %v3374, %v3534
      %v3567 = vmul.f32 %v3375, %v3535
      %v3568 = vmul.f32 %v3376, %v3536
      %v3569 = vmul.f32 %v3377, %v3537
      %v3570 = vmul.f32 %v3378, %v3538
      %v3571 = vmul.f32 %v3379, %v3539
      %v3572 = vmul.f32 %v3380, %v3540
      %v3573 = vmul.f32 %v3381, %v3541
      %v3574 = vmul.f32 %v3382, %v3542
      %v3575 = vmul.f32 %v3383, %v3543
      %v3576 = vmul.f32 %v3384, %v3544
      %v3577 = vmul.f32 %v3385, %v3545
      %v3578 = vmul.f32 %v3386, %v3546
      %v3579 = vmul.f32 %v3387, %v3547
      %v3580 = vmul.f32 %v3388, %v3548
      %v3581 = vmul.f32 %v3389, %v3549
      %v3582 = vmul.f32 %v3390, %v3550
      %v3583 = vmul.f32 %v3391, %v3551
      %v3584 = vmul.f32 %v3392, %v3552
      %v3585 = vmul.f32 %v3393, %v3553
      %v3586 = vmul.f32 %v3394, %v3554
      %v3587 = vmul.f32 %v3395, %v3555
      %v3588 = vmul.f32 %v3396, %v3556
      %v3589 = vmul.f32 %v3397, %v3557
      %v3590 = vmul.f32 %v3398, %v3558
      %v3591 = vmul.f32 %v3399, %v3559
      %v3592 = vmul.f32 %v3400, %v3560
      %v3593 = vmul.f32 %v3401, %v3561
      %3594 = vst.msk [vmem:[%s1385 + $0x1] sm:$0xff] %vm334, %v3562
      %3595 = vst.msk [vmem:[%s1385 + $0x9] sm:$0xff] %vm334, %v3563
      %3596 = vst.msk [vmem:[%s1385 + $0x19] sm:$0xff] %vm334, %v3564
      %3597 = vst.msk [vmem:[%s1385 + $0x21] sm:$0xff] %vm334, %v3565
      %3598 = vst.msk [vmem:[%s1385 + $0x31] sm:$0xff] %vm334, %v3566
      %3599 = vst.msk [vmem:[%s1385 + $0x39] sm:$0xff] %vm334, %v3567
      %3600 = vst.msk [vmem:[%s1385 + $0x49] sm:$0xff] %vm334, %v3568
      %3601 = vst.msk [vmem:[%s1385 + $0x51] sm:$0xff] %vm334, %v3569
      %3602 = vst.msk [vmem:[%s1385 + $0x61] sm:$0xff] %vm334, %v3570
      %3603 = vst.msk [vmem:[%s1385 + $0x69] sm:$0xff] %vm334, %v3571
      %3604 = vst.msk [vmem:[%s1385 + $0x79] sm:$0xff] %vm334, %v3572
      %3605 = vst.msk [vmem:[%s1385 + $0x81] sm:$0xff] %vm334, %v3573
      %3606 = vst.msk [vmem:[%s1385 + $0x91] sm:$0xff] %vm334, %v3574
      %3607 = vst.msk [vmem:[%s1385 + $0x99] sm:$0xff] %vm334, %v3575
      %3608 = vst.msk [vmem:[%s1385 + $0xa9] sm:$0xff] %vm334, %v3576
      %3609 = vst.msk [vmem:[%s1385 + $0xb1] sm:$0xff] %vm334, %v3577
      %3610 = vst.msk [vmem:[%s1385 + $0xc1] sm:$0xff] %vm334, %v3578
      %3611 = vst.msk [vmem:[%s1385 + $0xc9] sm:$0xff] %vm334, %v3579
      %3612 = vst.msk [vmem:[%s1385 + $0xd9] sm:$0xff] %vm334, %v3580
      %3613 = vst.msk [vmem:[%s1385 + $0xe1] sm:$0xff] %vm334, %v3581
      %3614 = vst.msk [vmem:[%s1385 + $0xf1] sm:$0xff] %vm334, %v3582
      %3615 = vst.msk [vmem:[%s1385 + $0xf9] sm:$0xff] %vm334, %v3583
      %3616 = vst.msk [vmem:[%s1385 + $0x109] sm:$0xff] %vm334, %v3584
      %3617 = vst.msk [vmem:[%s1385 + $0x111] sm:$0xff] %vm334, %v3585
      %3618 = vst.msk [vmem:[%s1385 + $0x121] sm:$0xff] %vm334, %v3586
      %3619 = vst.msk [vmem:[%s1385 + $0x129] sm:$0xff] %vm334, %v3587
      %3620 = vst.msk [vmem:[%s1385 + $0x139] sm:$0xff] %vm334, %v3588
      %3621 = vst.msk [vmem:[%s1385 + $0x141] sm:$0xff] %vm334, %v3589
      %3622 = vst.msk [vmem:[%s1385 + $0x151] sm:$0xff] %vm334, %v3590
      %3623 = vst.msk [vmem:[%s1385 + $0x159] sm:$0xff] %vm334, %v3591
      %3624 = vst.msk [vmem:[%s1385 + $0x169] sm:$0xff] %vm334, %v3592
      %3625 = vst.msk [vmem:[%s1385 + $0x171] sm:$0xff] %vm334, %v3593
      %v3626 = vld [vmem:[#allocation2] sm:$0xff]
      %v3627 = vld [vmem:[#allocation2 + $0x8] sm:$0xff]
      %v3628 = vld [vmem:[#allocation2 + $0x18] sm:$0xff]
      %v3629 = vld [vmem:[#allocation2 + $0x20] sm:$0xff]
      %v3630 = vld [vmem:[#allocation2 + $0x30] sm:$0xff]
      %v3631 = vld [vmem:[#allocation2 + $0x38] sm:$0xff]
      %v3632 = vld [vmem:[#allocation2 + $0x48] sm:$0xff]
      %v3633 = vld [vmem:[#allocation2 + $0x50] sm:$0xff]
      %v3634 = vld [vmem:[#allocation2 + $0x60] sm:$0xff]
      %v3635 = vld [vmem:[#allocation2 + $0x68] sm:$0xff]
      %v3636 = vld [vmem:[#allocation2 + $0x78] sm:$0xff]
      %v3637 = vld [vmem:[#allocation2 + $0x80] sm:$0xff]
      %v3638 = vld [vmem:[#allocation2 + $0x90] sm:$0xff]
      %v3639 = vld [vmem:[#allocation2 + $0x98] sm:$0xff]
      %v3640 = vld [vmem:[#allocation2 + $0xa8] sm:$0xff]
      %v3641 = vld [vmem:[#allocation2 + $0xb0] sm:$0xff]
      %v3642 = vld [vmem:[#allocation2 + $0xc0] sm:$0xff]
      %v3643 = vld [vmem:[#allocation2 + $0xc8] sm:$0xff]
      %v3644 = vld [vmem:[#allocation2 + $0xd8] sm:$0xff]
      %v3645 = vld [vmem:[#allocation2 + $0xe0] sm:$0xff]
      %v3646 = vld [vmem:[#allocation2 + $0xf0] sm:$0xff]
      %v3647 = vld [vmem:[#allocation2 + $0xf8] sm:$0xff]
      %v3648 = vld [vmem:[#allocation2 + $0x108] sm:$0xff]
      %v3649 = vld [vmem:[#allocation2 + $0x110] sm:$0xff]
      %v3650 = vld [vmem:[#allocation2 + $0x120] sm:$0xff]
      %v3651 = vld [vmem:[#allocation2 + $0x128] sm:$0xff]
      %v3652 = vld [vmem:[#allocation2 + $0x138] sm:$0xff]
      %v3653 = vld [vmem:[#allocation2 + $0x140] sm:$0xff]
      %v3654 = vld [vmem:[#allocation2 + $0x150] sm:$0xff]
      %v3655 = vld [vmem:[#allocation2 + $0x158] sm:$0xff]
      %v3656 = vld [vmem:[#allocation2 + $0x168] sm:$0xff]
      %v3657 = vld [vmem:[#allocation2 + $0x170] sm:$0xff]
      %v3658 = vpack.c.bf16 %v3627, %v3626
      %v3659 = vpack.c.bf16 %v3629, %v3628
      %v3660 = vpack.c.bf16 %v3631, %v3630
      %v3661 = vpack.c.bf16 %v3633, %v3632
      %v3662 = vpack.c.bf16 %v3635, %v3634
      %v3663 = vpack.c.bf16 %v3637, %v3636
      %v3664 = vpack.c.bf16 %v3639, %v3638
      %v3665 = vpack.c.bf16 %v3641, %v3640
      %v3666 = vpack.c.bf16 %v3643, %v3642
      %v3667 = vpack.c.bf16 %v3645, %v3644
      %v3668 = vpack.c.bf16 %v3647, %v3646
      %v3669 = vpack.c.bf16 %v3649, %v3648
      %v3670 = vpack.c.bf16 %v3651, %v3650
      %v3671 = vpack.c.bf16 %v3653, %v3652
      %v3672 = vpack.c.bf16 %v3655, %v3654
      %v3673 = vpack.c.bf16 %v3657, %v3656
      %v3674 = vld [vmem:[%s5 + $0x8] sm:$0x2]
      %v3675 = vld [vmem:[#allocation2 + $0x1] sm:$0xff]
      %v3676 = vld [vmem:[#allocation2 + $0x9] sm:$0xff]
      %v3677 = vld [vmem:[#allocation2 + $0x19] sm:$0xff]
      %v3678 = vld [vmem:[#allocation2 + $0x21] sm:$0xff]
      %v3679 = vld [vmem:[#allocation2 + $0x31] sm:$0xff]
      %v3680 = vld [vmem:[#allocation2 + $0x39] sm:$0xff]
      %v3681 = vld [vmem:[#allocation2 + $0x49] sm:$0xff]
      %v3682 = vld [vmem:[#allocation2 + $0x51] sm:$0xff]
      %v3683 = vld [vmem:[#allocation2 + $0x61] sm:$0xff]
      %v3684 = vld [vmem:[#allocation2 + $0x69] sm:$0xff]
      %v3685 = vld [vmem:[#allocation2 + $0x79] sm:$0xff]
      %v3686 = vld [vmem:[#allocation2 + $0x81] sm:$0xff]
      %v3687 = vld [vmem:[#allocation2 + $0x91] sm:$0xff]
      %v3688 = vld [vmem:[#allocation2 + $0x99] sm:$0xff]
      %v3689 = vld [vmem:[#allocation2 + $0xa9] sm:$0xff]
      %v3690 = vld [vmem:[#allocation2 + $0xb1] sm:$0xff]
      %v3691 = vld [vmem:[#allocation2 + $0xc1] sm:$0xff]
      %v3692 = vld [vmem:[#allocation2 + $0xc9] sm:$0xff]
      %v3693 = vld [vmem:[#allocation2 + $0xd9] sm:$0xff]
      %v3694 = vld [vmem:[#allocation2 + $0xe1] sm:$0xff]
      %v3695 = vld [vmem:[#allocation2 + $0xf1] sm:$0xff]
      %v3696 = vld [vmem:[#allocation2 + $0xf9] sm:$0xff]
      %v3697 = vld [vmem:[#allocation2 + $0x109] sm:$0xff]
      %v3698 = vld [vmem:[#allocation2 + $0x111] sm:$0xff]
      %v3699 = vld [vmem:[#allocation2 + $0x121] sm:$0xff]
      %v3700 = vld [vmem:[#allocation2 + $0x129] sm:$0xff]
      %v3701 = vld [vmem:[#allocation2 + $0x139] sm:$0xff]
      %v3702 = vld [vmem:[#allocation2 + $0x141] sm:$0xff]
      %v3703 = vld [vmem:[#allocation2 + $0x151] sm:$0xff]
      %v3704 = vld [vmem:[#allocation2 + $0x159] sm:$0xff]
      %v3705 = vld [vmem:[#allocation2 + $0x169] sm:$0xff]
      %v3706 = vld [vmem:[#allocation2 + $0x171] sm:$0xff]
      %v3707 = vpack.c.bf16 %v3676, %v3675
      %v3708 = vpack.c.bf16 %v3678, %v3677
      %v3709 = vpack.c.bf16 %v3680, %v3679
      %v3710 = vpack.c.bf16 %v3682, %v3681
      %v3711 = vpack.c.bf16 %v3684, %v3683
      %v3712 = vpack.c.bf16 %v3686, %v3685
      %v3713 = vpack.c.bf16 %v3688, %v3687
      %v3714 = vpack.c.bf16 %v3690, %v3689
      %v3715 = vpack.c.bf16 %v3692, %v3691
      %v3716 = vpack.c.bf16 %v3694, %v3693
      %v3717 = vpack.c.bf16 %v3696, %v3695
      %v3718 = vpack.c.bf16 %v3698, %v3697
      %v3719 = vpack.c.bf16 %v3700, %v3699
      %v3720 = vpack.c.bf16 %v3702, %v3701
      %v3721 = vpack.c.bf16 %v3704, %v3703
      %v3722 = vpack.c.bf16 %v3706, %v3705
      %v3723 = vld [vmem:[%s5 + $0x8] sm:$0x4]
      %v3725 = vunpack.c.l.b16 %v3723
      %v3726 = vpack.c.b16 %v3725, %v3725
      %v3727 = vrot.slane %v3726, 2
      %v3729 = vsel %vm334, %v3707, 0
      %v3732 = vsel %vm334, %v3708, 0
      %v3735 = vsel %vm334, %v3709, 0
      %v3738 = vsel %vm334, %v3710, 0
      %v3741 = vsel %vm334, %v3711, 0
      %v3744 = vsel %vm334, %v3712, 0
      %v3747 = vsel %vm334, %v3713, 0
      %v3750 = vsel %vm334, %v3714, 0
      %v3753 = vsel %vm334, %v3715, 0
      %v3756 = vsel %vm334, %v3716, 0
      %v3759 = vsel %vm334, %v3717, 0
      %v3762 = vsel %vm334, %v3718, 0
      %v3765 = vsel %vm334, %v3719, 0
      %v3768 = vsel %vm334, %v3720, 0
      %v3771 = vsel %vm334, %v3721, 0
      %v3774 = vsel %vm334, %v3722, 0
      %v3777 = vsel %vm1152, %v3727, 0
      %3779 = vmatpush.bf16.msra.mxu0 0
      %3780 = vmatpush.bf16.msra.mxu0 0
      %3781 = vmatpush.bf16.msra.mxu0 0
      %3782 = vmatpush.bf16.msra.mxu0 0
      %3783 = vmatpush.bf16.msra.mxu0 0
      %3784 = vmatpush.bf16.msra.mxu0 0
      %3785 = vmatpush.bf16.msra.mxu0 0
      %3786 = vmatpush.bf16.msra.mxu0 %v3777
      %3787 = vmatmul.bf16.gmra.mxu0 %v3729
      %v3788 = vpop.f32.mrf.mxu0
      %v3789 = vadd.f32 0.0, %v3788
      %v3790 = vpop.f32.mrf.mxu0
      %v3791 = vadd.f32 0.0, %v3790
      %3792 = vmatmul.bf16.gmra.mxu0 %v3732
      %v3793 = vpop.f32.mrf.mxu0
      %v3794 = vadd.f32 0.0, %v3793
      %v3795 = vpop.f32.mrf.mxu0
      %v3796 = vadd.f32 0.0, %v3795
      %3797 = vmatmul.bf16.gmra.mxu0 %v3735
      %v3798 = vpop.f32.mrf.mxu0
      %v3799 = vadd.f32 0.0, %v3798
      %v3800 = vpop.f32.mrf.mxu0
      %v3801 = vadd.f32 0.0, %v3800
      %3802 = vmatmul.bf16.gmra.mxu0 %v3738
      %v3803 = vpop.f32.mrf.mxu0
      %v3804 = vadd.f32 0.0, %v3803
      %v3805 = vpop.f32.mrf.mxu0
      %v3806 = vadd.f32 0.0, %v3805
      %3807 = vmatmul.bf16.gmra.mxu0 %v3741
      %v3808 = vpop.f32.mrf.mxu0
      %v3809 = vadd.f32 0.0, %v3808
      %v3810 = vpop.f32.mrf.mxu0
      %v3811 = vadd.f32 0.0, %v3810
      %3812 = vmatmul.bf16.gmra.mxu0 %v3744
      %v3813 = vpop.f32.mrf.mxu0
      %v3814 = vadd.f32 0.0, %v3813
      %v3815 = vpop.f32.mrf.mxu0
      %v3816 = vadd.f32 0.0, %v3815
      %3817 = vmatmul.bf16.gmra.mxu0 %v3747
      %v3818 = vpop.f32.mrf.mxu0
      %v3819 = vadd.f32 0.0, %v3818
      %v3820 = vpop.f32.mrf.mxu0
      %v3821 = vadd.f32 0.0, %v3820
      %3822 = vmatmul.bf16.gmra.mxu0 %v3750
      %v3823 = vpop.f32.mrf.mxu0
      %v3824 = vadd.f32 0.0, %v3823
      %v3825 = vpop.f32.mrf.mxu0
      %v3826 = vadd.f32 0.0, %v3825
      %3827 = vmatmul.bf16.gmra.mxu0 %v3753
      %v3828 = vpop.f32.mrf.mxu0
      %v3829 = vadd.f32 0.0, %v3828
      %v3830 = vpop.f32.mrf.mxu0
      %v3831 = vadd.f32 0.0, %v3830
      %3832 = vmatmul.bf16.gmra.mxu0 %v3756
      %v3833 = vpop.f32.mrf.mxu0
      %v3834 = vadd.f32 0.0, %v3833
      %v3835 = vpop.f32.mrf.mxu0
      %v3836 = vadd.f32 0.0, %v3835
      %3837 = vmatmul.bf16.gmra.mxu0 %v3759
      %v3838 = vpop.f32.mrf.mxu0
      %v3839 = vadd.f32 0.0, %v3838
      %v3840 = vpop.f32.mrf.mxu0
      %v3841 = vadd.f32 0.0, %v3840
      %3842 = vmatmul.bf16.gmra.mxu0 %v3762
      %v3843 = vpop.f32.mrf.mxu0
      %v3844 = vadd.f32 0.0, %v3843
      %v3845 = vpop.f32.mrf.mxu0
      %v3846 = vadd.f32 0.0, %v3845
      %3847 = vmatmul.bf16.gmra.mxu0 %v3765
      %v3848 = vpop.f32.mrf.mxu0
      %v3849 = vadd.f32 0.0, %v3848
      %v3850 = vpop.f32.mrf.mxu0
      %v3851 = vadd.f32 0.0, %v3850
      %3852 = vmatmul.bf16.gmra.mxu0 %v3768
      %v3853 = vpop.f32.mrf.mxu0
      %v3854 = vadd.f32 0.0, %v3853
      %v3855 = vpop.f32.mrf.mxu0
      %v3856 = vadd.f32 0.0, %v3855
      %3857 = vmatmul.bf16.gmra.mxu0 %v3771
      %v3858 = vpop.f32.mrf.mxu0
      %v3859 = vadd.f32 0.0, %v3858
      %v3860 = vpop.f32.mrf.mxu0
      %v3861 = vadd.f32 0.0, %v3860
      %3862 = vmatmul.bf16.gmra.mxu0 %v3774
      %v3863 = vpop.f32.mrf.mxu0
      %v3864 = vadd.f32 0.0, %v3863
      %v3865 = vpop.f32.mrf.mxu0
      %v3866 = vadd.f32 0.0, %v3865
      %3867 = vdwg.mxu0
      %v3869 = vunpack.c.l.b16 %v3674
      %v3870 = vpack.c.b16 %v3869, %v3869
      %v3871 = vrot.slane %v3870, 1
      %v3873 = vsel %vm334, %v3658, 0
      %v3876 = vsel %vm334, %v3659, 0
      %v3879 = vsel %vm334, %v3660, 0
      %v3882 = vsel %vm334, %v3661, 0
      %v3885 = vsel %vm334, %v3662, 0
      %v3888 = vsel %vm334, %v3663, 0
      %v3891 = vsel %vm334, %v3664, 0
      %v3894 = vsel %vm334, %v3665, 0
      %v3897 = vsel %vm334, %v3666, 0
      %v3900 = vsel %vm334, %v3667, 0
      %v3903 = vsel %vm334, %v3668, 0
      %v3906 = vsel %vm334, %v3669, 0
      %v3909 = vsel %vm334, %v3670, 0
      %v3912 = vsel %vm334, %v3671, 0
      %v3915 = vsel %vm334, %v3672, 0
      %v3918 = vsel %vm334, %v3673, 0
      %v3921 = vsel %vm1152, %v3871, 0
      %3923 = vmatpush.bf16.msra.mxu0 0
      %3924 = vmatpush.bf16.msra.mxu0 0
      %3925 = vmatpush.bf16.msra.mxu0 0
      %3926 = vmatpush.bf16.msra.mxu0 0
      %3927 = vmatpush.bf16.msra.mxu0 0
      %3928 = vmatpush.bf16.msra.mxu0 0
      %3929 = vmatpush.bf16.msra.mxu0 0
      %3930 = vmatpush.bf16.msra.mxu0 %v3921
      %3931 = vmatmul.bf16.gmra.mxu0 %v3873
      %v3932 = vpop.f32.mrf.mxu0
      %v3933 = vadd.f32 %v3789, %v3932
      %v3934 = vpop.f32.mrf.mxu0
      %v3935 = vadd.f32 %v3791, %v3934
      %3936 = vmatmul.bf16.gmra.mxu0 %v3876
      %v3937 = vpop.f32.mrf.mxu0
      %v3938 = vadd.f32 %v3794, %v3937
      %v3939 = vpop.f32.mrf.mxu0
      %v3940 = vadd.f32 %v3796, %v3939
      %3941 = vmatmul.bf16.gmra.mxu0 %v3879
      %v3942 = vpop.f32.mrf.mxu0
      %v3943 = vadd.f32 %v3799, %v3942
      %v3944 = vpop.f32.mrf.mxu0
      %v3945 = vadd.f32 %v3801, %v3944
      %3946 = vmatmul.bf16.gmra.mxu0 %v3882
      %v3947 = vpop.f32.mrf.mxu0
      %v3948 = vadd.f32 %v3804, %v3947
      %v3949 = vpop.f32.mrf.mxu0
      %v3950 = vadd.f32 %v3806, %v3949
      %3951 = vmatmul.bf16.gmra.mxu0 %v3885
      %v3952 = vpop.f32.mrf.mxu0
      %v3953 = vadd.f32 %v3809, %v3952
      %v3954 = vpop.f32.mrf.mxu0
      %v3955 = vadd.f32 %v3811, %v3954
      %3956 = vmatmul.bf16.gmra.mxu0 %v3888
      %v3957 = vpop.f32.mrf.mxu0
      %v3958 = vadd.f32 %v3814, %v3957
      %v3959 = vpop.f32.mrf.mxu0
      %v3960 = vadd.f32 %v3816, %v3959
      %3961 = vmatmul.bf16.gmra.mxu0 %v3891
      %v3962 = vpop.f32.mrf.mxu0
      %v3963 = vadd.f32 %v3819, %v3962
      %v3964 = vpop.f32.mrf.mxu0
      %v3965 = vadd.f32 %v3821, %v3964
      %3966 = vmatmul.bf16.gmra.mxu0 %v3894
      %v3967 = vpop.f32.mrf.mxu0
      %v3968 = vadd.f32 %v3824, %v3967
      %v3969 = vpop.f32.mrf.mxu0
      %v3970 = vadd.f32 %v3826, %v3969
      %3971 = vmatmul.bf16.gmra.mxu0 %v3897
      %v3972 = vpop.f32.mrf.mxu0
      %v3973 = vadd.f32 %v3829, %v3972
      %v3974 = vpop.f32.mrf.mxu0
      %v3975 = vadd.f32 %v3831, %v3974
      %3976 = vmatmul.bf16.gmra.mxu0 %v3900
      %v3977 = vpop.f32.mrf.mxu0
      %v3978 = vadd.f32 %v3834, %v3977
      %v3979 = vpop.f32.mrf.mxu0
      %v3980 = vadd.f32 %v3836, %v3979
      %3981 = vmatmul.bf16.gmra.mxu0 %v3903
      %v3982 = vpop.f32.mrf.mxu0
      %v3983 = vadd.f32 %v3839, %v3982
      %v3984 = vpop.f32.mrf.mxu0
      %v3985 = vadd.f32 %v3841, %v3984
      %3986 = vmatmul.bf16.gmra.mxu0 %v3906
      %v3987 = vpop.f32.mrf.mxu0
      %v3988 = vadd.f32 %v3844, %v3987
      %v3989 = vpop.f32.mrf.mxu0
      %v3990 = vadd.f32 %v3846, %v3989
      %3991 = vmatmul.bf16.gmra.mxu0 %v3909
      %v3992 = vpop.f32.mrf.mxu0
      %v3993 = vadd.f32 %v3849, %v3992
      %v3994 = vpop.f32.mrf.mxu0
      %v3995 = vadd.f32 %v3851, %v3994
      %3996 = vmatmul.bf16.gmra.mxu0 %v3912
      %v3997 = vpop.f32.mrf.mxu0
      %v3998 = vadd.f32 %v3854, %v3997
      %v3999 = vpop.f32.mrf.mxu0
      %v4000 = vadd.f32 %v3856, %v3999
      %4001 = vmatmul.bf16.gmra.mxu0 %v3915
      %v4002 = vpop.f32.mrf.mxu0
      %v4003 = vadd.f32 %v3859, %v4002
      %v4004 = vpop.f32.mrf.mxu0
      %v4005 = vadd.f32 %v3861, %v4004
      %4006 = vmatmul.bf16.gmra.mxu0 %v3918
      %v4007 = vpop.f32.mrf.mxu0
      %v4008 = vadd.f32 %v3864, %v4007
      %v4009 = vpop.f32.mrf.mxu0
      %v4010 = vadd.f32 %v3866, %v4009
      %4011 = vdwg.mxu0
      %v4012 = vld [vmem:[#allocation2 + $0x2] sm:$0xff]
      %v4013 = vld [vmem:[#allocation2 + $0xa] sm:$0xff]
      %v4014 = vld [vmem:[#allocation2 + $0x1a] sm:$0xff]
      %v4015 = vld [vmem:[#allocation2 + $0x22] sm:$0xff]
      %v4016 = vld [vmem:[#allocation2 + $0x32] sm:$0xff]
      %v4017 = vld [vmem:[#allocation2 + $0x3a] sm:$0xff]
      %v4018 = vld [vmem:[#allocation2 + $0x4a] sm:$0xff]
      %v4019 = vld [vmem:[#allocation2 + $0x52] sm:$0xff]
      %v4020 = vld [vmem:[#allocation2 + $0x62] sm:$0xff]
      %v4021 = vld [vmem:[#allocation2 + $0x6a] sm:$0xff]
      %v4022 = vld [vmem:[#allocation2 + $0x7a] sm:$0xff]
      %v4023 = vld [vmem:[#allocation2 + $0x82] sm:$0xff]
      %v4024 = vld [vmem:[#allocation2 + $0x92] sm:$0xff]
      %v4025 = vld [vmem:[#allocation2 + $0x9a] sm:$0xff]
      %v4026 = vld [vmem:[#allocation2 + $0xaa] sm:$0xff]
      %v4027 = vld [vmem:[#allocation2 + $0xb2] sm:$0xff]
      %v4028 = vld [vmem:[#allocation2 + $0xc2] sm:$0xff]
      %v4029 = vld [vmem:[#allocation2 + $0xca] sm:$0xff]
      %v4030 = vld [vmem:[#allocation2 + $0xda] sm:$0xff]
      %v4031 = vld [vmem:[#allocation2 + $0xe2] sm:$0xff]
      %v4032 = vld [vmem:[#allocation2 + $0xf2] sm:$0xff]
      %v4033 = vld [vmem:[#allocation2 + $0xfa] sm:$0xff]
      %v4034 = vld [vmem:[#allocation2 + $0x10a] sm:$0xff]
      %v4035 = vld [vmem:[#allocation2 + $0x112] sm:$0xff]
      %v4036 = vld [vmem:[#allocation2 + $0x122] sm:$0xff]
      %v4037 = vld [vmem:[#allocation2 + $0x12a] sm:$0xff]
      %v4038 = vld [vmem:[#allocation2 + $0x13a] sm:$0xff]
      %v4039 = vld [vmem:[#allocation2 + $0x142] sm:$0xff]
      %v4040 = vld [vmem:[#allocation2 + $0x152] sm:$0xff]
      %v4041 = vld [vmem:[#allocation2 + $0x15a] sm:$0xff]
      %v4042 = vld [vmem:[#allocation2 + $0x16a] sm:$0xff]
      %v4043 = vld [vmem:[#allocation2 + $0x172] sm:$0xff]
      %v4044 = vpack.c.bf16 %v4013, %v4012
      %v4045 = vpack.c.bf16 %v4015, %v4014
      %v4046 = vpack.c.bf16 %v4017, %v4016
      %v4047 = vpack.c.bf16 %v4019, %v4018
      %v4048 = vpack.c.bf16 %v4021, %v4020
      %v4049 = vpack.c.bf16 %v4023, %v4022
      %v4050 = vpack.c.bf16 %v4025, %v4024
      %v4051 = vpack.c.bf16 %v4027, %v4026
      %v4052 = vpack.c.bf16 %v4029, %v4028
      %v4053 = vpack.c.bf16 %v4031, %v4030
      %v4054 = vpack.c.bf16 %v4033, %v4032
      %v4055 = vpack.c.bf16 %v4035, %v4034
      %v4056 = vpack.c.bf16 %v4037, %v4036
      %v4057 = vpack.c.bf16 %v4039, %v4038
      %v4058 = vpack.c.bf16 %v4041, %v4040
      %v4059 = vpack.c.bf16 %v4043, %v4042
      %v4060 = vld [vmem:[%s5 + $0x8] sm:$0x8]
      %v4062 = vunpack.c.l.b16 %v4060
      %v4063 = vpack.c.b16 %v4062, %v4062
      %v4064 = vrot.slane %v4063, 3
      %v4066 = vsel %vm334, %v4044, 0
      %v4069 = vsel %vm334, %v4045, 0
      %v4072 = vsel %vm334, %v4046, 0
      %v4075 = vsel %vm334, %v4047, 0
      %v4078 = vsel %vm334, %v4048, 0
      %v4081 = vsel %vm334, %v4049, 0
      %v4084 = vsel %vm334, %v4050, 0
      %v4087 = vsel %vm334, %v4051, 0
      %v4090 = vsel %vm334, %v4052, 0
      %v4093 = vsel %vm334, %v4053, 0
      %v4096 = vsel %vm334, %v4054, 0
      %v4099 = vsel %vm334, %v4055, 0
      %v4102 = vsel %vm334, %v4056, 0
      %v4105 = vsel %vm334, %v4057, 0
      %v4108 = vsel %vm334, %v4058, 0
      %v4111 = vsel %vm334, %v4059, 0
      %v4114 = vsel %vm1152, %v4064, 0
      %4116 = vmatpush.bf16.msra.mxu0 0
      %4117 = vmatpush.bf16.msra.mxu0 0
      %4118 = vmatpush.bf16.msra.mxu0 0
      %4119 = vmatpush.bf16.msra.mxu0 0
      %4120 = vmatpush.bf16.msra.mxu0 0
      %4121 = vmatpush.bf16.msra.mxu0 0
      %4122 = vmatpush.bf16.msra.mxu0 0
      %4123 = vmatpush.bf16.msra.mxu0 %v4114
      %4124 = vmatmul.bf16.gmra.mxu0 %v4066
      %v4125 = vpop.f32.mrf.mxu0
      %v4126 = vadd.f32 0.0, %v4125
      %v4127 = vpop.f32.mrf.mxu0
      %v4128 = vadd.f32 0.0, %v4127
      %4129 = vmatmul.bf16.gmra.mxu0 %v4069
      %v4130 = vpop.f32.mrf.mxu0
      %v4131 = vadd.f32 0.0, %v4130
      %v4132 = vpop.f32.mrf.mxu0
      %v4133 = vadd.f32 0.0, %v4132
      %4134 = vmatmul.bf16.gmra.mxu0 %v4072
      %v4135 = vpop.f32.mrf.mxu0
      %v4136 = vadd.f32 0.0, %v4135
      %v4137 = vpop.f32.mrf.mxu0
      %v4138 = vadd.f32 0.0, %v4137
      %4139 = vmatmul.bf16.gmra.mxu0 %v4075
      %v4140 = vpop.f32.mrf.mxu0
      %v4141 = vadd.f32 0.0, %v4140
      %v4142 = vpop.f32.mrf.mxu0
      %v4143 = vadd.f32 0.0, %v4142
      %4144 = vmatmul.bf16.gmra.mxu0 %v4078
      %v4145 = vpop.f32.mrf.mxu0
      %v4146 = vadd.f32 0.0, %v4145
      %v4147 = vpop.f32.mrf.mxu0
      %v4148 = vadd.f32 0.0, %v4147
      %4149 = vmatmul.bf16.gmra.mxu0 %v4081
      %v4150 = vpop.f32.mrf.mxu0
      %v4151 = vadd.f32 0.0, %v4150
      %v4152 = vpop.f32.mrf.mxu0
      %v4153 = vadd.f32 0.0, %v4152
      %4154 = vmatmul.bf16.gmra.mxu0 %v4084
      %v4155 = vpop.f32.mrf.mxu0
      %v4156 = vadd.f32 0.0, %v4155
      %v4157 = vpop.f32.mrf.mxu0
      %v4158 = vadd.f32 0.0, %v4157
      %4159 = vmatmul.bf16.gmra.mxu0 %v4087
      %v4160 = vpop.f32.mrf.mxu0
      %v4161 = vadd.f32 0.0, %v4160
      %v4162 = vpop.f32.mrf.mxu0
      %v4163 = vadd.f32 0.0, %v4162
      %4164 = vmatmul.bf16.gmra.mxu0 %v4090
      %v4165 = vpop.f32.mrf.mxu0
      %v4166 = vadd.f32 0.0, %v4165
      %v4167 = vpop.f32.mrf.mxu0
      %v4168 = vadd.f32 0.0, %v4167
      %4169 = vmatmul.bf16.gmra.mxu0 %v4093
      %v4170 = vpop.f32.mrf.mxu0
      %v4171 = vadd.f32 0.0, %v4170
      %v4172 = vpop.f32.mrf.mxu0
      %v4173 = vadd.f32 0.0, %v4172
      %4174 = vmatmul.bf16.gmra.mxu0 %v4096
      %v4175 = vpop.f32.mrf.mxu0
      %v4176 = vadd.f32 0.0, %v4175
      %v4177 = vpop.f32.mrf.mxu0
      %v4178 = vadd.f32 0.0, %v4177
      %4179 = vmatmul.bf16.gmra.mxu0 %v4099
      %v4180 = vpop.f32.mrf.mxu0
      %v4181 = vadd.f32 0.0, %v4180
      %v4182 = vpop.f32.mrf.mxu0
      %v4183 = vadd.f32 0.0, %v4182
      %4184 = vmatmul.bf16.gmra.mxu0 %v4102
      %v4185 = vpop.f32.mrf.mxu0
      %v4186 = vadd.f32 0.0, %v4185
      %v4187 = vpop.f32.mrf.mxu0
      %v4188 = vadd.f32 0.0, %v4187
      %4189 = vmatmul.bf16.gmra.mxu0 %v4105
      %v4190 = vpop.f32.mrf.mxu0
      %v4191 = vadd.f32 0.0, %v4190
      %v4192 = vpop.f32.mrf.mxu0
      %v4193 = vadd.f32 0.0, %v4192
      %4194 = vmatmul.bf16.gmra.mxu0 %v4108
      %v4195 = vpop.f32.mrf.mxu0
      %v4196 = vadd.f32 0.0, %v4195
      %v4197 = vpop.f32.mrf.mxu0
      %v4198 = vadd.f32 0.0, %v4197
      %4199 = vmatmul.bf16.gmra.mxu0 %v4111
      %v4200 = vpop.f32.mrf.mxu0
      %v4201 = vadd.f32 0.0, %v4200
      %v4202 = vpop.f32.mrf.mxu0
      %v4203 = vadd.f32 0.0, %v4202
      %4204 = vdwg.mxu0
      %v4205 = vadd.f32 %v3933, %v4126
      %v4206 = vadd.f32 %v3935, %v4128
      %v4207 = vadd.f32 %v3938, %v4131
      %v4208 = vadd.f32 %v3940, %v4133
      %v4209 = vadd.f32 %v3943, %v4136
      %v4210 = vadd.f32 %v3945, %v4138
      %v4211 = vadd.f32 %v3948, %v4141
      %v4212 = vadd.f32 %v3950, %v4143
      %v4213 = vadd.f32 %v3953, %v4146
      %v4214 = vadd.f32 %v3955, %v4148
      %v4215 = vadd.f32 %v3958, %v4151
      %v4216 = vadd.f32 %v3960, %v4153
      %v4217 = vadd.f32 %v3963, %v4156
      %v4218 = vadd.f32 %v3965, %v4158
      %v4219 = vadd.f32 %v3968, %v4161
      %v4220 = vadd.f32 %v3970, %v4163
      %v4221 = vadd.f32 %v3973, %v4166
      %v4222 = vadd.f32 %v3975, %v4168
      %v4223 = vadd.f32 %v3978, %v4171
      %v4224 = vadd.f32 %v3980, %v4173
      %v4225 = vadd.f32 %v3983, %v4176
      %v4226 = vadd.f32 %v3985, %v4178
      %v4227 = vadd.f32 %v3988, %v4181
      %v4228 = vadd.f32 %v3990, %v4183
      %v4229 = vadd.f32 %v3993, %v4186
      %v4230 = vadd.f32 %v3995, %v4188
      %v4231 = vadd.f32 %v3998, %v4191
      %v4232 = vadd.f32 %v4000, %v4193
      %v4233 = vadd.f32 %v4003, %v4196
      %v4234 = vadd.f32 %v4005, %v4198
      %v4235 = vadd.f32 %v4008, %v4201
      %v4236 = vadd.f32 %v4010, %v4203
      %v4237 = vld [vmem:[%s1385] sm:$0xff]
      %v4238 = vld [vmem:[%s1385 + $0x8] sm:$0xff]
      %v4239 = vld [vmem:[%s1385 + $0x18] sm:$0xff]
      %v4240 = vld [vmem:[%s1385 + $0x20] sm:$0xff]
      %v4241 = vld [vmem:[%s1385 + $0x30] sm:$0xff]
      %v4242 = vld [vmem:[%s1385 + $0x38] sm:$0xff]
      %v4243 = vld [vmem:[%s1385 + $0x48] sm:$0xff]
      %v4244 = vld [vmem:[%s1385 + $0x50] sm:$0xff]
      %v4245 = vld [vmem:[%s1385 + $0x60] sm:$0xff]
      %v4246 = vld [vmem:[%s1385 + $0x68] sm:$0xff]
      %v4247 = vld [vmem:[%s1385 + $0x78] sm:$0xff]
      %v4248 = vld [vmem:[%s1385 + $0x80] sm:$0xff]
      %v4249 = vld [vmem:[%s1385 + $0x90] sm:$0xff]
      %v4250 = vld [vmem:[%s1385 + $0x98] sm:$0xff]
      %v4251 = vld [vmem:[%s1385 + $0xa8] sm:$0xff]
      %v4252 = vld [vmem:[%s1385 + $0xb0] sm:$0xff]
      %v4253 = vld [vmem:[%s1385 + $0xc0] sm:$0xff]
      %v4254 = vld [vmem:[%s1385 + $0xc8] sm:$0xff]
      %v4255 = vld [vmem:[%s1385 + $0xd8] sm:$0xff]
      %v4256 = vld [vmem:[%s1385 + $0xe0] sm:$0xff]
      %v4257 = vld [vmem:[%s1385 + $0xf0] sm:$0xff]
      %v4258 = vld [vmem:[%s1385 + $0xf8] sm:$0xff]
      %v4259 = vld [vmem:[%s1385 + $0x108] sm:$0xff]
      %v4260 = vld [vmem:[%s1385 + $0x110] sm:$0xff]
      %v4261 = vld [vmem:[%s1385 + $0x120] sm:$0xff]
      %v4262 = vld [vmem:[%s1385 + $0x128] sm:$0xff]
      %v4263 = vld [vmem:[%s1385 + $0x138] sm:$0xff]
      %v4264 = vld [vmem:[%s1385 + $0x140] sm:$0xff]
      %v4265 = vld [vmem:[%s1385 + $0x150] sm:$0xff]
      %v4266 = vld [vmem:[%s1385 + $0x158] sm:$0xff]
      %v4267 = vld [vmem:[%s1385 + $0x168] sm:$0xff]
      %v4268 = vld [vmem:[%s1385 + $0x170] sm:$0xff]
      %v4269 = vpack.c.bf16 %v4238, %v4237
      %v4270 = vpack.c.bf16 %v4240, %v4239
      %v4271 = vpack.c.bf16 %v4242, %v4241
      %v4272 = vpack.c.bf16 %v4244, %v4243
      %v4273 = vpack.c.bf16 %v4246, %v4245
      %v4274 = vpack.c.bf16 %v4248, %v4247
      %v4275 = vpack.c.bf16 %v4250, %v4249
      %v4276 = vpack.c.bf16 %v4252, %v4251
      %v4277 = vpack.c.bf16 %v4254, %v4253
      %v4278 = vpack.c.bf16 %v4256, %v4255
      %v4279 = vpack.c.bf16 %v4258, %v4257
      %v4280 = vpack.c.bf16 %v4260, %v4259
      %v4281 = vpack.c.bf16 %v4262, %v4261
      %v4282 = vpack.c.bf16 %v4264, %v4263
      %v4283 = vpack.c.bf16 %v4266, %v4265
      %v4284 = vpack.c.bf16 %v4268, %v4267
      %v4285 = vld [vmem:[%s5 + $0xc] sm:$0x1]
      %v4287 = vsel %vm334, %v4269, 0
      %v4290 = vsel %vm334, %v4270, 0
      %v4293 = vsel %vm334, %v4271, 0
      %v4296 = vsel %vm334, %v4272, 0
      %v4299 = vsel %vm334, %v4273, 0
      %v4302 = vsel %vm334, %v4274, 0
      %v4305 = vsel %vm334, %v4275, 0
      %v4308 = vsel %vm334, %v4276, 0
      %v4311 = vsel %vm334, %v4277, 0
      %v4314 = vsel %vm334, %v4278, 0
      %v4317 = vsel %vm334, %v4279, 0
      %v4320 = vsel %vm334, %v4280, 0
      %v4323 = vsel %vm334, %v4281, 0
      %v4326 = vsel %vm334, %v4282, 0
      %v4329 = vsel %vm334, %v4283, 0
      %v4332 = vsel %vm334, %v4284, 0
      %v4335 = vsel %vm1152, %v4285, 0
      %4337 = vmatpush.bf16.msra.mxu0 0
      %4338 = vmatpush.bf16.msra.mxu0 0
      %4339 = vmatpush.bf16.msra.mxu0 0
      %4340 = vmatpush.bf16.msra.mxu0 0
      %4341 = vmatpush.bf16.msra.mxu0 0
      %4342 = vmatpush.bf16.msra.mxu0 0
      %4343 = vmatpush.bf16.msra.mxu0 0
      %4344 = vmatpush.bf16.msra.mxu0 %v4335
      %4345 = vmatmul.bf16.gmra.mxu0 %v4287
      %v4346 = vpop.f32.mrf.mxu0
      %v4347 = vadd.f32 0.0, %v4346
      %v4348 = vpop.f32.mrf.mxu0
      %v4349 = vadd.f32 0.0, %v4348
      %4350 = vmatmul.bf16.gmra.mxu0 %v4290
      %v4351 = vpop.f32.mrf.mxu0
      %v4352 = vadd.f32 0.0, %v4351
      %v4353 = vpop.f32.mrf.mxu0
      %v4354 = vadd.f32 0.0, %v4353
      %4355 = vmatmul.bf16.gmra.mxu0 %v4293
      %v4356 = vpop.f32.mrf.mxu0
      %v4357 = vadd.f32 0.0, %v4356
      %v4358 = vpop.f32.mrf.mxu0
      %v4359 = vadd.f32 0.0, %v4358
      %4360 = vmatmul.bf16.gmra.mxu0 %v4296
      %v4361 = vpop.f32.mrf.mxu0
      %v4362 = vadd.f32 0.0, %v4361
      %v4363 = vpop.f32.mrf.mxu0
      %v4364 = vadd.f32 0.0, %v4363
      %4365 = vmatmul.bf16.gmra.mxu0 %v4299
      %v4366 = vpop.f32.mrf.mxu0
      %v4367 = vadd.f32 0.0, %v4366
      %v4368 = vpop.f32.mrf.mxu0
      %v4369 = vadd.f32 0.0, %v4368
      %4370 = vmatmul.bf16.gmra.mxu0 %v4302
      %v4371 = vpop.f32.mrf.mxu0
      %v4372 = vadd.f32 0.0, %v4371
      %v4373 = vpop.f32.mrf.mxu0
      %v4374 = vadd.f32 0.0, %v4373
      %4375 = vmatmul.bf16.gmra.mxu0 %v4305
      %v4376 = vpop.f32.mrf.mxu0
      %v4377 = vadd.f32 0.0, %v4376
      %v4378 = vpop.f32.mrf.mxu0
      %v4379 = vadd.f32 0.0, %v4378
      %4380 = vmatmul.bf16.gmra.mxu0 %v4308
      %v4381 = vpop.f32.mrf.mxu0
      %v4382 = vadd.f32 0.0, %v4381
      %v4383 = vpop.f32.mrf.mxu0
      %v4384 = vadd.f32 0.0, %v4383
      %4385 = vmatmul.bf16.gmra.mxu0 %v4311
      %v4386 = vpop.f32.mrf.mxu0
      %v4387 = vadd.f32 0.0, %v4386
      %v4388 = vpop.f32.mrf.mxu0
      %v4389 = vadd.f32 0.0, %v4388
      %4390 = vmatmul.bf16.gmra.mxu0 %v4314
      %v4391 = vpop.f32.mrf.mxu0
      %v4392 = vadd.f32 0.0, %v4391
      %v4393 = vpop.f32.mrf.mxu0
      %v4394 = vadd.f32 0.0, %v4393
      %4395 = vmatmul.bf16.gmra.mxu0 %v4317
      %v4396 = vpop.f32.mrf.mxu0
      %v4397 = vadd.f32 0.0, %v4396
      %v4398 = vpop.f32.mrf.mxu0
      %v4399 = vadd.f32 0.0, %v4398
      %4400 = vmatmul.bf16.gmra.mxu0 %v4320
      %v4401 = vpop.f32.mrf.mxu0
      %v4402 = vadd.f32 0.0, %v4401
      %v4403 = vpop.f32.mrf.mxu0
      %v4404 = vadd.f32 0.0, %v4403
      %4405 = vmatmul.bf16.gmra.mxu0 %v4323
      %v4406 = vpop.f32.mrf.mxu0
      %v4407 = vadd.f32 0.0, %v4406
      %v4408 = vpop.f32.mrf.mxu0
      %v4409 = vadd.f32 0.0, %v4408
      %4410 = vmatmul.bf16.gmra.mxu0 %v4326
      %v4411 = vpop.f32.mrf.mxu0
      %v4412 = vadd.f32 0.0, %v4411
      %v4413 = vpop.f32.mrf.mxu0
      %v4414 = vadd.f32 0.0, %v4413
      %4415 = vmatmul.bf16.gmra.mxu0 %v4329
      %v4416 = vpop.f32.mrf.mxu0
      %v4417 = vadd.f32 0.0, %v4416
      %v4418 = vpop.f32.mrf.mxu0
      %v4419 = vadd.f32 0.0, %v4418
      %4420 = vmatmul.bf16.gmra.mxu0 %v4332
      %v4421 = vpop.f32.mrf.mxu0
      %v4422 = vadd.f32 0.0, %v4421
      %v4423 = vpop.f32.mrf.mxu0
      %v4424 = vadd.f32 0.0, %v4423
      %4425 = vdwg.mxu0
      %v4426 = vadd.f32 %v4205, %v4347
      %v4427 = vadd.f32 %v4206, %v4349
      %v4428 = vadd.f32 %v4207, %v4352
      %v4429 = vadd.f32 %v4208, %v4354
      %v4430 = vadd.f32 %v4209, %v4357
      %v4431 = vadd.f32 %v4210, %v4359
      %v4432 = vadd.f32 %v4211, %v4362
      %v4433 = vadd.f32 %v4212, %v4364
      %v4434 = vadd.f32 %v4213, %v4367
      %v4435 = vadd.f32 %v4214, %v4369
      %v4436 = vadd.f32 %v4215, %v4372
      %v4437 = vadd.f32 %v4216, %v4374
      %v4438 = vadd.f32 %v4217, %v4377
      %v4439 = vadd.f32 %v4218, %v4379
      %v4440 = vadd.f32 %v4219, %v4382
      %v4441 = vadd.f32 %v4220, %v4384
      %v4442 = vadd.f32 %v4221, %v4387
      %v4443 = vadd.f32 %v4222, %v4389
      %v4444 = vadd.f32 %v4223, %v4392
      %v4445 = vadd.f32 %v4224, %v4394
      %v4446 = vadd.f32 %v4225, %v4397
      %v4447 = vadd.f32 %v4226, %v4399
      %v4448 = vadd.f32 %v4227, %v4402
      %v4449 = vadd.f32 %v4228, %v4404
      %v4450 = vadd.f32 %v4229, %v4407
      %v4451 = vadd.f32 %v4230, %v4409
      %v4452 = vadd.f32 %v4231, %v4412
      %v4453 = vadd.f32 %v4232, %v4414
      %v4454 = vadd.f32 %v4233, %v4417
      %v4455 = vadd.f32 %v4234, %v4419
      %v4456 = vadd.f32 %v4235, %v4422
      %v4457 = vadd.f32 %v4236, %v4424
      %v4458 = vld [vmem:[%s1385 + $0x1] sm:$0xff]
      %v4459 = vld [vmem:[%s1385 + $0x9] sm:$0xff]
      %v4460 = vld [vmem:[%s1385 + $0x19] sm:$0xff]
      %v4461 = vld [vmem:[%s1385 + $0x21] sm:$0xff]
      %v4462 = vld [vmem:[%s1385 + $0x31] sm:$0xff]
      %v4463 = vld [vmem:[%s1385 + $0x39] sm:$0xff]
      %v4464 = vld [vmem:[%s1385 + $0x49] sm:$0xff]
      %v4465 = vld [vmem:[%s1385 + $0x51] sm:$0xff]
      %v4466 = vld [vmem:[%s1385 + $0x61] sm:$0xff]
      %v4467 = vld [vmem:[%s1385 + $0x69] sm:$0xff]
      %v4468 = vld [vmem:[%s1385 + $0x79] sm:$0xff]
      %v4469 = vld [vmem:[%s1385 + $0x81] sm:$0xff]
      %v4470 = vld [vmem:[%s1385 + $0x91] sm:$0xff]
      %v4471 = vld [vmem:[%s1385 + $0x99] sm:$0xff]
      %v4472 = vld [vmem:[%s1385 + $0xa9] sm:$0xff]
      %v4473 = vld [vmem:[%s1385 + $0xb1] sm:$0xff]
      %v4474 = vld [vmem:[%s1385 + $0xc1] sm:$0xff]
      %v4475 = vld [vmem:[%s1385 + $0xc9] sm:$0xff]
      %v4476 = vld [vmem:[%s1385 + $0xd9] sm:$0xff]
      %v4477 = vld [vmem:[%s1385 + $0xe1] sm:$0xff]
      %v4478 = vld [vmem:[%s1385 + $0xf1] sm:$0xff]
      %v4479 = vld [vmem:[%s1385 + $0xf9] sm:$0xff]
      %v4480 = vld [vmem:[%s1385 + $0x109] sm:$0xff]
      %v4481 = vld [vmem:[%s1385 + $0x111] sm:$0xff]
      %v4482 = vld [vmem:[%s1385 + $0x121] sm:$0xff]
      %v4483 = vld [vmem:[%s1385 + $0x129] sm:$0xff]
      %v4484 = vld [vmem:[%s1385 + $0x139] sm:$0xff]
      %v4485 = vld [vmem:[%s1385 + $0x141] sm:$0xff]
      %v4486 = vld [vmem:[%s1385 + $0x151] sm:$0xff]
      %v4487 = vld [vmem:[%s1385 + $0x159] sm:$0xff]
      %v4488 = vld [vmem:[%s1385 + $0x169] sm:$0xff]
      %v4489 = vld [vmem:[%s1385 + $0x171] sm:$0xff]
      %v4490 = vpack.c.bf16 %v4459, %v4458
      %v4491 = vpack.c.bf16 %v4461, %v4460
      %v4492 = vpack.c.bf16 %v4463, %v4462
      %v4493 = vpack.c.bf16 %v4465, %v4464
      %v4494 = vpack.c.bf16 %v4467, %v4466
      %v4495 = vpack.c.bf16 %v4469, %v4468
      %v4496 = vpack.c.bf16 %v4471, %v4470
      %v4497 = vpack.c.bf16 %v4473, %v4472
      %v4498 = vpack.c.bf16 %v4475, %v4474
      %v4499 = vpack.c.bf16 %v4477, %v4476
      %v4500 = vpack.c.bf16 %v4479, %v4478
      %v4501 = vpack.c.bf16 %v4481, %v4480
      %v4502 = vpack.c.bf16 %v4483, %v4482
      %v4503 = vpack.c.bf16 %v4485, %v4484
      %v4504 = vpack.c.bf16 %v4487, %v4486
      %v4505 = vpack.c.bf16 %v4489, %v4488
      %v4506 = vld [vmem:[%s5 + $0xc] sm:$0x2]
      %v4508 = vunpack.c.l.b16 %v4506
      %v4509 = vpack.c.b16 %v4508, %v4508
      %v4510 = vrot.slane %v4509, 1
      %v4512 = vsel %vm334, %v4490, 0
      %v4515 = vsel %vm334, %v4491, 0
      %v4518 = vsel %vm334, %v4492, 0
      %v4521 = vsel %vm334, %v4493, 0
      %v4524 = vsel %vm334, %v4494, 0
      %v4527 = vsel %vm334, %v4495, 0
      %v4530 = vsel %vm334, %v4496, 0
      %v4533 = vsel %vm334, %v4497, 0
      %v4536 = vsel %vm334, %v4498, 0
      %v4539 = vsel %vm334, %v4499, 0
      %v4542 = vsel %vm334, %v4500, 0
      %v4545 = vsel %vm334, %v4501, 0
      %v4548 = vsel %vm334, %v4502, 0
      %v4551 = vsel %vm334, %v4503, 0
      %v4554 = vsel %vm334, %v4504, 0
      %v4557 = vsel %vm334, %v4505, 0
      %v4560 = vsel %vm1152, %v4510, 0
      %4562 = vmatpush.bf16.msra.mxu0 0
      %4563 = vmatpush.bf16.msra.mxu0 0
      %4564 = vmatpush.bf16.msra.mxu0 0
      %4565 = vmatpush.bf16.msra.mxu0 0
      %4566 = vmatpush.bf16.msra.mxu0 0
      %4567 = vmatpush.bf16.msra.mxu0 0
      %4568 = vmatpush.bf16.msra.mxu0 0
      %4569 = vmatpush.bf16.msra.mxu0 %v4560
      %4570 = vmatmul.bf16.gmra.mxu0 %v4512
      %v4571 = vpop.f32.mrf.mxu0
      %v4572 = vadd.f32 0.0, %v4571
      %v4573 = vpop.f32.mrf.mxu0
      %v4574 = vadd.f32 0.0, %v4573
      %4575 = vmatmul.bf16.gmra.mxu0 %v4515
      %v4576 = vpop.f32.mrf.mxu0
      %v4577 = vadd.f32 0.0, %v4576
      %v4578 = vpop.f32.mrf.mxu0
      %v4579 = vadd.f32 0.0, %v4578
      %4580 = vmatmul.bf16.gmra.mxu0 %v4518
      %v4581 = vpop.f32.mrf.mxu0
      %v4582 = vadd.f32 0.0, %v4581
      %v4583 = vpop.f32.mrf.mxu0
      %v4584 = vadd.f32 0.0, %v4583
      %4585 = vmatmul.bf16.gmra.mxu0 %v4521
      %v4586 = vpop.f32.mrf.mxu0
      %v4587 = vadd.f32 0.0, %v4586
      %v4588 = vpop.f32.mrf.mxu0
      %v4589 = vadd.f32 0.0, %v4588
      %4590 = vmatmul.bf16.gmra.mxu0 %v4524
      %v4591 = vpop.f32.mrf.mxu0
      %v4592 = vadd.f32 0.0, %v4591
      %v4593 = vpop.f32.mrf.mxu0
      %v4594 = vadd.f32 0.0, %v4593
      %4595 = vmatmul.bf16.gmra.mxu0 %v4527
      %v4596 = vpop.f32.mrf.mxu0
      %v4597 = vadd.f32 0.0, %v4596
      %v4598 = vpop.f32.mrf.mxu0
      %v4599 = vadd.f32 0.0, %v4598
      %4600 = vmatmul.bf16.gmra.mxu0 %v4530
      %v4601 = vpop.f32.mrf.mxu0
      %v4602 = vadd.f32 0.0, %v4601
      %v4603 = vpop.f32.mrf.mxu0
      %v4604 = vadd.f32 0.0, %v4603
      %4605 = vmatmul.bf16.gmra.mxu0 %v4533
      %v4606 = vpop.f32.mrf.mxu0
      %v4607 = vadd.f32 0.0, %v4606
      %v4608 = vpop.f32.mrf.mxu0
      %v4609 = vadd.f32 0.0, %v4608
      %4610 = vmatmul.bf16.gmra.mxu0 %v4536
      %v4611 = vpop.f32.mrf.mxu0
      %v4612 = vadd.f32 0.0, %v4611
      %v4613 = vpop.f32.mrf.mxu0
      %v4614 = vadd.f32 0.0, %v4613
      %4615 = vmatmul.bf16.gmra.mxu0 %v4539
      %v4616 = vpop.f32.mrf.mxu0
      %v4617 = vadd.f32 0.0, %v4616
      %v4618 = vpop.f32.mrf.mxu0
      %v4619 = vadd.f32 0.0, %v4618
      %4620 = vmatmul.bf16.gmra.mxu0 %v4542
      %v4621 = vpop.f32.mrf.mxu0
      %v4622 = vadd.f32 0.0, %v4621
      %v4623 = vpop.f32.mrf.mxu0
      %v4624 = vadd.f32 0.0, %v4623
      %4625 = vmatmul.bf16.gmra.mxu0 %v4545
      %v4626 = vpop.f32.mrf.mxu0
      %v4627 = vadd.f32 0.0, %v4626
      %v4628 = vpop.f32.mrf.mxu0
      %v4629 = vadd.f32 0.0, %v4628
      %4630 = vmatmul.bf16.gmra.mxu0 %v4548
      %v4631 = vpop.f32.mrf.mxu0
      %v4632 = vadd.f32 0.0, %v4631
      %v4633 = vpop.f32.mrf.mxu0
      %v4634 = vadd.f32 0.0, %v4633
      %4635 = vmatmul.bf16.gmra.mxu0 %v4551
      %v4636 = vpop.f32.mrf.mxu0
      %v4637 = vadd.f32 0.0, %v4636
      %v4638 = vpop.f32.mrf.mxu0
      %v4639 = vadd.f32 0.0, %v4638
      %4640 = vmatmul.bf16.gmra.mxu0 %v4554
      %v4641 = vpop.f32.mrf.mxu0
      %v4642 = vadd.f32 0.0, %v4641
      %v4643 = vpop.f32.mrf.mxu0
      %v4644 = vadd.f32 0.0, %v4643
      %4645 = vmatmul.bf16.gmra.mxu0 %v4557
      %v4646 = vpop.f32.mrf.mxu0
      %v4647 = vadd.f32 0.0, %v4646
      %v4648 = vpop.f32.mrf.mxu0
      %v4649 = vadd.f32 0.0, %v4648
      %4650 = vdwg.mxu0
      %v4651 = vadd.f32 %v4426, %v4572
      %v4652 = vadd.f32 %v4427, %v4574
      %v4653 = vadd.f32 %v4428, %v4577
      %v4654 = vadd.f32 %v4429, %v4579
      %v4655 = vadd.f32 %v4430, %v4582
      %v4656 = vadd.f32 %v4431, %v4584
      %v4657 = vadd.f32 %v4432, %v4587
      %v4658 = vadd.f32 %v4433, %v4589
      %v4659 = vadd.f32 %v4434, %v4592
      %v4660 = vadd.f32 %v4435, %v4594
      %v4661 = vadd.f32 %v4436, %v4597
      %v4662 = vadd.f32 %v4437, %v4599
      %v4663 = vadd.f32 %v4438, %v4602
      %v4664 = vadd.f32 %v4439, %v4604
      %v4665 = vadd.f32 %v4440, %v4607
      %v4666 = vadd.f32 %v4441, %v4609
      %v4667 = vadd.f32 %v4442, %v4612
      %v4668 = vadd.f32 %v4443, %v4614
      %v4669 = vadd.f32 %v4444, %v4617
      %v4670 = vadd.f32 %v4445, %v4619
      %v4671 = vadd.f32 %v4446, %v4622
      %v4672 = vadd.f32 %v4447, %v4624
      %v4673 = vadd.f32 %v4448, %v4627
      %v4674 = vadd.f32 %v4449, %v4629
      %v4675 = vadd.f32 %v4450, %v4632
      %v4676 = vadd.f32 %v4451, %v4634
      %v4677 = vadd.f32 %v4452, %v4637
      %v4678 = vadd.f32 %v4453, %v4639
      %v4679 = vadd.f32 %v4454, %v4642
      %v4680 = vadd.f32 %v4455, %v4644
      %v4681 = vadd.f32 %v4456, %v4647
      %v4682 = vadd.f32 %v4457, %v4649
      %v4683 = vld [vmem:[%s1385 + $0x2] sm:$0xff]
      %v4684 = vld [vmem:[%s1385 + $0xa] sm:$0xff]
      %v4685 = vld [vmem:[%s1385 + $0x1a] sm:$0xff]
      %v4686 = vld [vmem:[%s1385 + $0x22] sm:$0xff]
      %v4687 = vld [vmem:[%s1385 + $0x32] sm:$0xff]
      %v4688 = vld [vmem:[%s1385 + $0x3a] sm:$0xff]
      %v4689 = vld [vmem:[%s1385 + $0x4a] sm:$0xff]
      %v4690 = vld [vmem:[%s1385 + $0x52] sm:$0xff]
      %v4691 = vld [vmem:[%s1385 + $0x62] sm:$0xff]
      %v4692 = vld [vmem:[%s1385 + $0x6a] sm:$0xff]
      %v4693 = vld [vmem:[%s1385 + $0x7a] sm:$0xff]
      %v4694 = vld [vmem:[%s1385 + $0x82] sm:$0xff]
      %v4695 = vld [vmem:[%s1385 + $0x92] sm:$0xff]
      %v4696 = vld [vmem:[%s1385 + $0x9a] sm:$0xff]
      %v4697 = vld [vmem:[%s1385 + $0xaa] sm:$0xff]
      %v4698 = vld [vmem:[%s1385 + $0xb2] sm:$0xff]
      %v4699 = vld [vmem:[%s1385 + $0xc2] sm:$0xff]
      %v4700 = vld [vmem:[%s1385 + $0xca] sm:$0xff]
      %v4701 = vld [vmem:[%s1385 + $0xda] sm:$0xff]
      %v4702 = vld [vmem:[%s1385 + $0xe2] sm:$0xff]
      %v4703 = vld [vmem:[%s1385 + $0xf2] sm:$0xff]
      %v4704 = vld [vmem:[%s1385 + $0xfa] sm:$0xff]
      %v4705 = vld [vmem:[%s1385 + $0x10a] sm:$0xff]
      %v4706 = vld [vmem:[%s1385 + $0x112] sm:$0xff]
      %v4707 = vld [vmem:[%s1385 + $0x122] sm:$0xff]
      %v4708 = vld [vmem:[%s1385 + $0x12a] sm:$0xff]
      %v4709 = vld [vmem:[%s1385 + $0x13a] sm:$0xff]
      %v4710 = vld [vmem:[%s1385 + $0x142] sm:$0xff]
      %v4711 = vld [vmem:[%s1385 + $0x152] sm:$0xff]
      %v4712 = vld [vmem:[%s1385 + $0x15a] sm:$0xff]
      %v4713 = vld [vmem:[%s1385 + $0x16a] sm:$0xff]
      %v4714 = vld [vmem:[%s1385 + $0x172] sm:$0xff]
      %v4715 = vpack.c.bf16 %v4684, %v4683
      %v4716 = vpack.c.bf16 %v4686, %v4685
      %v4717 = vpack.c.bf16 %v4688, %v4687
      %v4718 = vpack.c.bf16 %v4690, %v4689
      %v4719 = vpack.c.bf16 %v4692, %v4691
      %v4720 = vpack.c.bf16 %v4694, %v4693
      %v4721 = vpack.c.bf16 %v4696, %v4695
      %v4722 = vpack.c.bf16 %v4698, %v4697
      %v4723 = vpack.c.bf16 %v4700, %v4699
      %v4724 = vpack.c.bf16 %v4702, %v4701
      %v4725 = vpack.c.bf16 %v4704, %v4703
      %v4726 = vpack.c.bf16 %v4706, %v4705
      %v4727 = vpack.c.bf16 %v4708, %v4707
      %v4728 = vpack.c.bf16 %v4710, %v4709
      %v4729 = vpack.c.bf16 %v4712, %v4711
      %v4730 = vpack.c.bf16 %v4714, %v4713
      %v4731 = vld [vmem:[%s5 + $0xc] sm:$0x4]
      %v4733 = vunpack.c.l.b16 %v4731
      %v4734 = vpack.c.b16 %v4733, %v4733
      %v4735 = vrot.slane %v4734, 2
      %v4737 = vsel %vm334, %v4715, 0
      %v4740 = vsel %vm334, %v4716, 0
      %v4743 = vsel %vm334, %v4717, 0
      %v4746 = vsel %vm334, %v4718, 0
      %v4749 = vsel %vm334, %v4719, 0
      %v4752 = vsel %vm334, %v4720, 0
      %v4755 = vsel %vm334, %v4721, 0
      %v4758 = vsel %vm334, %v4722, 0
      %v4761 = vsel %vm334, %v4723, 0
      %v4764 = vsel %vm334, %v4724, 0
      %v4767 = vsel %vm334, %v4725, 0
      %v4770 = vsel %vm334, %v4726, 0
      %v4773 = vsel %vm334, %v4727, 0
      %v4776 = vsel %vm334, %v4728, 0
      %v4779 = vsel %vm334, %v4729, 0
      %v4782 = vsel %vm334, %v4730, 0
      %v4785 = vsel %vm1152, %v4735, 0
      %4787 = vmatpush.bf16.msra.mxu0 0
      %4788 = vmatpush.bf16.msra.mxu0 0
      %4789 = vmatpush.bf16.msra.mxu0 0
      %4790 = vmatpush.bf16.msra.mxu0 0
      %4791 = vmatpush.bf16.msra.mxu0 0
      %4792 = vmatpush.bf16.msra.mxu0 0
      %4793 = vmatpush.bf16.msra.mxu0 0
      %4794 = vmatpush.bf16.msra.mxu0 %v4785
      %4795 = vmatmul.bf16.gmra.mxu0 %v4737
      %v4796 = vpop.f32.mrf.mxu0
      %v4797 = vadd.f32 0.0, %v4796
      %v4798 = vpop.f32.mrf.mxu0
      %v4799 = vadd.f32 0.0, %v4798
      %4800 = vmatmul.bf16.gmra.mxu0 %v4740
      %v4801 = vpop.f32.mrf.mxu0
      %v4802 = vadd.f32 0.0, %v4801
      %v4803 = vpop.f32.mrf.mxu0
      %v4804 = vadd.f32 0.0, %v4803
      %4805 = vmatmul.bf16.gmra.mxu0 %v4743
      %v4806 = vpop.f32.mrf.mxu0
      %v4807 = vadd.f32 0.0, %v4806
      %v4808 = vpop.f32.mrf.mxu0
      %v4809 = vadd.f32 0.0, %v4808
      %4810 = vmatmul.bf16.gmra.mxu0 %v4746
      %v4811 = vpop.f32.mrf.mxu0
      %v4812 = vadd.f32 0.0, %v4811
      %v4813 = vpop.f32.mrf.mxu0
      %v4814 = vadd.f32 0.0, %v4813
      %4815 = vmatmul.bf16.gmra.mxu0 %v4749
      %v4816 = vpop.f32.mrf.mxu0
      %v4817 = vadd.f32 0.0, %v4816
      %v4818 = vpop.f32.mrf.mxu0
      %v4819 = vadd.f32 0.0, %v4818
      %4820 = vmatmul.bf16.gmra.mxu0 %v4752
      %v4821 = vpop.f32.mrf.mxu0
      %v4822 = vadd.f32 0.0, %v4821
      %v4823 = vpop.f32.mrf.mxu0
      %v4824 = vadd.f32 0.0, %v4823
      %4825 = vmatmul.bf16.gmra.mxu0 %v4755
      %v4826 = vpop.f32.mrf.mxu0
      %v4827 = vadd.f32 0.0, %v4826
      %v4828 = vpop.f32.mrf.mxu0
      %v4829 = vadd.f32 0.0, %v4828
      %4830 = vmatmul.bf16.gmra.mxu0 %v4758
      %v4831 = vpop.f32.mrf.mxu0
      %v4832 = vadd.f32 0.0, %v4831
      %v4833 = vpop.f32.mrf.mxu0
      %v4834 = vadd.f32 0.0, %v4833
      %4835 = vmatmul.bf16.gmra.mxu0 %v4761
      %v4836 = vpop.f32.mrf.mxu0
      %v4837 = vadd.f32 0.0, %v4836
      %v4838 = vpop.f32.mrf.mxu0
      %v4839 = vadd.f32 0.0, %v4838
      %4840 = vmatmul.bf16.gmra.mxu0 %v4764
      %v4841 = vpop.f32.mrf.mxu0
      %v4842 = vadd.f32 0.0, %v4841
      %v4843 = vpop.f32.mrf.mxu0
      %v4844 = vadd.f32 0.0, %v4843
      %4845 = vmatmul.bf16.gmra.mxu0 %v4767
      %v4846 = vpop.f32.mrf.mxu0
      %v4847 = vadd.f32 0.0, %v4846
      %v4848 = vpop.f32.mrf.mxu0
      %v4849 = vadd.f32 0.0, %v4848
      %4850 = vmatmul.bf16.gmra.mxu0 %v4770
      %v4851 = vpop.f32.mrf.mxu0
      %v4852 = vadd.f32 0.0, %v4851
      %v4853 = vpop.f32.mrf.mxu0
      %v4854 = vadd.f32 0.0, %v4853
      %4855 = vmatmul.bf16.gmra.mxu0 %v4773
      %v4856 = vpop.f32.mrf.mxu0
      %v4857 = vadd.f32 0.0, %v4856
      %v4858 = vpop.f32.mrf.mxu0
      %v4859 = vadd.f32 0.0, %v4858
      %4860 = vmatmul.bf16.gmra.mxu0 %v4776
      %v4861 = vpop.f32.mrf.mxu0
      %v4862 = vadd.f32 0.0, %v4861
      %v4863 = vpop.f32.mrf.mxu0
      %v4864 = vadd.f32 0.0, %v4863
      %4865 = vmatmul.bf16.gmra.mxu0 %v4779
      %v4866 = vpop.f32.mrf.mxu0
      %v4867 = vadd.f32 0.0, %v4866
      %v4868 = vpop.f32.mrf.mxu0
      %v4869 = vadd.f32 0.0, %v4868
      %4870 = vmatmul.bf16.gmra.mxu0 %v4782
      %v4871 = vpop.f32.mrf.mxu0
      %v4872 = vadd.f32 0.0, %v4871
      %v4873 = vpop.f32.mrf.mxu0
      %v4874 = vadd.f32 0.0, %v4873
      %4875 = vdwg.mxu0
      %v4876 = vadd.f32 %v4651, %v4797
      %v4877 = vadd.f32 %v4652, %v4799
      %v4878 = vadd.f32 %v4653, %v4802
      %v4879 = vadd.f32 %v4654, %v4804
      %v4880 = vadd.f32 %v4655, %v4807
      %v4881 = vadd.f32 %v4656, %v4809
      %v4882 = vadd.f32 %v4657, %v4812
      %v4883 = vadd.f32 %v4658, %v4814
      %v4884 = vadd.f32 %v4659, %v4817
      %v4885 = vadd.f32 %v4660, %v4819
      %v4886 = vadd.f32 %v4661, %v4822
      %v4887 = vadd.f32 %v4662, %v4824
      %v4888 = vadd.f32 %v4663, %v4827
      %v4889 = vadd.f32 %v4664, %v4829
      %v4890 = vadd.f32 %v4665, %v4832
      %v4891 = vadd.f32 %v4666, %v4834
      %v4892 = vadd.f32 %v4667, %v4837
      %v4893 = vadd.f32 %v4668, %v4839
      %v4894 = vadd.f32 %v4669, %v4842
      %v4895 = vadd.f32 %v4670, %v4844
      %v4896 = vadd.f32 %v4671, %v4847
      %v4897 = vadd.f32 %v4672, %v4849
      %v4898 = vadd.f32 %v4673, %v4852
      %v4899 = vadd.f32 %v4674, %v4854
      %v4900 = vadd.f32 %v4675, %v4857
      %v4901 = vadd.f32 %v4676, %v4859
      %v4902 = vadd.f32 %v4677, %v4862
      %v4903 = vadd.f32 %v4678, %v4864
      %v4904 = vadd.f32 %v4679, %v4867
      %v4905 = vadd.f32 %v4680, %v4869
      %v4906 = vadd.f32 %v4681, %v4872
      %v4907 = vadd.f32 %v4682, %v4874
      %v4908 = vld [vmem:[%s2696] sm:$0xff]
      %v4909 = vld [vmem:[%s2696 + $0x8] sm:$0xff]
      %v4910 = vld [vmem:[%s2696 + $0x18] sm:$0xff]
      %v4911 = vld [vmem:[%s2696 + $0x20] sm:$0xff]
      %v4912 = vld [vmem:[%s2696 + $0x30] sm:$0xff]
      %v4913 = vld [vmem:[%s2696 + $0x38] sm:$0xff]
      %v4914 = vld [vmem:[%s2696 + $0x48] sm:$0xff]
      %v4915 = vld [vmem:[%s2696 + $0x50] sm:$0xff]
      %v4916 = vld [vmem:[%s2696 + $0x60] sm:$0xff]
      %v4917 = vld [vmem:[%s2696 + $0x68] sm:$0xff]
      %v4918 = vld [vmem:[%s2696 + $0x78] sm:$0xff]
      %v4919 = vld [vmem:[%s2696 + $0x80] sm:$0xff]
      %v4920 = vld [vmem:[%s2696 + $0x90] sm:$0xff]
      %v4921 = vld [vmem:[%s2696 + $0x98] sm:$0xff]
      %v4922 = vld [vmem:[%s2696 + $0xa8] sm:$0xff]
      %v4923 = vld [vmem:[%s2696 + $0xb0] sm:$0xff]
      %v4924 = vld [vmem:[%s2696 + $0xc0] sm:$0xff]
      %v4925 = vld [vmem:[%s2696 + $0xc8] sm:$0xff]
      %v4926 = vld [vmem:[%s2696 + $0xd8] sm:$0xff]
      %v4927 = vld [vmem:[%s2696 + $0xe0] sm:$0xff]
      %v4928 = vld [vmem:[%s2696 + $0xf0] sm:$0xff]
      %v4929 = vld [vmem:[%s2696 + $0xf8] sm:$0xff]
      %v4930 = vld [vmem:[%s2696 + $0x108] sm:$0xff]
      %v4931 = vld [vmem:[%s2696 + $0x110] sm:$0xff]
      %v4932 = vld [vmem:[%s2696 + $0x120] sm:$0xff]
      %v4933 = vld [vmem:[%s2696 + $0x128] sm:$0xff]
      %v4934 = vld [vmem:[%s2696 + $0x138] sm:$0xff]
      %v4935 = vld [vmem:[%s2696 + $0x140] sm:$0xff]
      %v4936 = vld [vmem:[%s2696 + $0x150] sm:$0xff]
      %v4937 = vld [vmem:[%s2696 + $0x158] sm:$0xff]
      %v4938 = vld [vmem:[%s2696 + $0x168] sm:$0xff]
      %v4939 = vld [vmem:[%s2696 + $0x170] sm:$0xff]
      %v4940 = vpack.c.bf16 %v4909, %v4908
      %v4941 = vpack.c.bf16 %v4911, %v4910
      %v4942 = vpack.c.bf16 %v4913, %v4912
      %v4943 = vpack.c.bf16 %v4915, %v4914
      %v4944 = vpack.c.bf16 %v4917, %v4916
      %v4945 = vpack.c.bf16 %v4919, %v4918
      %v4946 = vpack.c.bf16 %v4921, %v4920
      %v4947 = vpack.c.bf16 %v4923, %v4922
      %v4948 = vpack.c.bf16 %v4925, %v4924
      %v4949 = vpack.c.bf16 %v4927, %v4926
      %v4950 = vpack.c.bf16 %v4929, %v4928
      %v4951 = vpack.c.bf16 %v4931, %v4930
      %v4952 = vpack.c.bf16 %v4933, %v4932
      %v4953 = vpack.c.bf16 %v4935, %v4934
      %v4954 = vpack.c.bf16 %v4937, %v4936
      %v4955 = vpack.c.bf16 %v4939, %v4938
      %v4956 = vld [vmem:[%s5 + $0xc] sm:$0x8]
      %v4958 = vunpack.c.l.b16 %v4956
      %v4959 = vpack.c.b16 %v4958, %v4958
      %v4960 = vrot.slane %v4959, 3
      %v4962 = vsel %vm334, %v4940, 0
      %v4965 = vsel %vm334, %v4941, 0
      %v4968 = vsel %vm334, %v4942, 0
      %v4971 = vsel %vm334, %v4943, 0
      %v4974 = vsel %vm334, %v4944, 0
      %v4977 = vsel %vm334, %v4945, 0
      %v4980 = vsel %vm334, %v4946, 0
      %v4983 = vsel %vm334, %v4947, 0
      %v4986 = vsel %vm334, %v4948, 0
      %v4989 = vsel %vm334, %v4949, 0
      %v4992 = vsel %vm334, %v4950, 0
      %v4995 = vsel %vm334, %v4951, 0
      %v4998 = vsel %vm334, %v4952, 0
      %v5001 = vsel %vm334, %v4953, 0
      %v5004 = vsel %vm334, %v4954, 0
      %v5007 = vsel %vm334, %v4955, 0
      %v5010 = vsel %vm1152, %v4960, 0
      %5012 = vmatpush.bf16.msra.mxu0 0
      %5013 = vmatpush.bf16.msra.mxu0 0
      %5014 = vmatpush.bf16.msra.mxu0 0
      %5015 = vmatpush.bf16.msra.mxu0 0
      %5016 = vmatpush.bf16.msra.mxu0 0
      %5017 = vmatpush.bf16.msra.mxu0 0
      %5018 = vmatpush.bf16.msra.mxu0 0
      %5019 = vmatpush.bf16.msra.mxu0 %v5010
      %5020 = vmatmul.bf16.gmra.mxu0 %v4962
      %v5021 = vpop.f32.mrf.mxu0
      %v5022 = vadd.f32 0.0, %v5021
      %v5023 = vpop.f32.mrf.mxu0
      %v5024 = vadd.f32 0.0, %v5023
      %5025 = vmatmul.bf16.gmra.mxu0 %v4965
      %v5026 = vpop.f32.mrf.mxu0
      %v5027 = vadd.f32 0.0, %v5026
      %v5028 = vpop.f32.mrf.mxu0
      %v5029 = vadd.f32 0.0, %v5028
      %5030 = vmatmul.bf16.gmra.mxu0 %v4968
      %v5031 = vpop.f32.mrf.mxu0
      %v5032 = vadd.f32 0.0, %v5031
      %v5033 = vpop.f32.mrf.mxu0
      %v5034 = vadd.f32 0.0, %v5033
      %5035 = vmatmul.bf16.gmra.mxu0 %v4971
      %v5036 = vpop.f32.mrf.mxu0
      %v5037 = vadd.f32 0.0, %v5036
      %v5038 = vpop.f32.mrf.mxu0
      %v5039 = vadd.f32 0.0, %v5038
      %5040 = vmatmul.bf16.gmra.mxu0 %v4974
      %v5041 = vpop.f32.mrf.mxu0
      %v5042 = vadd.f32 0.0, %v5041
      %v5043 = vpop.f32.mrf.mxu0
      %v5044 = vadd.f32 0.0, %v5043
      %5045 = vmatmul.bf16.gmra.mxu0 %v4977
      %v5046 = vpop.f32.mrf.mxu0
      %v5047 = vadd.f32 0.0, %v5046
      %v5048 = vpop.f32.mrf.mxu0
      %v5049 = vadd.f32 0.0, %v5048
      %5050 = vmatmul.bf16.gmra.mxu0 %v4980
      %v5051 = vpop.f32.mrf.mxu0
      %v5052 = vadd.f32 0.0, %v5051
      %v5053 = vpop.f32.mrf.mxu0
      %v5054 = vadd.f32 0.0, %v5053
      %5055 = vmatmul.bf16.gmra.mxu0 %v4983
      %v5056 = vpop.f32.mrf.mxu0
      %v5057 = vadd.f32 0.0, %v5056
      %v5058 = vpop.f32.mrf.mxu0
      %v5059 = vadd.f32 0.0, %v5058
      %5060 = vmatmul.bf16.gmra.mxu0 %v4986
      %v5061 = vpop.f32.mrf.mxu0
      %v5062 = vadd.f32 0.0, %v5061
      %v5063 = vpop.f32.mrf.mxu0
      %v5064 = vadd.f32 0.0, %v5063
      %5065 = vmatmul.bf16.gmra.mxu0 %v4989
      %v5066 = vpop.f32.mrf.mxu0
      %v5067 = vadd.f32 0.0, %v5066
      %v5068 = vpop.f32.mrf.mxu0
      %v5069 = vadd.f32 0.0, %v5068
      %5070 = vmatmul.bf16.gmra.mxu0 %v4992
      %v5071 = vpop.f32.mrf.mxu0
      %v5072 = vadd.f32 0.0, %v5071
      %v5073 = vpop.f32.mrf.mxu0
      %v5074 = vadd.f32 0.0, %v5073
      %5075 = vmatmul.bf16.gmra.mxu0 %v4995
      %v5076 = vpop.f32.mrf.mxu0
      %v5077 = vadd.f32 0.0, %v5076
      %v5078 = vpop.f32.mrf.mxu0
      %v5079 = vadd.f32 0.0, %v5078
      %5080 = vmatmul.bf16.gmra.mxu0 %v4998
      %v5081 = vpop.f32.mrf.mxu0
      %v5082 = vadd.f32 0.0, %v5081
      %v5083 = vpop.f32.mrf.mxu0
      %v5084 = vadd.f32 0.0, %v5083
      %5085 = vmatmul.bf16.gmra.mxu0 %v5001
      %v5086 = vpop.f32.mrf.mxu0
      %v5087 = vadd.f32 0.0, %v5086
      %v5088 = vpop.f32.mrf.mxu0
      %v5089 = vadd.f32 0.0, %v5088
      %5090 = vmatmul.bf16.gmra.mxu0 %v5004
      %v5091 = vpop.f32.mrf.mxu0
      %v5092 = vadd.f32 0.0, %v5091
      %v5093 = vpop.f32.mrf.mxu0
      %v5094 = vadd.f32 0.0, %v5093
      %5095 = vmatmul.bf16.gmra.mxu0 %v5007
      %v5096 = vpop.f32.mrf.mxu0
      %v5097 = vadd.f32 0.0, %v5096
      %v5098 = vpop.f32.mrf.mxu0
      %v5099 = vadd.f32 0.0, %v5098
      %5100 = vdwg.mxu0
      %v5101 = vadd.f32 %v4876, %v5022
      %v5102 = vadd.f32 %v4877, %v5024
      %v5103 = vadd.f32 %v4878, %v5027
      %v5104 = vadd.f32 %v4879, %v5029
      %v5105 = vadd.f32 %v4880, %v5032
      %v5106 = vadd.f32 %v4881, %v5034
      %v5107 = vadd.f32 %v4882, %v5037
      %v5108 = vadd.f32 %v4883, %v5039
      %v5109 = vadd.f32 %v4884, %v5042
      %v5110 = vadd.f32 %v4885, %v5044
      %v5111 = vadd.f32 %v4886, %v5047
      %v5112 = vadd.f32 %v4887, %v5049
      %v5113 = vadd.f32 %v4888, %v5052
      %v5114 = vadd.f32 %v4889, %v5054
      %v5115 = vadd.f32 %v4890, %v5057
      %v5116 = vadd.f32 %v4891, %v5059
      %v5117 = vadd.f32 %v4892, %v5062
      %v5118 = vadd.f32 %v4893, %v5064
      %v5119 = vadd.f32 %v4894, %v5067
      %v5120 = vadd.f32 %v4895, %v5069
      %v5121 = vadd.f32 %v4896, %v5072
      %v5122 = vadd.f32 %v4897, %v5074
      %v5123 = vadd.f32 %v4898, %v5077
      %v5124 = vadd.f32 %v4899, %v5079
      %v5125 = vadd.f32 %v4900, %v5082
      %v5126 = vadd.f32 %v4901, %v5084
      %v5127 = vadd.f32 %v4902, %v5087
      %v5128 = vadd.f32 %v4903, %v5089
      %v5129 = vadd.f32 %v4904, %v5092
      %v5130 = vadd.f32 %v4905, %v5094
      %v5131 = vadd.f32 %v4906, %v5097
      %v5132 = vadd.f32 %v4907, %v5099
      %v5133 = vld [vmem:[%s2696 + $0x1] sm:$0xff]
      %v5134 = vld [vmem:[%s2696 + $0x9] sm:$0xff]
      %v5135 = vld [vmem:[%s2696 + $0x19] sm:$0xff]
      %v5136 = vld [vmem:[%s2696 + $0x21] sm:$0xff]
      %v5137 = vld [vmem:[%s2696 + $0x31] sm:$0xff]
      %v5138 = vld [vmem:[%s2696 + $0x39] sm:$0xff]
      %v5139 = vld [vmem:[%s2696 + $0x49] sm:$0xff]
      %v5140 = vld [vmem:[%s2696 + $0x51] sm:$0xff]
      %v5141 = vld [vmem:[%s2696 + $0x61] sm:$0xff]
      %v5142 = vld [vmem:[%s2696 + $0x69] sm:$0xff]
      %v5143 = vld [vmem:[%s2696 + $0x79] sm:$0xff]
      %v5144 = vld [vmem:[%s2696 + $0x81] sm:$0xff]
      %v5145 = vld [vmem:[%s2696 + $0x91] sm:$0xff]
      %v5146 = vld [vmem:[%s2696 + $0x99] sm:$0xff]
      %v5147 = vld [vmem:[%s2696 + $0xa9] sm:$0xff]
      %v5148 = vld [vmem:[%s2696 + $0xb1] sm:$0xff]
      %v5149 = vld [vmem:[%s2696 + $0xc1] sm:$0xff]
      %v5150 = vld [vmem:[%s2696 + $0xc9] sm:$0xff]
      %v5151 = vld [vmem:[%s2696 + $0xd9] sm:$0xff]
      %v5152 = vld [vmem:[%s2696 + $0xe1] sm:$0xff]
      %v5153 = vld [vmem:[%s2696 + $0xf1] sm:$0xff]
      %v5154 = vld [vmem:[%s2696 + $0xf9] sm:$0xff]
      %v5155 = vld [vmem:[%s2696 + $0x109] sm:$0xff]
      %v5156 = vld [vmem:[%s2696 + $0x111] sm:$0xff]
      %v5157 = vld [vmem:[%s2696 + $0x121] sm:$0xff]
      %v5158 = vld [vmem:[%s2696 + $0x129] sm:$0xff]
      %v5159 = vld [vmem:[%s2696 + $0x139] sm:$0xff]
      %v5160 = vld [vmem:[%s2696 + $0x141] sm:$0xff]
      %v5161 = vld [vmem:[%s2696 + $0x151] sm:$0xff]
      %v5162 = vld [vmem:[%s2696 + $0x159] sm:$0xff]
      %v5163 = vld [vmem:[%s2696 + $0x169] sm:$0xff]
      %v5164 = vld [vmem:[%s2696 + $0x171] sm:$0xff]
      %v5165 = vpack.c.bf16 %v5134, %v5133
      %v5166 = vpack.c.bf16 %v5136, %v5135
      %v5167 = vpack.c.bf16 %v5138, %v5137
      %v5168 = vpack.c.bf16 %v5140, %v5139
      %v5169 = vpack.c.bf16 %v5142, %v5141
      %v5170 = vpack.c.bf16 %v5144, %v5143
      %v5171 = vpack.c.bf16 %v5146, %v5145
      %v5172 = vpack.c.bf16 %v5148, %v5147
      %v5173 = vpack.c.bf16 %v5150, %v5149
      %v5174 = vpack.c.bf16 %v5152, %v5151
      %v5175 = vpack.c.bf16 %v5154, %v5153
      %v5176 = vpack.c.bf16 %v5156, %v5155
      %v5177 = vpack.c.bf16 %v5158, %v5157
      %v5178 = vpack.c.bf16 %v5160, %v5159
      %v5179 = vpack.c.bf16 %v5162, %v5161
      %v5180 = vpack.c.bf16 %v5164, %v5163
      %v5181 = vld [vmem:[%s5 + $0x10] sm:$0x1]
      %v5183 = vsel %vm334, %v5165, 0
      %v5186 = vsel %vm334, %v5166, 0
      %v5189 = vsel %vm334, %v5167, 0
      %v5192 = vsel %vm334, %v5168, 0
      %v5195 = vsel %vm334, %v5169, 0
      %v5198 = vsel %vm334, %v5170, 0
      %v5201 = vsel %vm334, %v5171, 0
      %v5204 = vsel %vm334, %v5172, 0
      %v5207 = vsel %vm334, %v5173, 0
      %v5210 = vsel %vm334, %v5174, 0
      %v5213 = vsel %vm334, %v5175, 0
      %v5216 = vsel %vm334, %v5176, 0
      %v5219 = vsel %vm334, %v5177, 0
      %v5222 = vsel %vm334, %v5178, 0
      %v5225 = vsel %vm334, %v5179, 0
      %v5228 = vsel %vm334, %v5180, 0
      %v5231 = vsel %vm1152, %v5181, 0
      %5233 = vmatpush.bf16.msra.mxu0 0
      %5234 = vmatpush.bf16.msra.mxu0 0
      %5235 = vmatpush.bf16.msra.mxu0 0
      %5236 = vmatpush.bf16.msra.mxu0 0
      %5237 = vmatpush.bf16.msra.mxu0 0
      %5238 = vmatpush.bf16.msra.mxu0 0
      %5239 = vmatpush.bf16.msra.mxu0 0
      %5240 = vmatpush.bf16.msra.mxu0 %v5231
      %5241 = vmatmul.bf16.gmra.mxu0 %v5183
      %v5242 = vpop.f32.mrf.mxu0
      %v5243 = vadd.f32 0.0, %v5242
      %v5244 = vpop.f32.mrf.mxu0
      %v5245 = vadd.f32 0.0, %v5244
      %5246 = vmatmul.bf16.gmra.mxu0 %v5186
      %v5247 = vpop.f32.mrf.mxu0
      %v5248 = vadd.f32 0.0, %v5247
      %v5249 = vpop.f32.mrf.mxu0
      %v5250 = vadd.f32 0.0, %v5249
      %5251 = vmatmul.bf16.gmra.mxu0 %v5189
      %v5252 = vpop.f32.mrf.mxu0
      %v5253 = vadd.f32 0.0, %v5252
      %v5254 = vpop.f32.mrf.mxu0
      %v5255 = vadd.f32 0.0, %v5254
      %5256 = vmatmul.bf16.gmra.mxu0 %v5192
      %v5257 = vpop.f32.mrf.mxu0
      %v5258 = vadd.f32 0.0, %v5257
      %v5259 = vpop.f32.mrf.mxu0
      %v5260 = vadd.f32 0.0, %v5259
      %5261 = vmatmul.bf16.gmra.mxu0 %v5195
      %v5262 = vpop.f32.mrf.mxu0
      %v5263 = vadd.f32 0.0, %v5262
      %v5264 = vpop.f32.mrf.mxu0
      %v5265 = vadd.f32 0.0, %v5264
      %5266 = vmatmul.bf16.gmra.mxu0 %v5198
      %v5267 = vpop.f32.mrf.mxu0
      %v5268 = vadd.f32 0.0, %v5267
      %v5269 = vpop.f32.mrf.mxu0
      %v5270 = vadd.f32 0.0, %v5269
      %5271 = vmatmul.bf16.gmra.mxu0 %v5201
      %v5272 = vpop.f32.mrf.mxu0
      %v5273 = vadd.f32 0.0, %v5272
      %v5274 = vpop.f32.mrf.mxu0
      %v5275 = vadd.f32 0.0, %v5274
      %5276 = vmatmul.bf16.gmra.mxu0 %v5204
      %v5277 = vpop.f32.mrf.mxu0
      %v5278 = vadd.f32 0.0, %v5277
      %v5279 = vpop.f32.mrf.mxu0
      %v5280 = vadd.f32 0.0, %v5279
      %5281 = vmatmul.bf16.gmra.mxu0 %v5207
      %v5282 = vpop.f32.mrf.mxu0
      %v5283 = vadd.f32 0.0, %v5282
      %v5284 = vpop.f32.mrf.mxu0
      %v5285 = vadd.f32 0.0, %v5284
      %5286 = vmatmul.bf16.gmra.mxu0 %v5210
      %v5287 = vpop.f32.mrf.mxu0
      %v5288 = vadd.f32 0.0, %v5287
      %v5289 = vpop.f32.mrf.mxu0
      %v5290 = vadd.f32 0.0, %v5289
      %5291 = vmatmul.bf16.gmra.mxu0 %v5213
      %v5292 = vpop.f32.mrf.mxu0
      %v5293 = vadd.f32 0.0, %v5292
      %v5294 = vpop.f32.mrf.mxu0
      %v5295 = vadd.f32 0.0, %v5294
      %5296 = vmatmul.bf16.gmra.mxu0 %v5216
      %v5297 = vpop.f32.mrf.mxu0
      %v5298 = vadd.f32 0.0, %v5297
      %v5299 = vpop.f32.mrf.mxu0
      %v5300 = vadd.f32 0.0, %v5299
      %5301 = vmatmul.bf16.gmra.mxu0 %v5219
      %v5302 = vpop.f32.mrf.mxu0
      %v5303 = vadd.f32 0.0, %v5302
      %v5304 = vpop.f32.mrf.mxu0
      %v5305 = vadd.f32 0.0, %v5304
      %5306 = vmatmul.bf16.gmra.mxu0 %v5222
      %v5307 = vpop.f32.mrf.mxu0
      %v5308 = vadd.f32 0.0, %v5307
      %v5309 = vpop.f32.mrf.mxu0
      %v5310 = vadd.f32 0.0, %v5309
      %5311 = vmatmul.bf16.gmra.mxu0 %v5225
      %v5312 = vpop.f32.mrf.mxu0
      %v5313 = vadd.f32 0.0, %v5312
      %v5314 = vpop.f32.mrf.mxu0
      %v5315 = vadd.f32 0.0, %v5314
      %5316 = vmatmul.bf16.gmra.mxu0 %v5228
      %v5317 = vpop.f32.mrf.mxu0
      %v5318 = vadd.f32 0.0, %v5317
      %v5319 = vpop.f32.mrf.mxu0
      %v5320 = vadd.f32 0.0, %v5319
      %5321 = vdwg.mxu0
      %v5322 = vadd.f32 %v5101, %v5243
      %v5323 = vadd.f32 %v5102, %v5245
      %v5324 = vadd.f32 %v5103, %v5248
      %v5325 = vadd.f32 %v5104, %v5250
      %v5326 = vadd.f32 %v5105, %v5253
      %v5327 = vadd.f32 %v5106, %v5255
      %v5328 = vadd.f32 %v5107, %v5258
      %v5329 = vadd.f32 %v5108, %v5260
      %v5330 = vadd.f32 %v5109, %v5263
      %v5331 = vadd.f32 %v5110, %v5265
      %v5332 = vadd.f32 %v5111, %v5268
      %v5333 = vadd.f32 %v5112, %v5270
      %v5334 = vadd.f32 %v5113, %v5273
      %v5335 = vadd.f32 %v5114, %v5275
      %v5336 = vadd.f32 %v5115, %v5278
      %v5337 = vadd.f32 %v5116, %v5280
      %v5338 = vadd.f32 %v5117, %v5283
      %v5339 = vadd.f32 %v5118, %v5285
      %v5340 = vadd.f32 %v5119, %v5288
      %v5341 = vadd.f32 %v5120, %v5290
      %v5342 = vadd.f32 %v5121, %v5293
      %v5343 = vadd.f32 %v5122, %v5295
      %v5344 = vadd.f32 %v5123, %v5298
      %v5345 = vadd.f32 %v5124, %v5300
      %v5346 = vadd.f32 %v5125, %v5303
      %v5347 = vadd.f32 %v5126, %v5305
      %v5348 = vadd.f32 %v5127, %v5308
      %v5349 = vadd.f32 %v5128, %v5310
      %v5350 = vadd.f32 %v5129, %v5313
      %v5351 = vadd.f32 %v5130, %v5315
      %v5352 = vadd.f32 %v5131, %v5318
      %v5353 = vadd.f32 %v5132, %v5320
      %v5354 = vld [vmem:[%s2696 + $0x2] sm:$0xff]
      %v5355 = vld [vmem:[%s2696 + $0xa] sm:$0xff]
      %v5356 = vld [vmem:[%s2696 + $0x1a] sm:$0xff]
      %v5357 = vld [vmem:[%s2696 + $0x22] sm:$0xff]
      %v5358 = vld [vmem:[%s2696 + $0x32] sm:$0xff]
      %v5359 = vld [vmem:[%s2696 + $0x3a] sm:$0xff]
      %v5360 = vld [vmem:[%s2696 + $0x4a] sm:$0xff]
      %v5361 = vld [vmem:[%s2696 + $0x52] sm:$0xff]
      %v5362 = vld [vmem:[%s2696 + $0x62] sm:$0xff]
      %v5363 = vld [vmem:[%s2696 + $0x6a] sm:$0xff]
      %v5364 = vld [vmem:[%s2696 + $0x7a] sm:$0xff]
      %v5365 = vld [vmem:[%s2696 + $0x82] sm:$0xff]
      %v5366 = vld [vmem:[%s2696 + $0x92] sm:$0xff]
      %v5367 = vld [vmem:[%s2696 + $0x9a] sm:$0xff]
      %v5368 = vld [vmem:[%s2696 + $0xaa] sm:$0xff]
      %v5369 = vld [vmem:[%s2696 + $0xb2] sm:$0xff]
      %v5370 = vld [vmem:[%s2696 + $0xc2] sm:$0xff]
      %v5371 = vld [vmem:[%s2696 + $0xca] sm:$0xff]
      %v5372 = vld [vmem:[%s2696 + $0xda] sm:$0xff]
      %v5373 = vld [vmem:[%s2696 + $0xe2] sm:$0xff]
      %v5374 = vld [vmem:[%s2696 + $0xf2] sm:$0xff]
      %v5375 = vld [vmem:[%s2696 + $0xfa] sm:$0xff]
      %v5376 = vld [vmem:[%s2696 + $0x10a] sm:$0xff]
      %v5377 = vld [vmem:[%s2696 + $0x112] sm:$0xff]
      %v5378 = vld [vmem:[%s2696 + $0x122] sm:$0xff]
      %v5379 = vld [vmem:[%s2696 + $0x12a] sm:$0xff]
      %v5380 = vld [vmem:[%s2696 + $0x13a] sm:$0xff]
      %v5381 = vld [vmem:[%s2696 + $0x142] sm:$0xff]
      %v5382 = vld [vmem:[%s2696 + $0x152] sm:$0xff]
      %v5383 = vld [vmem:[%s2696 + $0x15a] sm:$0xff]
      %v5384 = vld [vmem:[%s2696 + $0x16a] sm:$0xff]
      %v5385 = vld [vmem:[%s2696 + $0x172] sm:$0xff]
      %v5386 = vpack.c.bf16 %v5355, %v5354
      %v5387 = vpack.c.bf16 %v5357, %v5356
      %v5388 = vpack.c.bf16 %v5359, %v5358
      %v5389 = vpack.c.bf16 %v5361, %v5360
      %v5390 = vpack.c.bf16 %v5363, %v5362
      %v5391 = vpack.c.bf16 %v5365, %v5364
      %v5392 = vpack.c.bf16 %v5367, %v5366
      %v5393 = vpack.c.bf16 %v5369, %v5368
      %v5394 = vpack.c.bf16 %v5371, %v5370
      %v5395 = vpack.c.bf16 %v5373, %v5372
      %v5396 = vpack.c.bf16 %v5375, %v5374
      %v5397 = vpack.c.bf16 %v5377, %v5376
      %v5398 = vpack.c.bf16 %v5379, %v5378
      %v5399 = vpack.c.bf16 %v5381, %v5380
      %v5400 = vpack.c.bf16 %v5383, %v5382
      %v5401 = vpack.c.bf16 %v5385, %v5384
      %v5402 = vld [vmem:[%s5 + $0x10] sm:$0x2]
      %v5404 = vunpack.c.l.b16 %v5402
      %v5405 = vpack.c.b16 %v5404, %v5404
      %v5406 = vrot.slane %v5405, 1
      %v5408 = vsel %vm334, %v5386, 0
      %v5411 = vsel %vm334, %v5387, 0
      %v5414 = vsel %vm334, %v5388, 0
      %v5417 = vsel %vm334, %v5389, 0
      %v5420 = vsel %vm334, %v5390, 0
      %v5423 = vsel %vm334, %v5391, 0
      %v5426 = vsel %vm334, %v5392, 0
      %v5429 = vsel %vm334, %v5393, 0
      %v5432 = vsel %vm334, %v5394, 0
      %v5435 = vsel %vm334, %v5395, 0
      %v5438 = vsel %vm334, %v5396, 0
      %v5441 = vsel %vm334, %v5397, 0
      %v5444 = vsel %vm334, %v5398, 0
      %v5447 = vsel %vm334, %v5399, 0
      %v5450 = vsel %vm334, %v5400, 0
      %v5453 = vsel %vm334, %v5401, 0
      %v5456 = vsel %vm1152, %v5406, 0
      %5458 = vmatpush.bf16.msra.mxu0 0
      %5459 = vmatpush.bf16.msra.mxu0 0
      %5460 = vmatpush.bf16.msra.mxu0 0
      %5461 = vmatpush.bf16.msra.mxu0 0
      %5462 = vmatpush.bf16.msra.mxu0 0
      %5463 = vmatpush.bf16.msra.mxu0 0
      %5464 = vmatpush.bf16.msra.mxu0 0
      %5465 = vmatpush.bf16.msra.mxu0 %v5456
      %5466 = vmatmul.bf16.gmra.mxu0 %v5408
      %v5467 = vpop.f32.mrf.mxu0
      %v5468 = vadd.f32 0.0, %v5467
      %v5469 = vpop.f32.mrf.mxu0
      %v5470 = vadd.f32 0.0, %v5469
      %5471 = vmatmul.bf16.gmra.mxu0 %v5411
      %v5472 = vpop.f32.mrf.mxu0
      %v5473 = vadd.f32 0.0, %v5472
      %v5474 = vpop.f32.mrf.mxu0
      %v5475 = vadd.f32 0.0, %v5474
      %5476 = vmatmul.bf16.gmra.mxu0 %v5414
      %v5477 = vpop.f32.mrf.mxu0
      %v5478 = vadd.f32 0.0, %v5477
      %v5479 = vpop.f32.mrf.mxu0
      %v5480 = vadd.f32 0.0, %v5479
      %5481 = vmatmul.bf16.gmra.mxu0 %v5417
      %v5482 = vpop.f32.mrf.mxu0
      %v5483 = vadd.f32 0.0, %v5482
      %v5484 = vpop.f32.mrf.mxu0
      %v5485 = vadd.f32 0.0, %v5484
      %5486 = vmatmul.bf16.gmra.mxu0 %v5420
      %v5487 = vpop.f32.mrf.mxu0
      %v5488 = vadd.f32 0.0, %v5487
      %v5489 = vpop.f32.mrf.mxu0
      %v5490 = vadd.f32 0.0, %v5489
      %5491 = vmatmul.bf16.gmra.mxu0 %v5423
      %v5492 = vpop.f32.mrf.mxu0
      %v5493 = vadd.f32 0.0, %v5492
      %v5494 = vpop.f32.mrf.mxu0
      %v5495 = vadd.f32 0.0, %v5494
      %5496 = vmatmul.bf16.gmra.mxu0 %v5426
      %v5497 = vpop.f32.mrf.mxu0
      %v5498 = vadd.f32 0.0, %v5497
      %v5499 = vpop.f32.mrf.mxu0
      %v5500 = vadd.f32 0.0, %v5499
      %5501 = vmatmul.bf16.gmra.mxu0 %v5429
      %v5502 = vpop.f32.mrf.mxu0
      %v5503 = vadd.f32 0.0, %v5502
      %v5504 = vpop.f32.mrf.mxu0
      %v5505 = vadd.f32 0.0, %v5504
      %5506 = vmatmul.bf16.gmra.mxu0 %v5432
      %v5507 = vpop.f32.mrf.mxu0
      %v5508 = vadd.f32 0.0, %v5507
      %v5509 = vpop.f32.mrf.mxu0
      %v5510 = vadd.f32 0.0, %v5509
      %5511 = vmatmul.bf16.gmra.mxu0 %v5435
      %v5512 = vpop.f32.mrf.mxu0
      %v5513 = vadd.f32 0.0, %v5512
      %v5514 = vpop.f32.mrf.mxu0
      %v5515 = vadd.f32 0.0, %v5514
      %5516 = vmatmul.bf16.gmra.mxu0 %v5438
      %v5517 = vpop.f32.mrf.mxu0
      %v5518 = vadd.f32 0.0, %v5517
      %v5519 = vpop.f32.mrf.mxu0
      %v5520 = vadd.f32 0.0, %v5519
      %5521 = vmatmul.bf16.gmra.mxu0 %v5441
      %v5522 = vpop.f32.mrf.mxu0
      %v5523 = vadd.f32 0.0, %v5522
      %v5524 = vpop.f32.mrf.mxu0
      %v5525 = vadd.f32 0.0, %v5524
      %5526 = vmatmul.bf16.gmra.mxu0 %v5444
      %v5527 = vpop.f32.mrf.mxu0
      %v5528 = vadd.f32 0.0, %v5527
      %v5529 = vpop.f32.mrf.mxu0
      %v5530 = vadd.f32 0.0, %v5529
      %5531 = vmatmul.bf16.gmra.mxu0 %v5447
      %v5532 = vpop.f32.mrf.mxu0
      %v5533 = vadd.f32 0.0, %v5532
      %v5534 = vpop.f32.mrf.mxu0
      %v5535 = vadd.f32 0.0, %v5534
      %5536 = vmatmul.bf16.gmra.mxu0 %v5450
      %v5537 = vpop.f32.mrf.mxu0
      %v5538 = vadd.f32 0.0, %v5537
      %v5539 = vpop.f32.mrf.mxu0
      %v5540 = vadd.f32 0.0, %v5539
      %5541 = vmatmul.bf16.gmra.mxu0 %v5453
      %v5542 = vpop.f32.mrf.mxu0
      %v5543 = vadd.f32 0.0, %v5542
      %v5544 = vpop.f32.mrf.mxu0
      %v5545 = vadd.f32 0.0, %v5544
      %5546 = vdwg.mxu0
      %v5547 = vadd.f32 %v5322, %v5468
      %v5548 = vadd.f32 %v5323, %v5470
      %v5549 = vadd.f32 %v5324, %v5473
      %v5550 = vadd.f32 %v5325, %v5475
      %v5551 = vadd.f32 %v5326, %v5478
      %v5552 = vadd.f32 %v5327, %v5480
      %v5553 = vadd.f32 %v5328, %v5483
      %v5554 = vadd.f32 %v5329, %v5485
      %v5555 = vadd.f32 %v5330, %v5488
      %v5556 = vadd.f32 %v5331, %v5490
      %v5557 = vadd.f32 %v5332, %v5493
      %v5558 = vadd.f32 %v5333, %v5495
      %v5559 = vadd.f32 %v5334, %v5498
      %v5560 = vadd.f32 %v5335, %v5500
      %v5561 = vadd.f32 %v5336, %v5503
      %v5562 = vadd.f32 %v5337, %v5505
      %v5563 = vadd.f32 %v5338, %v5508
      %v5564 = vadd.f32 %v5339, %v5510
      %v5565 = vadd.f32 %v5340, %v5513
      %v5566 = vadd.f32 %v5341, %v5515
      %v5567 = vadd.f32 %v5342, %v5518
      %v5568 = vadd.f32 %v5343, %v5520
      %v5569 = vadd.f32 %v5344, %v5523
      %v5570 = vadd.f32 %v5345, %v5525
      %v5571 = vadd.f32 %v5346, %v5528
      %v5572 = vadd.f32 %v5347, %v5530
      %v5573 = vadd.f32 %v5348, %v5533
      %v5574 = vadd.f32 %v5349, %v5535
      %v5575 = vadd.f32 %v5350, %v5538
      %v5576 = vadd.f32 %v5351, %v5540
      %v5577 = vadd.f32 %v5352, %v5543
      %v5578 = vadd.f32 %v5353, %v5545
      %v5579 = vld [vmem:[%s6 + $0x1] sm:$0x1]
      %v5580 = vperm.slane %v5579, 0
      %v5581 = vadd.f32 %v5547, %v5580
      %v5582 = vadd.f32 %v5548, %v5580
      %v5583 = vadd.f32 %v5549, %v5580
      %v5584 = vadd.f32 %v5550, %v5580
      %v5585 = vadd.f32 %v5551, %v5580
      %v5586 = vadd.f32 %v5552, %v5580
      %v5587 = vadd.f32 %v5553, %v5580
      %v5588 = vadd.f32 %v5554, %v5580
      %v5589 = vadd.f32 %v5555, %v5580
      %v5590 = vadd.f32 %v5556, %v5580
      %v5591 = vadd.f32 %v5557, %v5580
      %v5592 = vadd.f32 %v5558, %v5580
      %v5593 = vadd.f32 %v5559, %v5580
      %v5594 = vadd.f32 %v5560, %v5580
      %v5595 = vadd.f32 %v5561, %v5580
      %v5596 = vadd.f32 %v5562, %v5580
      %v5597 = vadd.f32 %v5563, %v5580
      %v5598 = vadd.f32 %v5564, %v5580
      %v5599 = vadd.f32 %v5565, %v5580
      %v5600 = vadd.f32 %v5566, %v5580
      %v5601 = vadd.f32 %v5567, %v5580
      %v5602 = vadd.f32 %v5568, %v5580
      %v5603 = vadd.f32 %v5569, %v5580
      %v5604 = vadd.f32 %v5570, %v5580
      %v5605 = vadd.f32 %v5571, %v5580
      %v5606 = vadd.f32 %v5572, %v5580
      %v5607 = vadd.f32 %v5573, %v5580
      %v5608 = vadd.f32 %v5574, %v5580
      %v5609 = vadd.f32 %v5575, %v5580
      %v5610 = vadd.f32 %v5576, %v5580
      %v5611 = vadd.f32 %v5577, %v5580
      %v5612 = vadd.f32 %v5578, %v5580
      %v5613 = vsub.f32 0.0, %v5581
      %v5614 = vsub.f32 0.0, %v5582
      %v5615 = vsub.f32 0.0, %v5583
      %v5616 = vsub.f32 0.0, %v5584
      %v5617 = vsub.f32 0.0, %v5585
      %v5618 = vsub.f32 0.0, %v5586
      %v5619 = vsub.f32 0.0, %v5587
      %v5620 = vsub.f32 0.0, %v5588
      %v5621 = vsub.f32 0.0, %v5589
      %v5622 = vsub.f32 0.0, %v5590
      %v5623 = vsub.f32 0.0, %v5591
      %v5624 = vsub.f32 0.0, %v5592
      %v5625 = vsub.f32 0.0, %v5593
      %v5626 = vsub.f32 0.0, %v5594
      %v5627 = vsub.f32 0.0, %v5595
      %v5628 = vsub.f32 0.0, %v5596
      %v5629 = vsub.f32 0.0, %v5597
      %v5630 = vsub.f32 0.0, %v5598
      %v5631 = vsub.f32 0.0, %v5599
      %v5632 = vsub.f32 0.0, %v5600
      %v5633 = vsub.f32 0.0, %v5601
      %v5634 = vsub.f32 0.0, %v5602
      %v5635 = vsub.f32 0.0, %v5603
      %v5636 = vsub.f32 0.0, %v5604
      %v5637 = vsub.f32 0.0, %v5605
      %v5638 = vsub.f32 0.0, %v5606
      %v5639 = vsub.f32 0.0, %v5607
      %v5640 = vsub.f32 0.0, %v5608
      %v5641 = vsub.f32 0.0, %v5609
      %v5642 = vsub.f32 0.0, %v5610
      %v5643 = vsub.f32 0.0, %v5611
      %v5644 = vsub.f32 0.0, %v5612
      %v5645 = vmul.f32 %v5613, 1.442695
      %v5646 = vpow.pop %v5645
      %v5647 = vmul.f32 %v5614, 1.442695
      %v5648 = vpow.pop %v5647
      %v5649 = vmul.f32 %v5615, 1.442695
      %v5650 = vpow.pop %v5649
      %v5651 = vmul.f32 %v5616, 1.442695
      %v5652 = vpow.pop %v5651
      %v5653 = vmul.f32 %v5617, 1.442695
      %v5654 = vpow.pop %v5653
      %v5655 = vmul.f32 %v5618, 1.442695
      %v5656 = vpow.pop %v5655
      %v5657 = vmul.f32 %v5619, 1.442695
      %v5658 = vpow.pop %v5657
      %v5659 = vmul.f32 %v5620, 1.442695
      %v5660 = vpow.pop %v5659
      %v5661 = vmul.f32 %v5621, 1.442695
      %v5662 = vpow.pop %v5661
      %v5663 = vmul.f32 %v5622, 1.442695
      %v5664 = vpow.pop %v5663
      %v5665 = vmul.f32 %v5623, 1.442695
      %v5666 = vpow.pop %v5665
      %v5667 = vmul.f32 %v5624, 1.442695
      %v5668 = vpow.pop %v5667
      %v5669 = vmul.f32 %v5625, 1.442695
      %v5670 = vpow.pop %v5669
      %v5671 = vmul.f32 %v5626, 1.442695
      %v5672 = vpow.pop %v5671
      %v5673 = vmul.f32 %v5627, 1.442695
      %v5674 = vpow.pop %v5673
      %v5675 = vmul.f32 %v5628, 1.442695
      %v5676 = vpow.pop %v5675
      %v5677 = vmul.f32 %v5629, 1.442695
      %v5678 = vpow.pop %v5677
      %v5679 = vmul.f32 %v5630, 1.442695
      %v5680 = vpow.pop %v5679
      %v5681 = vmul.f32 %v5631, 1.442695
      %v5682 = vpow.pop %v5681
      %v5683 = vmul.f32 %v5632, 1.442695
      %v5684 = vpow.pop %v5683
      %v5685 = vmul.f32 %v5633, 1.442695
      %v5686 = vpow.pop %v5685
      %v5687 = vmul.f32 %v5634, 1.442695
      %v5688 = vpow.pop %v5687
      %v5689 = vmul.f32 %v5635, 1.442695
      %v5690 = vpow.pop %v5689
      %v5691 = vmul.f32 %v5636, 1.442695
      %v5692 = vpow.pop %v5691
      %v5693 = vmul.f32 %v5637, 1.442695
      %v5694 = vpow.pop %v5693
      %v5695 = vmul.f32 %v5638, 1.442695
      %v5696 = vpow.pop %v5695
      %v5697 = vmul.f32 %v5639, 1.442695
      %v5698 = vpow.pop %v5697
      %v5699 = vmul.f32 %v5640, 1.442695
      %v5700 = vpow.pop %v5699
      %v5701 = vmul.f32 %v5641, 1.442695
      %v5702 = vpow.pop %v5701
      %v5703 = vmul.f32 %v5642, 1.442695
      %v5704 = vpow.pop %v5703
      %v5705 = vmul.f32 %v5643, 1.442695
      %v5706 = vpow.pop %v5705
      %v5707 = vmul.f32 %v5644, 1.442695
      %v5708 = vpow.pop %v5707
      %v5709 = vadd.f32 %v5646, 1.0
      %v5710 = vadd.f32 %v5648, 1.0
      %v5711 = vadd.f32 %v5650, 1.0
      %v5712 = vadd.f32 %v5652, 1.0
      %v5713 = vadd.f32 %v5654, 1.0
      %v5714 = vadd.f32 %v5656, 1.0
      %v5715 = vadd.f32 %v5658, 1.0
      %v5716 = vadd.f32 %v5660, 1.0
      %v5717 = vadd.f32 %v5662, 1.0
      %v5718 = vadd.f32 %v5664, 1.0
      %v5719 = vadd.f32 %v5666, 1.0
      %v5720 = vadd.f32 %v5668, 1.0
      %v5721 = vadd.f32 %v5670, 1.0
      %v5722 = vadd.f32 %v5672, 1.0
      %v5723 = vadd.f32 %v5674, 1.0
      %v5724 = vadd.f32 %v5676, 1.0
      %v5725 = vadd.f32 %v5678, 1.0
      %v5726 = vadd.f32 %v5680, 1.0
      %v5727 = vadd.f32 %v5682, 1.0
      %v5728 = vadd.f32 %v5684, 1.0
      %v5729 = vadd.f32 %v5686, 1.0
      %v5730 = vadd.f32 %v5688, 1.0
      %v5731 = vadd.f32 %v5690, 1.0
      %v5732 = vadd.f32 %v5692, 1.0
      %v5733 = vadd.f32 %v5694, 1.0
      %v5734 = vadd.f32 %v5696, 1.0
      %v5735 = vadd.f32 %v5698, 1.0
      %v5736 = vadd.f32 %v5700, 1.0
      %v5737 = vadd.f32 %v5702, 1.0
      %v5738 = vadd.f32 %v5704, 1.0
      %v5739 = vadd.f32 %v5706, 1.0
      %v5740 = vadd.f32 %v5708, 1.0
      %v5741 = vrcp.pop %v5709
      %v5742 = vrcp.pop %v5710
      %v5743 = vrcp.pop %v5711
      %v5744 = vrcp.pop %v5712
      %v5745 = vrcp.pop %v5713
      %v5746 = vrcp.pop %v5714
      %v5747 = vrcp.pop %v5715
      %v5748 = vrcp.pop %v5716
      %v5749 = vrcp.pop %v5717
      %v5750 = vrcp.pop %v5718
      %v5751 = vrcp.pop %v5719
      %v5752 = vrcp.pop %v5720
      %v5753 = vrcp.pop %v5721
      %v5754 = vrcp.pop %v5722
      %v5755 = vrcp.pop %v5723
      %v5756 = vrcp.pop %v5724
      %v5757 = vrcp.pop %v5725
      %v5758 = vrcp.pop %v5726
      %v5759 = vrcp.pop %v5727
      %v5760 = vrcp.pop %v5728
      %v5761 = vrcp.pop %v5729
      %v5762 = vrcp.pop %v5730
      %v5763 = vrcp.pop %v5731
      %v5764 = vrcp.pop %v5732
      %v5765 = vrcp.pop %v5733
      %v5766 = vrcp.pop %v5734
      %v5767 = vrcp.pop %v5735
      %v5768 = vrcp.pop %v5736
      %v5769 = vrcp.pop %v5737
      %v5770 = vrcp.pop %v5738
      %v5771 = vrcp.pop %v5739
      %v5772 = vrcp.pop %v5740
      %v5773 = vmul.f32 %v5581, %v5741
      %v5774 = vmul.f32 %v5582, %v5742
      %v5775 = vmul.f32 %v5583, %v5743
      %v5776 = vmul.f32 %v5584, %v5744
      %v5777 = vmul.f32 %v5585, %v5745
      %v5778 = vmul.f32 %v5586, %v5746
      %v5779 = vmul.f32 %v5587, %v5747
      %v5780 = vmul.f32 %v5588, %v5748
      %v5781 = vmul.f32 %v5589, %v5749
      %v5782 = vmul.f32 %v5590, %v5750
      %v5783 = vmul.f32 %v5591, %v5751
      %v5784 = vmul.f32 %v5592, %v5752
      %v5785 = vmul.f32 %v5593, %v5753
      %v5786 = vmul.f32 %v5594, %v5754
      %v5787 = vmul.f32 %v5595, %v5755
      %v5788 = vmul.f32 %v5596, %v5756
      %v5789 = vmul.f32 %v5597, %v5757
      %v5790 = vmul.f32 %v5598, %v5758
      %v5791 = vmul.f32 %v5599, %v5759
      %v5792 = vmul.f32 %v5600, %v5760
      %v5793 = vmul.f32 %v5601, %v5761
      %v5794 = vmul.f32 %v5602, %v5762
      %v5795 = vmul.f32 %v5603, %v5763
      %v5796 = vmul.f32 %v5604, %v5764
      %v5797 = vmul.f32 %v5605, %v5765
      %v5798 = vmul.f32 %v5606, %v5766
      %v5799 = vmul.f32 %v5607, %v5767
      %v5800 = vmul.f32 %v5608, %v5768
      %v5801 = vmul.f32 %v5609, %v5769
      %v5802 = vmul.f32 %v5610, %v5770
      %v5803 = vmul.f32 %v5611, %v5771
      %v5804 = vmul.f32 %v5612, %v5772
      %v5805 = vadd.f32 %v5773, %v1034
      %v5806 = vadd.f32 %v5774, %v1035
      %v5807 = vadd.f32 %v5775, %v1036
      %v5808 = vadd.f32 %v5776, %v1037
      %v5809 = vadd.f32 %v5777, %v1038
      %v5810 = vadd.f32 %v5778, %v1039
      %v5811 = vadd.f32 %v5779, %v1040
      %v5812 = vadd.f32 %v5780, %v1041
      %v5813 = vadd.f32 %v5781, %v1042
      %v5814 = vadd.f32 %v5782, %v1043
      %v5815 = vadd.f32 %v5783, %v1044
      %v5816 = vadd.f32 %v5784, %v1045
      %v5817 = vadd.f32 %v5785, %v1046
      %v5818 = vadd.f32 %v5786, %v1047
      %v5819 = vadd.f32 %v5787, %v1048
      %v5820 = vadd.f32 %v5788, %v1049
      %v5821 = vadd.f32 %v5789, %v1050
      %v5822 = vadd.f32 %v5790, %v1051
      %v5823 = vadd.f32 %v5791, %v1052
      %v5824 = vadd.f32 %v5792, %v1053
      %v5825 = vadd.f32 %v5793, %v1054
      %v5826 = vadd.f32 %v5794, %v1055
      %v5827 = vadd.f32 %v5795, %v1056
      %v5828 = vadd.f32 %v5796, %v1057
      %v5829 = vadd.f32 %v5797, %v1058
      %v5830 = vadd.f32 %v5798, %v1059
      %v5831 = vadd.f32 %v5799, %v1060
      %v5832 = vadd.f32 %v5800, %v1061
      %v5833 = vadd.f32 %v5801, %v1062
      %v5834 = vadd.f32 %v5802, %v1063
      %v5835 = vadd.f32 %v5803, %v1064
      %v5836 = vadd.f32 %v5804, %v1065
      %v5837 = vpack.c.bf16 %v5806, %v5805
      %v5838 = vpack.c.bf16 %v5808, %v5807
      %v5839 = vpack.c.bf16 %v5810, %v5809
      %v5840 = vpack.c.bf16 %v5812, %v5811
      %v5841 = vpack.c.bf16 %v5814, %v5813
      %v5842 = vpack.c.bf16 %v5816, %v5815
      %v5843 = vpack.c.bf16 %v5818, %v5817
      %v5844 = vpack.c.bf16 %v5820, %v5819
      %v5845 = vpack.c.bf16 %v5822, %v5821
      %v5846 = vpack.c.bf16 %v5824, %v5823
      %v5847 = vpack.c.bf16 %v5826, %v5825
      %v5848 = vpack.c.bf16 %v5828, %v5827
      %v5849 = vpack.c.bf16 %v5830, %v5829
      %v5850 = vpack.c.bf16 %v5832, %v5831
      %v5851 = vpack.c.bf16 %v5834, %v5833
      %v5852 = vpack.c.bf16 %v5836, %v5835
      %v5853 = vld [vmem:[%s7] sm:$0x4]
      %v5855 = vunpack.c.l.b16 %v5853
      %v5856 = vpack.c.b16 %v5855, %v5855
      %v5857 = vrot.slane %v5856, 2
      %v5859 = vsel %vm334, %v5837, 0
      %v5862 = vsel %vm334, %v5838, 0
      %v5865 = vsel %vm334, %v5839, 0
      %v5868 = vsel %vm334, %v5840, 0
      %v5871 = vsel %vm334, %v5841, 0
      %v5874 = vsel %vm334, %v5842, 0
      %v5877 = vsel %vm334, %v5843, 0
      %v5880 = vsel %vm334, %v5844, 0
      %v5883 = vsel %vm334, %v5845, 0
      %v5886 = vsel %vm334, %v5846, 0
      %v5889 = vsel %vm334, %v5847, 0
      %v5892 = vsel %vm334, %v5848, 0
      %v5895 = vsel %vm334, %v5849, 0
      %v5898 = vsel %vm334, %v5850, 0
      %v5901 = vsel %vm334, %v5851, 0
      %v5904 = vsel %vm334, %v5852, 0
      %v5907 = vsel %vm1152, %v5857, 0
      %5909 = vmatpush.bf16.msra.mxu0 0
      %5910 = vmatpush.bf16.msra.mxu0 0
      %5911 = vmatpush.bf16.msra.mxu0 0
      %5912 = vmatpush.bf16.msra.mxu0 0
      %5913 = vmatpush.bf16.msra.mxu0 0
      %5914 = vmatpush.bf16.msra.mxu0 0
      %5915 = vmatpush.bf16.msra.mxu0 0
      %5916 = vmatpush.bf16.msra.mxu0 %v5907
      %5917 = vmatmul.bf16.gmra.mxu0 %v5859
      %v5918 = vpop.f32.mrf.mxu0
      %v5919 = vadd.f32 0.0, %v5918
      %v5920 = vpop.f32.mrf.mxu0
      %v5921 = vadd.f32 0.0, %v5920
      %5922 = vmatmul.bf16.gmra.mxu0 %v5862
      %v5923 = vpop.f32.mrf.mxu0
      %v5924 = vadd.f32 0.0, %v5923
      %v5925 = vpop.f32.mrf.mxu0
      %v5926 = vadd.f32 0.0, %v5925
      %5927 = vmatmul.bf16.gmra.mxu0 %v5865
      %v5928 = vpop.f32.mrf.mxu0
      %v5929 = vadd.f32 0.0, %v5928
      %v5930 = vpop.f32.mrf.mxu0
      %v5931 = vadd.f32 0.0, %v5930
      %5932 = vmatmul.bf16.gmra.mxu0 %v5868
      %v5933 = vpop.f32.mrf.mxu0
      %v5934 = vadd.f32 0.0, %v5933
      %v5935 = vpop.f32.mrf.mxu0
      %v5936 = vadd.f32 0.0, %v5935
      %5937 = vmatmul.bf16.gmra.mxu0 %v5871
      %v5938 = vpop.f32.mrf.mxu0
      %v5939 = vadd.f32 0.0, %v5938
      %v5940 = vpop.f32.mrf.mxu0
      %v5941 = vadd.f32 0.0, %v5940
      %5942 = vmatmul.bf16.gmra.mxu0 %v5874
      %v5943 = vpop.f32.mrf.mxu0
      %v5944 = vadd.f32 0.0, %v5943
      %v5945 = vpop.f32.mrf.mxu0
      %v5946 = vadd.f32 0.0, %v5945
      %5947 = vmatmul.bf16.gmra.mxu0 %v5877
      %v5948 = vpop.f32.mrf.mxu0
      %v5949 = vadd.f32 0.0, %v5948
      %v5950 = vpop.f32.mrf.mxu0
      %v5951 = vadd.f32 0.0, %v5950
      %5952 = vmatmul.bf16.gmra.mxu0 %v5880
      %v5953 = vpop.f32.mrf.mxu0
      %v5954 = vadd.f32 0.0, %v5953
      %v5955 = vpop.f32.mrf.mxu0
      %v5956 = vadd.f32 0.0, %v5955
      %5957 = vmatmul.bf16.gmra.mxu0 %v5883
      %v5958 = vpop.f32.mrf.mxu0
      %v5959 = vadd.f32 0.0, %v5958
      %v5960 = vpop.f32.mrf.mxu0
      %v5961 = vadd.f32 0.0, %v5960
      %5962 = vmatmul.bf16.gmra.mxu0 %v5886
      %v5963 = vpop.f32.mrf.mxu0
      %v5964 = vadd.f32 0.0, %v5963
      %v5965 = vpop.f32.mrf.mxu0
      %v5966 = vadd.f32 0.0, %v5965
      %5967 = vmatmul.bf16.gmra.mxu0 %v5889
      %v5968 = vpop.f32.mrf.mxu0
      %v5969 = vadd.f32 0.0, %v5968
      %v5970 = vpop.f32.mrf.mxu0
      %v5971 = vadd.f32 0.0, %v5970
      %5972 = vmatmul.bf16.gmra.mxu0 %v5892
      %v5973 = vpop.f32.mrf.mxu0
      %v5974 = vadd.f32 0.0, %v5973
      %v5975 = vpop.f32.mrf.mxu0
      %v5976 = vadd.f32 0.0, %v5975
      %5977 = vmatmul.bf16.gmra.mxu0 %v5895
      %v5978 = vpop.f32.mrf.mxu0
      %v5979 = vadd.f32 0.0, %v5978
      %v5980 = vpop.f32.mrf.mxu0
      %v5981 = vadd.f32 0.0, %v5980
      %5982 = vmatmul.bf16.gmra.mxu0 %v5898
      %v5983 = vpop.f32.mrf.mxu0
      %v5984 = vadd.f32 0.0, %v5983
      %v5985 = vpop.f32.mrf.mxu0
      %v5986 = vadd.f32 0.0, %v5985
      %5987 = vmatmul.bf16.gmra.mxu0 %v5901
      %v5988 = vpop.f32.mrf.mxu0
      %v5989 = vadd.f32 0.0, %v5988
      %v5990 = vpop.f32.mrf.mxu0
      %v5991 = vadd.f32 0.0, %v5990
      %5992 = vmatmul.bf16.gmra.mxu0 %v5904
      %v5993 = vpop.f32.mrf.mxu0
      %v5994 = vadd.f32 0.0, %v5993
      %v5995 = vpop.f32.mrf.mxu0
      %v5996 = vadd.f32 0.0, %v5995
      %5997 = vdwg.mxu0
      %v5998 = vadd.f32 %v1306, %v5919
      %v5999 = vadd.f32 %v1308, %v5921
      %v6000 = vadd.f32 %v1311, %v5924
      %v6001 = vadd.f32 %v1313, %v5926
      %v6002 = vadd.f32 %v1316, %v5929
      %v6003 = vadd.f32 %v1318, %v5931
      %v6004 = vadd.f32 %v1321, %v5934
      %v6005 = vadd.f32 %v1323, %v5936
      %v6006 = vadd.f32 %v1326, %v5939
      %v6007 = vadd.f32 %v1328, %v5941
      %v6008 = vadd.f32 %v1331, %v5944
      %v6009 = vadd.f32 %v1333, %v5946
      %v6010 = vadd.f32 %v1336, %v5949
      %v6011 = vadd.f32 %v1338, %v5951
      %v6012 = vadd.f32 %v1341, %v5954
      %v6013 = vadd.f32 %v1343, %v5956
      %v6014 = vadd.f32 %v1346, %v5959
      %v6015 = vadd.f32 %v1348, %v5961
      %v6016 = vadd.f32 %v1351, %v5964
      %v6017 = vadd.f32 %v1353, %v5966
      %v6018 = vadd.f32 %v1356, %v5969
      %v6019 = vadd.f32 %v1358, %v5971
      %v6020 = vadd.f32 %v1361, %v5974
      %v6021 = vadd.f32 %v1363, %v5976
      %v6022 = vadd.f32 %v1366, %v5979
      %v6023 = vadd.f32 %v1368, %v5981
      %v6024 = vadd.f32 %v1371, %v5984
      %v6025 = vadd.f32 %v1373, %v5986
      %v6026 = vadd.f32 %v1376, %v5989
      %v6027 = vadd.f32 %v1378, %v5991
      %v6028 = vadd.f32 %v1381, %v5994
      %v6029 = vadd.f32 %v1383, %v5996
      %v6030 = vld [vmem:[%s8] sm:$0x1]
      %v6032 = vperm.slane %v6030, 0
      %v6034 = vadd.f32 %v5998, %v6032
      %v6035 = vadd.f32 %v5999, %v6032
      %v6036 = vadd.f32 %v6000, %v6032
      %v6037 = vadd.f32 %v6001, %v6032
      %v6038 = vadd.f32 %v6002, %v6032
      %v6039 = vadd.f32 %v6003, %v6032
      %v6040 = vadd.f32 %v6004, %v6032
      %v6041 = vadd.f32 %v6005, %v6032
      %v6042 = vadd.f32 %v6006, %v6032
      %v6043 = vadd.f32 %v6007, %v6032
      %v6044 = vadd.f32 %v6008, %v6032
      %v6045 = vadd.f32 %v6009, %v6032
      %v6046 = vadd.f32 %v6010, %v6032
      %v6047 = vadd.f32 %v6011, %v6032
      %v6048 = vadd.f32 %v6012, %v6032
      %v6049 = vadd.f32 %v6013, %v6032
      %v6050 = vadd.f32 %v6014, %v6032
      %v6051 = vadd.f32 %v6015, %v6032
      %v6052 = vadd.f32 %v6016, %v6032
      %v6053 = vadd.f32 %v6017, %v6032
      %v6054 = vadd.f32 %v6018, %v6032
      %v6055 = vadd.f32 %v6019, %v6032
      %v6056 = vadd.f32 %v6020, %v6032
      %v6057 = vadd.f32 %v6021, %v6032
      %v6058 = vadd.f32 %v6022, %v6032
      %v6059 = vadd.f32 %v6023, %v6032
      %v6060 = vadd.f32 %v6024, %v6032
      %v6061 = vadd.f32 %v6025, %v6032
      %v6062 = vadd.f32 %v6026, %v6032
      %v6063 = vadd.f32 %v6027, %v6032
      %v6064 = vadd.f32 %v6028, %v6032
      %v6065 = vadd.f32 %v6029, %v6032
      %v6066 = vsub.f32 0.0, %v6034
      %v6067 = vsub.f32 0.0, %v6035
      %v6068 = vsub.f32 0.0, %v6036
      %v6069 = vsub.f32 0.0, %v6037
      %v6070 = vsub.f32 0.0, %v6038
      %v6071 = vsub.f32 0.0, %v6039
      %v6072 = vsub.f32 0.0, %v6040
      %v6073 = vsub.f32 0.0, %v6041
      %v6074 = vsub.f32 0.0, %v6042
      %v6075 = vsub.f32 0.0, %v6043
      %v6076 = vsub.f32 0.0, %v6044
      %v6077 = vsub.f32 0.0, %v6045
      %v6078 = vsub.f32 0.0, %v6046
      %v6079 = vsub.f32 0.0, %v6047
      %v6080 = vsub.f32 0.0, %v6048
      %v6081 = vsub.f32 0.0, %v6049
      %v6082 = vsub.f32 0.0, %v6050
      %v6083 = vsub.f32 0.0, %v6051
      %v6084 = vsub.f32 0.0, %v6052
      %v6085 = vsub.f32 0.0, %v6053
      %v6086 = vsub.f32 0.0, %v6054
      %v6087 = vsub.f32 0.0, %v6055
      %v6088 = vsub.f32 0.0, %v6056
      %v6089 = vsub.f32 0.0, %v6057
      %v6090 = vsub.f32 0.0, %v6058
      %v6091 = vsub.f32 0.0, %v6059
      %v6092 = vsub.f32 0.0, %v6060
      %v6093 = vsub.f32 0.0, %v6061
      %v6094 = vsub.f32 0.0, %v6062
      %v6095 = vsub.f32 0.0, %v6063
      %v6096 = vsub.f32 0.0, %v6064
      %v6097 = vsub.f32 0.0, %v6065
      %v6098 = vmul.f32 %v6066, 1.442695
      %v6099 = vpow.pop %v6098
      %v6100 = vmul.f32 %v6067, 1.442695
      %v6101 = vpow.pop %v6100
      %v6102 = vmul.f32 %v6068, 1.442695
      %v6103 = vpow.pop %v6102
      %v6104 = vmul.f32 %v6069, 1.442695
      %v6105 = vpow.pop %v6104
      %v6106 = vmul.f32 %v6070, 1.442695
      %v6107 = vpow.pop %v6106
      %v6108 = vmul.f32 %v6071, 1.442695
      %v6109 = vpow.pop %v6108
      %v6110 = vmul.f32 %v6072, 1.442695
      %v6111 = vpow.pop %v6110
      %v6112 = vmul.f32 %v6073, 1.442695
      %v6113 = vpow.pop %v6112
      %v6114 = vmul.f32 %v6074, 1.442695
      %v6115 = vpow.pop %v6114
      %v6116 = vmul.f32 %v6075, 1.442695
      %v6117 = vpow.pop %v6116
      %v6118 = vmul.f32 %v6076, 1.442695
      %v6119 = vpow.pop %v6118
      %v6120 = vmul.f32 %v6077, 1.442695
      %v6121 = vpow.pop %v6120
      %v6122 = vmul.f32 %v6078, 1.442695
      %v6123 = vpow.pop %v6122
      %v6124 = vmul.f32 %v6079, 1.442695
      %v6125 = vpow.pop %v6124
      %v6126 = vmul.f32 %v6080, 1.442695
      %v6127 = vpow.pop %v6126
      %v6128 = vmul.f32 %v6081, 1.442695
      %v6129 = vpow.pop %v6128
      %v6130 = vmul.f32 %v6082, 1.442695
      %v6131 = vpow.pop %v6130
      %v6132 = vmul.f32 %v6083, 1.442695
      %v6133 = vpow.pop %v6132
      %v6134 = vmul.f32 %v6084, 1.442695
      %v6135 = vpow.pop %v6134
      %v6136 = vmul.f32 %v6085, 1.442695
      %v6137 = vpow.pop %v6136
      %v6138 = vmul.f32 %v6086, 1.442695
      %v6139 = vpow.pop %v6138
      %v6140 = vmul.f32 %v6087, 1.442695
      %v6141 = vpow.pop %v6140
      %v6142 = vmul.f32 %v6088, 1.442695
      %v6143 = vpow.pop %v6142
      %v6144 = vmul.f32 %v6089, 1.442695
      %v6145 = vpow.pop %v6144
      %v6146 = vmul.f32 %v6090, 1.442695
      %v6147 = vpow.pop %v6146
      %v6148 = vmul.f32 %v6091, 1.442695
      %v6149 = vpow.pop %v6148
      %v6150 = vmul.f32 %v6092, 1.442695
      %v6151 = vpow.pop %v6150
      %v6152 = vmul.f32 %v6093, 1.442695
      %v6153 = vpow.pop %v6152
      %v6154 = vmul.f32 %v6094, 1.442695
      %v6155 = vpow.pop %v6154
      %v6156 = vmul.f32 %v6095, 1.442695
      %v6157 = vpow.pop %v6156
      %v6158 = vmul.f32 %v6096, 1.442695
      %v6159 = vpow.pop %v6158
      %v6160 = vmul.f32 %v6097, 1.442695
      %v6161 = vpow.pop %v6160
      %v6162 = vadd.f32 %v6099, 1.0
      %v6163 = vadd.f32 %v6101, 1.0
      %v6164 = vadd.f32 %v6103, 1.0
      %v6165 = vadd.f32 %v6105, 1.0
      %v6166 = vadd.f32 %v6107, 1.0
      %v6167 = vadd.f32 %v6109, 1.0
      %v6168 = vadd.f32 %v6111, 1.0
      %v6169 = vadd.f32 %v6113, 1.0
      %v6170 = vadd.f32 %v6115, 1.0
      %v6171 = vadd.f32 %v6117, 1.0
      %v6172 = vadd.f32 %v6119, 1.0
      %v6173 = vadd.f32 %v6121, 1.0
      %v6174 = vadd.f32 %v6123, 1.0
      %v6175 = vadd.f32 %v6125, 1.0
      %v6176 = vadd.f32 %v6127, 1.0
      %v6177 = vadd.f32 %v6129, 1.0
      %v6178 = vadd.f32 %v6131, 1.0
      %v6179 = vadd.f32 %v6133, 1.0
      %v6180 = vadd.f32 %v6135, 1.0
      %v6181 = vadd.f32 %v6137, 1.0
      %v6182 = vadd.f32 %v6139, 1.0
      %v6183 = vadd.f32 %v6141, 1.0
      %v6184 = vadd.f32 %v6143, 1.0
      %v6185 = vadd.f32 %v6145, 1.0
      %v6186 = vadd.f32 %v6147, 1.0
      %v6187 = vadd.f32 %v6149, 1.0
      %v6188 = vadd.f32 %v6151, 1.0
      %v6189 = vadd.f32 %v6153, 1.0
      %v6190 = vadd.f32 %v6155, 1.0
      %v6191 = vadd.f32 %v6157, 1.0
      %v6192 = vadd.f32 %v6159, 1.0
      %v6193 = vadd.f32 %v6161, 1.0
      %v6194 = vrcp.pop %v6162
      %v6195 = vrcp.pop %v6163
      %v6196 = vrcp.pop %v6164
      %v6197 = vrcp.pop %v6165
      %v6198 = vrcp.pop %v6166
      %v6199 = vrcp.pop %v6167
      %v6200 = vrcp.pop %v6168
      %v6201 = vrcp.pop %v6169
      %v6202 = vrcp.pop %v6170
      %v6203 = vrcp.pop %v6171
      %v6204 = vrcp.pop %v6172
      %v6205 = vrcp.pop %v6173
      %v6206 = vrcp.pop %v6174
      %v6207 = vrcp.pop %v6175
      %v6208 = vrcp.pop %v6176
      %v6209 = vrcp.pop %v6177
      %v6210 = vrcp.pop %v6178
      %v6211 = vrcp.pop %v6179
      %v6212 = vrcp.pop %v6180
      %v6213 = vrcp.pop %v6181
      %v6214 = vrcp.pop %v6182
      %v6215 = vrcp.pop %v6183
      %v6216 = vrcp.pop %v6184
      %v6217 = vrcp.pop %v6185
      %v6218 = vrcp.pop %v6186
      %v6219 = vrcp.pop %v6187
      %v6220 = vrcp.pop %v6188
      %v6221 = vrcp.pop %v6189
      %v6222 = vrcp.pop %v6190
      %v6223 = vrcp.pop %v6191
      %v6224 = vrcp.pop %v6192
      %v6225 = vrcp.pop %v6193
      %v6226 = vmul.f32 %v6034, %v6194
      %v6227 = vmul.f32 %v6035, %v6195
      %v6228 = vmul.f32 %v6036, %v6196
      %v6229 = vmul.f32 %v6037, %v6197
      %v6230 = vmul.f32 %v6038, %v6198
      %v6231 = vmul.f32 %v6039, %v6199
      %v6232 = vmul.f32 %v6040, %v6200
      %v6233 = vmul.f32 %v6041, %v6201
      %v6234 = vmul.f32 %v6042, %v6202
      %v6235 = vmul.f32 %v6043, %v6203
      %v6236 = vmul.f32 %v6044, %v6204
      %v6237 = vmul.f32 %v6045, %v6205
      %v6238 = vmul.f32 %v6046, %v6206
      %v6239 = vmul.f32 %v6047, %v6207
      %v6240 = vmul.f32 %v6048, %v6208
      %v6241 = vmul.f32 %v6049, %v6209
      %v6242 = vmul.f32 %v6050, %v6210
      %v6243 = vmul.f32 %v6051, %v6211
      %v6244 = vmul.f32 %v6052, %v6212
      %v6245 = vmul.f32 %v6053, %v6213
      %v6246 = vmul.f32 %v6054, %v6214
      %v6247 = vmul.f32 %v6055, %v6215
      %v6248 = vmul.f32 %v6056, %v6216
      %v6249 = vmul.f32 %v6057, %v6217
      %v6250 = vmul.f32 %v6058, %v6218
      %v6251 = vmul.f32 %v6059, %v6219
      %v6252 = vmul.f32 %v6060, %v6220
      %v6253 = vmul.f32 %v6061, %v6221
      %v6254 = vmul.f32 %v6062, %v6222
      %v6255 = vmul.f32 %v6063, %v6223
      %v6256 = vmul.f32 %v6064, %v6224
      %v6257 = vmul.f32 %v6065, %v6225
      %6258 = vst.msk [vmem:[%s332] sm:$0xff] %vm443, %v6226
      %6259 = vst.msk [vmem:[%s332 + $0x8] sm:$0xff] %vm443, %v6227
      %6260 = vst.msk [vmem:[%s332 + $0x10] sm:$0xff] %vm443, %v6228
      %6261 = vst.msk [vmem:[%s332 + $0x18] sm:$0xff] %vm443, %v6229
      %6262 = vst.msk [vmem:[%s332 + $0x20] sm:$0xff] %vm443, %v6230
      %6263 = vst.msk [vmem:[%s332 + $0x28] sm:$0xff] %vm443, %v6231
      %6264 = vst.msk [vmem:[%s332 + $0x30] sm:$0xff] %vm443, %v6232
      %6265 = vst.msk [vmem:[%s332 + $0x38] sm:$0xff] %vm443, %v6233
      %6266 = vst.msk [vmem:[%s332 + $0x40] sm:$0xff] %vm443, %v6234
      %6267 = vst.msk [vmem:[%s332 + $0x48] sm:$0xff] %vm443, %v6235
      %6268 = vst.msk [vmem:[%s332 + $0x50] sm:$0xff] %vm443, %v6236
      %6269 = vst.msk [vmem:[%s332 + $0x58] sm:$0xff] %vm443, %v6237
      %6270 = vst.msk [vmem:[%s332 + $0x60] sm:$0xff] %vm443, %v6238
      %6271 = vst.msk [vmem:[%s332 + $0x68] sm:$0xff] %vm443, %v6239
      %6272 = vst.msk [vmem:[%s332 + $0x70] sm:$0xff] %vm443, %v6240
      %6273 = vst.msk [vmem:[%s332 + $0x78] sm:$0xff] %vm443, %v6241
      %6274 = vst.msk [vmem:[%s332 + $0x80] sm:$0xff] %vm443, %v6242
      %6275 = vst.msk [vmem:[%s332 + $0x88] sm:$0xff] %vm443, %v6243
      %6276 = vst.msk [vmem:[%s332 + $0x90] sm:$0xff] %vm443, %v6244
      %6277 = vst.msk [vmem:[%s332 + $0x98] sm:$0xff] %vm443, %v6245
      %6278 = vst.msk [vmem:[%s332 + $0xa0] sm:$0xff] %vm443, %v6246
      %6279 = vst.msk [vmem:[%s332 + $0xa8] sm:$0xff] %vm443, %v6247
      %6280 = vst.msk [vmem:[%s332 + $0xb0] sm:$0xff] %vm443, %v6248
      %6281 = vst.msk [vmem:[%s332 + $0xb8] sm:$0xff] %vm443, %v6249
      %6282 = vst.msk [vmem:[%s332 + $0xc0] sm:$0xff] %vm443, %v6250
      %6283 = vst.msk [vmem:[%s332 + $0xc8] sm:$0xff] %vm443, %v6251
      %6284 = vst.msk [vmem:[%s332 + $0xd0] sm:$0xff] %vm443, %v6252
      %6285 = vst.msk [vmem:[%s332 + $0xd8] sm:$0xff] %vm443, %v6253
      %6286 = vst.msk [vmem:[%s332 + $0xe0] sm:$0xff] %vm443, %v6254
      %6287 = vst.msk [vmem:[%s332 + $0xe8] sm:$0xff] %vm443, %v6255
      %6288 = vst.msk [vmem:[%s332 + $0xf0] sm:$0xff] %vm443, %v6256
      %6289 = vst.msk [vmem:[%s332 + $0xf8] sm:$0xff] %vm443, %v6257
      %p6290 = scmp.lt.s32.totalorder %s20, 1
      %s6291 = scalar_select %p6290, %s20, 1
      %s6292 = smul.addr %s6291, 32
      %s6293 = smul.addr %s6292, 8
      %s6294 = scalar_lea.vmem %s9, %s6293
      // Predicated region
      $region57: #{c2f_pallas.1} parent=55 // pred_check
        %p6295 = pneg %p232
      $region58: #{c2f_pallas.1} parent=55 // pred_check_branch
        %6297 = sbr.rel (%p6295) target = $region60
      $region59: #{c2f_pallas.1} parent=55 // pred_region
        _
      $region60: #{c2f_pallas.1} parent=55 // pred_fallthru
        _
    $region56: #{c2f_pallas.1} parent=5 // pred_fallthru
      _
    %p6298 = scmp.le.s32.totalorder 2, %s15
    // Predicated region
    $region61: #{c2f_pallas.1} parent=5 // pred_check
      %p6299 = pneg %p6298
    $region62: #{c2f_pallas.1} parent=5 // pred_check_branch
      %6301 = sbr.rel (%p6299) target = $region64
    $region63: #{c2f_pallas.1} parent=5 // pred_region
      %s6302 = ssub.s32 %s15, 2
      // Predicated region
      $region65: #{c2f_pallas.1} parent=63 // pred_check
        %p6303 = pneg %p238
      $region66: #{c2f_pallas.1} parent=63 // pred_check_branch
        %6305 = sbr.rel (%p6303) target = $region68
      $region67: #{c2f_pallas.1} parent=63 // pred_region
        %p6306 = scmp.lt.s32.totalorder %s21, 1
        %s6307 = scalar_select %p6306, %s21, 1
        %s6308 = smul.addr %s6307, 32
        %s6309 = smul.addr %s6308, 8
        %s6310 = scalar_lea.vmem %s9, %s6309
      $region68: #{c2f_pallas.1} parent=63 // pred_fallthru
        _
    $region64: #{c2f_pallas.1} parent=5 // pred_fallthru
      _
  $region6: #{c2f_pallas.1} parent=0 // loop_footer
    %s19 = sadd.s32 1, %s15
  $region7: #{c2f_pallas.1} parent=0 // loop_footer_branch
    %14 = sbr.rel target = $region3
  $region8: #{c2f_pallas.1} parent=0 // loop_exit
    _

</llo_original>
